<compile_context>
chip_gen: v7x
topology: tpu7x:2x2x1
jax: 0.10.0
libtpu: 0.0.40
codegen_flags: <defaults>
</compile_context>

<pallas_src>
import functools

import jax
import jax.numpy as jnp
from jax.experimental import pallas as pl
from jax.experimental.pallas import tpu as pltpu

# model hyper-parameters (match the PyTorch defaults)
INPUT_SIZE = 128
HIDDEN_SIZE = 32      # GATConv1 per-head channels
N_HEAD = 12
OUTPUT_SIZE = 64      # GATConv2 channels
HIDDEN_CH2 = 32       # LSTM hidden size (per direction)
N_CLASS = 5

NEG_MASK = -1e9       # additive mask for non-edges (applied before row max)


# ---------------------------------------------------------------------------
# fused GAT branch kernel: one grid step == one full GAT branch
#   x      : [N, F]        bf16
#   amexp  : [N, H*N]      bf16   additive mask (0 edge / -1e9 non-edge), head-major
#   am     : [N, N]        bf16   additive mask for conv2
#   pool   : [G, N]        bf16   mean-pool matrix
#   srow   : [1, H*N]      f32    src-side conv1 logits row (alpha_src1[j, h] at col h*N+j)
#   w1     : [F, H*C1]     bf16   conv1 projection
#   a1d    : [H*C1, H*N]   bf16   dst att weights, pre-expanded per head block
#   b1     : [1, H*C1]     f32
#   w2     : [H*C1, C2]    bf16
#   a2cat  : [C2, 2]       bf16   [att_dst2^T | att_src2^T]
#   b2     : [1, C2]       f32
#   seg    : [H*N, H]      bf16   0/1: per-head row-sum reduction
#   hexp   : [H, H*C1]     bf16   0/1: per-head scalar -> channel-block broadcast
#   blk    : [H*N, H*C1]   bf16   0/1: block-diagonal mask for the aggregation matmul
# output  : [G, C2]        f32
# ---------------------------------------------------------------------------
def _gat_branch_kernel(x_ref, amexp_ref, am_ref, pool_ref, srow_ref,
                       w1_ref, a1d_ref, b1_ref, w2_ref, a2_ref, b2_ref,
                       seg_ref, hexp_ref, blk_ref, o_ref, *, heads):
    f32 = jnp.float32
    bf16 = jnp.bfloat16

    x = x_ref[0]                                                  # [N, F] bf16

    # ---- GATConv1: projection + lane-dense all-heads attention -----------
    h1 = jnp.dot(x, w1_ref[0], preferred_element_type=f32)       # [N, H*C1]
    h1_bf = h1.astype(bf16)

    # logit slab: e[i, h*N + j] = alpha_dst[i, h] + alpha_src[j, h]
    e = jnp.dot(h1_bf, a1d_ref[0], preferred_element_type=f32)   # dst part [N, H*N]
    e = e + srow_ref[0]                                           # + src row (bcast)
    e = jnp.where(e > 0, e, 0.2 * e)                              # LeakyReLU(0.2)
    e = e + amexp_ref[0].astype(f32)                              # mask non-edges
    m = jnp.max(e, axis=-1, keepdims=True)                        # masked row max
    p = jnp.exp(e - m).astype(bf16)                               # non-edges -> 0

    # per-head softmax denominators + normalization broadcast (0/1 matmuls)
    sums = jnp.dot(p, seg_ref[0], preferred_element_type=f32)     # [N, H]
    inv = pl.reciprocal(jnp.maximum(sums, 1e-30), approx=True)
    scale = jnp.dot(inv.astype(bf16), hexp_ref[0],
                    preferred_element_type=f32)                   # [N, H*C1]

    # block-diagonal aggregation: one MXU pass for all 12 heads
    wblk = jnp.concatenate([h1_bf] * heads, axis=0) * blk_ref[0]  # [H*N, H*C1]
    agg = jnp.dot(p, wblk, preferred_element_type=f32)            # [N, H*C1]
    r1 = jnp.maximum(agg * scale + b1_ref[0], 0.0)                # + bias, ReLU
    r1_bf = r1.astype(bf16)

    # ---- GATConv2 (single head) -------------------------------------------
    h2 = jnp.dot(r1_bf, w2_ref[0], preferred_element_type=f32)    # [N, C2]
    h2_bf = h2.astype(bf16)
    a2 = jnp.dot(h2_bf, a2_ref[0], preferred_element_type=f32)    # [N, 2] (dst | src)
    a2t = jnp.transpose(a2)                                        # tiny [2, N]
    e2 = a2[:, 0:1] + a2t[1:2, :]                                  # [N, N]
    e2 = jnp.where(e2 > 0, e2, 0.2 * e2)
    e2 = e2 + am_ref[0].astype(f32)
    m2 = jnp.max(e2, axis=-1, keepdims=True)
    p2 = jnp.exp(e2 - m2)
    inv2 = pl.reciprocal(
        jnp.maximum(jnp.sum(p2, axis=-1, keepdims=True), 1e-30), approx=True)
    out2 = (jnp.dot(p2.astype(bf16), h2_bf, preferred_element_type=f32) * inv2
            + b2_ref[0])                                           # [N, C2]

    # ---- global mean pool ---------------------------------------------------
    o_ref[0] = jnp.dot(pool_ref[0], out2.astype(bf16),
                       preferred_element_type=f32)                 # [G, C2]


def gat_branches(xs, adj_mask_exps, adj_masks, pools, src_rows, kp, consts):
    """Run all 3 GAT branches in a single pallas_call, grid=(3,) 'parallel'."""
    B = xs.shape[0]
    G = pools.shape[1]
    C2 = kp["w2"].shape[2]
    H = consts["hexp"].shape[1]

    branch_ins = [xs, adj_mask_exps, adj_masks, pools, src_rows,
                  kp["w1"], kp["a1d_exp"], kp["b1"],
                  kp["w2"], kp["a2cat"], kp["b2"]]
    const_ins = [consts["seg"], consts["hexp"], consts["blkmask"]]

    def b_spec(a):                      # branch-dependent: pick block b
        return pl.BlockSpec((1,) + a.shape[1:], lambda b: (b, 0, 0))

    def c_spec(a):                      # shared constants: always block 0
        return pl.BlockSpec(a.shape, lambda b: (0, 0, 0))

    kernel = functools.partial(_gat_branch_kernel, heads=H)
    return pl.pallas_call(
        kernel,
        out_shape=jax.ShapeDtypeStruct((B, G, C2), jnp.float32),
        grid=(B,),
        in_specs=[b_spec(a) for a in branch_ins] + [c_spec(a) for a in const_ins],
        out_specs=pl.BlockSpec((1, G, C2), lambda b: (b, 0, 0)),
        compiler_params=pltpu.CompilerParams(
            dimension_semantics=("parallel",)),
    )(*branch_ins, *const_ins)


# ---------------------------------------------------------------------------
# fused single-step bidirectional LSTM (seq_len == 1, h0 == c0 == 0) + Linear
#   gates = x @ [W_ih_f | W_ih_b] + (b_ih + b_hh); PyTorch gate order i,f,g,o.
#   c0 == 0  =>  c = i * g (forget gate is dead work and removed).
# ---------------------------------------------------------------------------
def _lstm_lin_kernel(x_ref, w_ref, b_ref, wlf_ref, wlb_ref, bl_ref, o_ref, *,
                     hidden):
    f32 = jnp.float32
    gates = jnp.dot(x_ref[...], w_ref[...], preferred_element_type=f32) + b_ref[...]

    def one_dir(off):
        i = jax.nn.sigmoid(gates[:, off:off + hidden])
        g = jnp.tanh(gates[:, off + 2 * hidden:off + 3 * hidden])
        o = jax.nn.sigmoid(gates[:, off + 3 * hidden:off + 4 * hidden])
        return (o * jnp.tanh(i * g)).astype(jnp.bfloat16)          # c0 == 0

    out = jnp.dot(one_dir(0), wlf_ref[...], preferred_element_type=f32)
    out = out + jnp.dot(one_dir(4 * hidden), wlb_ref[...],
                        preferred_element_type=f32)
    o_ref[...] = out + bl_ref[...]


def lstm_linear(feat, lp, lin, *, hidden):
    g = feat.shape[0]
    n_class = lin["w"].shape[1]
    bf16 = jnp.bfloat16
    w_cat = jnp.concatenate([lp["w_ih_f"], lp["w_ih_b"]], axis=1)    # [3*C2, 8*hid]
    b_cat = jnp.concatenate([lp["b_f"], lp["b_b"]]).reshape(1, -1)   # [1, 8*hid]
    wlf, wlb = lin["w"][:hidden], lin["w"][hidden:]                  # split: no concat
    vmem = pl.BlockSpec(memory_space=pltpu.MemorySpace.VMEM)
    kernel = functools.partial(_lstm_lin_kernel, hidden=hidden)
    return pl.pallas_call(
        kernel,
        out_shape=jax.ShapeDtypeStruct((g, n_class), jnp.float32),
        in_specs=[vmem] * 6,
        out_specs=vmem,
    )(feat.astype(bf16), w_cat.astype(bf16), b_cat.astype(jnp.float32),
      wlf.astype(bf16), wlb.astype(bf16),
      lin["b"].reshape(1, -1).astype(jnp.float32))


# ---------------------------------------------------------------------------
# plain-JAX glue: dense adjacency (with self-loops, as GATConv default),
# mean-pool matrix (global_mean_pool), and per-branch parameter packing.
# TODO(synk): edge_index scatter / batch one-hot construction has no clean
# Pallas equivalent (dynamic scatter); it stays in XLA glue.
# ---------------------------------------------------------------------------
def build_adj(edge_index, num_nodes):
    src, dst = edge_index[0], edge_index[1]
    adj = jnp.zeros((num_nodes, num_nodes), jnp.float32)
    adj = adj.at[dst, src].set(1.0)                                  # adj[dst, src]
    return jnp.maximum(adj, jnp.eye(num_nodes, dtype=jnp.float32))


def build_pool(batch, num_graphs, num_nodes):
    onehot = (batch[None, :] == jnp.arange(num_graphs)[:, None]).astype(
        jnp.float32)                                                 # [G, N]
    counts = jnp.maximum(onehot.sum(axis=1, keepdims=True), 1.0)
    return onehot / counts


def _prep_branch(p, n):
    """Pack one GAT branch's params into the fused-kernel layout."""
    bf16 = jnp.bfloat16
    H, C = p["att_src1"].shape
    eye = jnp.eye(H, dtype=jnp.float32)
    # A_d[k*C + c, h] = att_dst1[h, c] * I(k == h)   (alpha_dst1 = h1 @ A_d)
    a_d = (eye[:, None, :] * jnp.transpose(p["att_dst1"])[None, :, :]).reshape(
        H * C, H)
    a_s = (eye[:, None, :] * jnp.transpose(p["att_src1"])[None, :, :]).reshape(
        H * C, H)
    a1d_exp = jnp.repeat(a_d, n, axis=1)                # [H*C, H*n], col h*n+j = A_d[:,h]
    a2cat = jnp.concatenate([jnp.transpose(p["att_dst2"]),
                             jnp.transpose(p["att_src2"])], axis=1)  # [C2, 2]
    kernel_params = dict(
        w1=p["w1"].astype(bf16),
        a1d_exp=a1d_exp.astype(bf16),
        b1=p["b1"].reshape(1, -1).astype(jnp.float32),
        w2=p["w2"].astype(bf16),
        a2cat=a2cat.astype(bf16),
        b2=p["b2"].reshape(1, -1).astype(jnp.float32),
    )
    w_as = jnp.dot(p["w1"], a_s)        # [F, H]: wrapper-side src-logit projection
    return kernel_params, w_as


# ---------------------------------------------------------------------------
# full GATmodel forward
# ---------------------------------------------------------------------------
def gatmodel_forward(params, x, x2, x3, ei, ei2, ei3, batch, batch2, batch3,
                     *, num_graphs):
    n = x.shape[0]
    # Demo assumption: the three scales share a node count (pad otherwise).
    assert x2.shape[0] == n and x3.shape[0] == n
    bf16 = jnp.bfloat16
    H, C1 = params["gat1"]["att_src1"].shape

    xs = jnp.stack([x, x2, x3]).astype(bf16)                         # [3, N, F]

    adj_list = [build_adj(e, n) for e in (ei, ei2, ei3)]
    adj_masks = jnp.stack(
        [(1.0 - a) * NEG_MASK for a in adj_list]).astype(bf16)       # [3, N, N]
    adj_mask_exps = jnp.stack(
        [jnp.tile((1.0 - a) * NEG_MASK, (1, H)) for a in adj_list]
    ).astype(bf16)                                                   # [3, N, H*N]
    pools = jnp.stack([build_pool(b_, num_graphs, n)
                       for b_ in (batch, batch2, batch3)]).astype(bf16)

    prepped = [_prep_branch(params[k], n) for k in ("gat1", "gat2", "gat3")]
    kparams = jax.tree_util.tree_map(lambda *a: jnp.stack(a),
                                     *[p[0] for p in prepped])
    # src-side conv1 logits are linear in x -> precompute the [1, H*N] row in
    # XLA glue (avoids an in-kernel sublane->lane reshape); exact f32.
    src_rows = jnp.stack([
        jnp.transpose(jnp.dot(xi, w_as)).reshape(1, H * n)
        for xi, (_, w_as) in zip((x, x2, x3), prepped)
    ]).astype(jnp.float32)                                           # [3, 1, H*N]

    eye_h = jnp.eye(H, dtype=jnp.float32)
    consts = dict(
        seg=jnp.repeat(eye_h, n, axis=0)[None].astype(bf16),         # [1, H*N, H]
        hexp=jnp.repeat(eye_h, C1, axis=1)[None].astype(bf16),       # [1, H, H*C1]
        blkmask=jnp.kron(eye_h, jnp.ones((n, C1), jnp.float32))[None].astype(
            bf16),                                                    # [1, H*N, H*C1]
    )

    pooled = gat_branches(xs, adj_mask_exps, adj_masks, pools, src_rows,
                          kparams, consts)                            # [3, G, C2]
    feat = jnp.transpose(pooled, (1, 0, 2)).reshape(num_graphs, -1)   # [G, 3*C2]

    # F.dropout(p=0.25, training=self.training): inference mode -> identity.
    return lstm_linear(feat, params["lstm"], params["lin"],
                       hidden=HIDDEN_CH2)                             # [G, n_class]


# ---------------------------------------------------------------------------
# deterministic synthetic parameters
# ---------------------------------------------------------------------------
def init_params(key):
    keys = iter(jax.random.split(key, 40))

    def rnd(shape, scale=0.1):
        return jax.random.normal(next(keys), shape, jnp.float32) * scale

    params = {}
    for name in ("gat1", "gat2", "gat3"):
        params[name] = dict(
            w1=rnd((INPUT_SIZE, N_HEAD * HIDDEN_SIZE)),
            att_src1=rnd((N_HEAD, HIDDEN_SIZE)),
            att_dst1=rnd((N_HEAD, HIDDEN_SIZE)),
            b1=rnd((N_HEAD * HIDDEN_SIZE,)),
            w2=rnd((N_HEAD * HIDDEN_SIZE, OUTPUT_SIZE)),
            att_src2=rnd((1, OUTPUT_SIZE)),
            att_dst2=rnd((1, OUTPUT_SIZE)),
            b2=rnd((OUTPUT_SIZE,)),
        )
    lstm_in = OUTPUT_SIZE * 3
    params["lstm"] = dict(
        w_ih_f=rnd((lstm_in, 4 * HIDDEN_CH2)),
        b_f=rnd((4 * HIDDEN_CH2,)),    # = b_ih + b_hh (combined, h0 = 0)
        w_ih_b=rnd((lstm_in, 4 * HIDDEN_CH2)),
        b_b=rnd((4 * HIDDEN_CH2,)),
    )
    params["lin"] = dict(w=rnd((2 * HIDDEN_CH2, N_CLASS)), b=rnd((N_CLASS,)))
    return params


if __name__ == "__main__":
    key = jax.random.PRNGKey(0)
    kp, k1, k2, k3 = jax.random.split(key, 4)
    params = init_params(kp)

    # two graphs of 8 nodes each -> 16 nodes per branch
    num_nodes, num_graphs, nodes_per_graph = 16, 2, 8

    # directed ring (both directions) inside each graph, no duplicate edges
    edges = []
    for g in range(num_graphs):
        base = g * nodes_per_graph
        for i in range(nodes_per_graph):
            s = base + i
            d = base + (i + 1) % nodes_per_graph
            edges.append((s, d))
            edges.append((d, s))
    edge_index = jnp.array(edges, dtype=jnp.int32).T                 # [2, 32]
    batch = jnp.repeat(jnp.arange(num_graphs, dtype=jnp.int32),
                       nodes_per_graph)                              # [16]

    x = jax.random.normal(k1, (num_nodes, INPUT_SIZE), jnp.float32)
    x2 = jax.random.normal(k2, (num_nodes, INPUT_SIZE), jnp.float32)
    x3 = jax.random.normal(k3, (num_nodes, INPUT_SIZE), jnp.float32)

    fwd = jax.jit(gatmodel_forward, static_argnames=("num_graphs",))
    out = fwd(params, x, x2, x3, edge_index, edge_index, edge_index,
              batch, batch, batch, num_graphs=num_graphs)
    out = jax.block_until_ready(out)
    assert out.shape == (num_graphs, N_CLASS)
    assert bool(jnp.all(jnp.isfinite(out)))
    print("KERNEL_OK")
</pallas_src>

<mosaic_0001>
module attributes {stable_mosaic.version = 11 : i64} {
  func.func @_gat_branch_kernel(%arg0: i32, %arg1: memref<1x16x128xbf16, #tpu.memory_space<vmem>>, %arg2: memref<1x16x192xbf16, #tpu.memory_space<vmem>>, %arg3: memref<1x16x16xbf16, #tpu.memory_space<vmem>>, %arg4: memref<1x2x16xbf16, #tpu.memory_space<vmem>>, %arg5: memref<1x1x192xf32, #tpu.memory_space<vmem>>, %arg6: memref<1x128x384xbf16, #tpu.memory_space<vmem>>, %arg7: memref<1x384x192xbf16, #tpu.memory_space<vmem>>, %arg8: memref<1x1x384xf32, #tpu.memory_space<vmem>>, %arg9: memref<1x384x64xbf16, #tpu.memory_space<vmem>>, %arg10: memref<1x64x2xbf16, #tpu.memory_space<vmem>>, %arg11: memref<1x1x64xf32, #tpu.memory_space<vmem>>, %arg12: memref<1x192x12xbf16, #tpu.memory_space<vmem>>, %arg13: memref<1x12x384xbf16, #tpu.memory_space<vmem>>, %arg14: memref<1x192x384xbf16, #tpu.memory_space<vmem>>, %arg15: memref<1x2x64xf32, #tpu.memory_space<vmem>>) attributes {dimension_semantics = [#tpu.dimension_semantics<parallel>], iteration_bounds = array<i64: 3>, scalar_prefetch = 0 : i64, scratch_operands = 0 : i64, tpu.core_type = #tpu.core_type<tc>, window_params = [{transform_indices = @transform_0, window_bounds = array<i64: 1, 16, 128>}, {transform_indices = @transform_1, window_bounds = array<i64: 1, 16, 192>}, {transform_indices = @transform_2, window_bounds = array<i64: 1, 16, 16>}, {transform_indices = @transform_3, window_bounds = array<i64: 1, 2, 16>}, {transform_indices = @transform_4, window_bounds = array<i64: 1, 1, 192>}, {transform_indices = @transform_5, window_bounds = array<i64: 1, 128, 384>}, {transform_indices = @transform_6, window_bounds = array<i64: 1, 384, 192>}, {transform_indices = @transform_7, window_bounds = array<i64: 1, 1, 384>}, {transform_indices = @transform_8, window_bounds = array<i64: 1, 384, 64>}, {transform_indices = @transform_9, window_bounds = array<i64: 1, 64, 2>}, {transform_indices = @transform_10, window_bounds = array<i64: 1, 1, 64>}, {pipeline_mode = #tpu.pipeline_mode<synchronous>, transform_indices = @transform_11, window_bounds = array<i64: 1, 192, 12>}, {pipeline_mode = #tpu.pipeline_mode<synchronous>, transform_indices = @transform_12, window_bounds = array<i64: 1, 12, 384>}, {pipeline_mode = #tpu.pipeline_mode<synchronous>, transform_indices = @transform_13, window_bounds = array<i64: 1, 192, 384>}, {transform_indices = @transform_14, window_bounds = array<i64: 1, 2, 64>}]} {
    %c0 = arith.constant 0 : index
    %c0_0 = arith.constant 0 : index
    %c0_1 = arith.constant 0 : index
    %0 = vector.load %arg1[%c0, %c0_0, %c0_1] : memref<1x16x128xbf16, #tpu.memory_space<vmem>>, vector<1x16x128xbf16>
    %1 = vector.shape_cast %0 : vector<1x16x128xbf16> to vector<16x128xbf16>
    %c0_2 = arith.constant 0 : index
    %c0_3 = arith.constant 0 : index
    %c0_4 = arith.constant 0 : index
    %2 = vector.load %arg6[%c0_2, %c0_3, %c0_4] : memref<1x128x384xbf16, #tpu.memory_space<vmem>>, vector<1x128x384xbf16>
    %3 = vector.shape_cast %2 : vector<1x128x384xbf16> to vector<128x384xbf16>
    %cst = arith.constant dense<0.000000e+00> : vector<16x384xf32>
    %4 = tpu.matmul %1, %3, %cst {dimension_numbers = #tpu.dot_dimension_numbers<[1], [0], [0], [1], [0, 0, 1, 1], [], []>} : vector<16x128xbf16>, vector<128x384xbf16>, vector<16x384xf32> -> vector<16x384xf32>
    %5 = arith.truncf %4 : vector<16x384xf32> to vector<16x384xbf16>
    %c0_5 = arith.constant 0 : index
    %c0_6 = arith.constant 0 : index
    %c0_7 = arith.constant 0 : index
    %6 = vector.load %arg7[%c0_5, %c0_6, %c0_7] : memref<1x384x192xbf16, #tpu.memory_space<vmem>>, vector<1x384x192xbf16>
    %7 = vector.shape_cast %6 : vector<1x384x192xbf16> to vector<384x192xbf16>
    %cst_8 = arith.constant dense<0.000000e+00> : vector<16x192xf32>
    %8 = tpu.matmul %5, %7, %cst_8 {dimension_numbers = #tpu.dot_dimension_numbers<[1], [0], [0], [1], [0, 0, 1, 1], [], []>} : vector<16x384xbf16>, vector<384x192xbf16>, vector<16x192xf32> -> vector<16x192xf32>
    %c0_9 = arith.constant 0 : index
    %c0_10 = arith.constant 0 : index
    %c0_11 = arith.constant 0 : index
    %9 = vector.load %arg5[%c0_9, %c0_10, %c0_11] : memref<1x1x192xf32, #tpu.memory_space<vmem>>, vector<1x1x192xf32>
    %10 = vector.shape_cast %9 : vector<1x1x192xf32> to vector<1x192xf32>
    %11 = vector.broadcast %10 : vector<1x192xf32> to vector<16x192xf32>
    %12 = arith.addf %8, %11 : vector<16x192xf32>
    %cst_12 = arith.constant 0.000000e+00 : f32
    %13 = vector.broadcast %cst_12 : f32 to vector<16x192xf32>
    %14 = arith.cmpf ogt, %12, %13 : vector<16x192xf32>
    %cst_13 = arith.constant 2.000000e-01 : f32
    %15 = vector.broadcast %cst_13 : f32 to vector<16x192xf32>
    %16 = arith.mulf %15, %12 : vector<16x192xf32>
    %17 = arith.select %14, %12, %16 : vector<16x192xi1>, vector<16x192xf32>
    %c0_14 = arith.constant 0 : index
    %c0_15 = arith.constant 0 : index
    %c0_16 = arith.constant 0 : index
    %18 = vector.load %arg2[%c0_14, %c0_15, %c0_16] : memref<1x16x192xbf16, #tpu.memory_space<vmem>>, vector<1x16x192xbf16>
    %19 = vector.shape_cast %18 : vector<1x16x192xbf16> to vector<16x192xbf16>
    %20 = arith.extf %19 : vector<16x192xbf16> to vector<16x192xf32>
    %21 = arith.addf %17, %20 : vector<16x192xf32>
    %cst_17 = arith.constant dense<0xFF800000> : vector<16xf32>
    %22 = vector.multi_reduction <maximumf>, %21, %cst_17 [1] : vector<16x192xf32> to vector<16xf32>
    %23 = vector.shape_cast %22 : vector<16xf32> to vector<16x1xf32>
    %24 = vector.broadcast %23 : vector<16x1xf32> to vector<16x192xf32>
    %25 = arith.subf %21, %24 : vector<16x192xf32>
    %26 = math.exp %25 : vector<16x192xf32>
    %27 = arith.truncf %26 : vector<16x192xf32> to vector<16x192xbf16>
    %c0_18 = arith.constant 0 : index
    %c0_19 = arith.constant 0 : index
    %c0_20 = arith.constant 0 : index
    %28 = vector.load %arg12[%c0_18, %c0_19, %c0_20] : memref<1x192x12xbf16, #tpu.memory_space<vmem>>, vector<1x192x12xbf16>
    %29 = vector.shape_cast %28 : vector<1x192x12xbf16> to vector<192x12xbf16>
    %cst_21 = arith.constant dense<0.000000e+00> : vector<16x12xf32>
    %30 = tpu.matmul %27, %29, %cst_21 {dimension_numbers = #tpu.dot_dimension_numbers<[1], [0], [0], [1], [0, 0, 1, 1], [], []>} : vector<16x192xbf16>, vector<192x12xbf16>, vector<16x12xf32> -> vector<16x12xf32>
    %cst_22 = arith.constant 1.000000e-30 : f32
    %31 = vector.broadcast %cst_22 : f32 to vector<16x12xf32>
    %32 = arith.maximumf %30, %31 : vector<16x12xf32>
    %33 = tpu.reciprocal %32 {approx = true} : vector<16x12xf32> -> vector<16x12xf32>
    %34 = arith.truncf %33 : vector<16x12xf32> to vector<16x12xbf16>
    %c0_23 = arith.constant 0 : index
    %c0_24 = arith.constant 0 : index
    %c0_25 = arith.constant 0 : index
    %35 = vector.load %arg13[%c0_23, %c0_24, %c0_25] : memref<1x12x384xbf16, #tpu.memory_space<vmem>>, vector<1x12x384xbf16>
    %36 = vector.shape_cast %35 : vector<1x12x384xbf16> to vector<12x384xbf16>
    %cst_26 = arith.constant dense<0.000000e+00> : vector<16x384xf32>
    %37 = tpu.matmul %34, %36, %cst_26 {dimension_numbers = #tpu.dot_dimension_numbers<[1], [0], [0], [1], [0, 0, 1, 1], [], []>} : vector<16x12xbf16>, vector<12x384xbf16>, vector<16x384xf32> -> vector<16x384xf32>
    %38 = tpu.concatenate %5, %5, %5, %5, %5, %5, %5, %5, %5, %5, %5, %5 in 0 : vector<16x384xbf16>, vector<16x384xbf16>, vector<16x384xbf16>, vector<16x384xbf16>, vector<16x384xbf16>, vector<16x384xbf16>, vector<16x384xbf16>, vector<16x384xbf16>, vector<16x384xbf16>, vector<16x384xbf16>, vector<16x384xbf16>, vector<16x384xbf16> -> vector<192x384xbf16>
    %c0_27 = arith.constant 0 : index
    %c0_28 = arith.constant 0 : index
    %c0_29 = arith.constant 0 : index
    %39 = vector.load %arg14[%c0_27, %c0_28, %c0_29] : memref<1x192x384xbf16, #tpu.memory_space<vmem>>, vector<1x192x384xbf16>
    %40 = vector.shape_cast %39 : vector<1x192x384xbf16> to vector<192x384xbf16>
    %41 = arith.mulf %38, %40 : vector<192x384xbf16>
    %cst_30 = arith.constant dense<0.000000e+00> : vector<16x384xf32>
    %42 = tpu.matmul %27, %41, %cst_30 {dimension_numbers = #tpu.dot_dimension_numbers<[1], [0], [0], [1], [0, 0, 1, 1], [], []>} : vector<16x192xbf16>, vector<192x384xbf16>, vector<16x384xf32> -> vector<16x384xf32>
    %43 = arith.mulf %42, %37 : vector<16x384xf32>
    %c0_31 = arith.constant 0 : index
    %c0_32 = arith.constant 0 : index
    %c0_33 = arith.constant 0 : index
    %44 = vector.load %arg8[%c0_31, %c0_32, %c0_33] : memref<1x1x384xf32, #tpu.memory_space<vmem>>, vector<1x1x384xf32>
    %45 = vector.shape_cast %44 : vector<1x1x384xf32> to vector<1x384xf32>
    %46 = vector.broadcast %45 : vector<1x384xf32> to vector<16x384xf32>
    %47 = arith.addf %43, %46 : vector<16x384xf32>
    %cst_34 = arith.constant 0.000000e+00 : f32
    %48 = vector.broadcast %cst_34 : f32 to vector<16x384xf32>
    %49 = arith.maximumf %47, %48 : vector<16x384xf32>
    %50 = arith.truncf %49 : vector<16x384xf32> to vector<16x384xbf16>
    %c0_35 = arith.constant 0 : index
    %c0_36 = arith.constant 0 : index
    %c0_37 = arith.constant 0 : index
    %51 = vector.load %arg9[%c0_35, %c0_36, %c0_37] : memref<1x384x64xbf16, #tpu.memory_space<vmem>>, vector<1x384x64xbf16>
    %52 = vector.shape_cast %51 : vector<1x384x64xbf16> to vector<384x64xbf16>
    %cst_38 = arith.constant dense<0.000000e+00> : vector<16x64xf32>
    %53 = tpu.matmul %50, %52, %cst_38 {dimension_numbers = #tpu.dot_dimension_numbers<[1], [0], [0], [1], [0, 0, 1, 1], [], []>} : vector<16x384xbf16>, vector<384x64xbf16>, vector<16x64xf32> -> vector<16x64xf32>
    %54 = arith.truncf %53 : vector<16x64xf32> to vector<16x64xbf16>
    %c0_39 = arith.constant 0 : index
    %c0_40 = arith.constant 0 : index
    %c0_41 = arith.constant 0 : index
    %55 = vector.load %arg10[%c0_39, %c0_40, %c0_41] : memref<1x64x2xbf16, #tpu.memory_space<vmem>>, vector<1x64x2xbf16>
    %56 = vector.shape_cast %55 : vector<1x64x2xbf16> to vector<64x2xbf16>
    %cst_42 = arith.constant dense<0.000000e+00> : vector<16x2xf32>
    %57 = tpu.matmul %54, %56, %cst_42 {dimension_numbers = #tpu.dot_dimension_numbers<[1], [0], [0], [1], [0, 0, 1, 1], [], []>} : vector<16x64xbf16>, vector<64x2xbf16>, vector<16x2xf32> -> vector<16x2xf32>
    %58 = tpu.transpose %57, [1, 0] : vector<16x2xf32> -> vector<2x16xf32>
    %59 = vector.extract_strided_slice %57 {offsets = [0, 0], sizes = [16, 1], strides = [1, 1]} : vector<16x2xf32> to vector<16x1xf32>
    %60 = vector.extract_strided_slice %58 {offsets = [1, 0], sizes = [1, 16], strides = [1, 1]} : vector<2x16xf32> to vector<1x16xf32>
    %61 = vector.broadcast %59 : vector<16x1xf32> to vector<16x16xf32>
    %62 = vector.broadcast %60 : vector<1x16xf32> to vector<16x16xf32>
    %63 = arith.addf %61, %62 : vector<16x16xf32>
    %cst_43 = arith.constant 0.000000e+00 : f32
    %64 = vector.broadcast %cst_43 : f32 to vector<16x16xf32>
    %65 = arith.cmpf ogt, %63, %64 : vector<16x16xf32>
    %cst_44 = arith.constant 2.000000e-01 : f32
    %66 = vector.broadcast %cst_44 : f32 to vector<16x16xf32>
    %67 = arith.mulf %66, %63 : vector<16x16xf32>
    %68 = arith.select %65, %63, %67 : vector<16x16xi1>, vector<16x16xf32>
    %c0_45 = arith.constant 0 : index
    %c0_46 = arith.constant 0 : index
    %c0_47 = arith.constant 0 : index
    %69 = vector.load %arg3[%c0_45, %c0_46, %c0_47] : memref<1x16x16xbf16, #tpu.memory_space<vmem>>, vector<1x16x16xbf16>
    %70 = vector.shape_cast %69 : vector<1x16x16xbf16> to vector<16x16xbf16>
    %71 = arith.extf %70 : vector<16x16xbf16> to vector<16x16xf32>
    %72 = arith.addf %68, %71 : vector<16x16xf32>
    %cst_48 = arith.constant dense<0xFF800000> : vector<16xf32>
    %73 = vector.multi_reduction <maximumf>, %72, %cst_48 [1] : vector<16x16xf32> to vector<16xf32>
    %74 = vector.shape_cast %73 : vector<16xf32> to vector<16x1xf32>
    %75 = vector.broadcast %74 : vector<16x1xf32> to vector<16x16xf32>
    %76 = arith.subf %72, %75 : vector<16x16xf32>
    %77 = math.exp %76 : vector<16x16xf32>
    %cst_49 = arith.constant dense<0.000000e+00> : vector<16xf32>
    %78 = vector.multi_reduction <add>, %77, %cst_49 [1] : vector<16x16xf32> to vector<16xf32>
    %79 = vector.shape_cast %78 : vector<16xf32> to vector<16x1xf32>
    %cst_50 = arith.constant 1.000000e-30 : f32
    %80 = vector.broadcast %cst_50 : f32 to vector<16x1xf32>
    %81 = arith.maximumf %79, %80 : vector<16x1xf32>
    %82 = tpu.reciprocal %81 {approx = true} : vector<16x1xf32> -> vector<16x1xf32>
    %83 = arith.truncf %77 : vector<16x16xf32> to vector<16x16xbf16>
    %cst_51 = arith.constant dense<0.000000e+00> : vector<16x64xf32>
    %84 = tpu.matmul %83, %54, %cst_51 {dimension_numbers = #tpu.dot_dimension_numbers<[1], [0], [0], [1], [0, 0, 1, 1], [], []>} : vector<16x16xbf16>, vector<16x64xbf16>, vector<16x64xf32> -> vector<16x64xf32>
    %85 = vector.broadcast %82 : vector<16x1xf32> to vector<16x64xf32>
    %86 = arith.mulf %84, %85 : vector<16x64xf32>
    %c0_52 = arith.constant 0 : index
    %c0_53 = arith.constant 0 : index
    %c0_54 = arith.constant 0 : index
    %87 = vector.load %arg11[%c0_52, %c0_53, %c0_54] : memref<1x1x64xf32, #tpu.memory_space<vmem>>, vector<1x1x64xf32>
    %88 = vector.shape_cast %87 : vector<1x1x64xf32> to vector<1x64xf32>
    %89 = vector.broadcast %88 : vector<1x64xf32> to vector<16x64xf32>
    %90 = arith.addf %86, %89 : vector<16x64xf32>
    %c0_55 = arith.constant 0 : index
    %c0_56 = arith.constant 0 : index
    %c0_57 = arith.constant 0 : index
    %91 = vector.load %arg4[%c0_55, %c0_56, %c0_57] : memref<1x2x16xbf16, #tpu.memory_space<vmem>>, vector<1x2x16xbf16>
    %92 = vector.shape_cast %91 : vector<1x2x16xbf16> to vector<2x16xbf16>
    %93 = arith.truncf %90 : vector<16x64xf32> to vector<16x64xbf16>
    %cst_58 = arith.constant dense<0.000000e+00> : vector<2x64xf32>
    %94 = tpu.matmul %92, %93, %cst_58 {dimension_numbers = #tpu.dot_dimension_numbers<[1], [0], [0], [1], [0, 0, 1, 1], [], []>} : vector<2x16xbf16>, vector<16x64xbf16>, vector<2x64xf32> -> vector<2x64xf32>
    %c0_59 = arith.constant 0 : index
    %c0_60 = arith.constant 0 : index
    %c0_61 = arith.constant 0 : index
    %95 = vector.load %arg15[%c0_59, %c0_60, %c0_61] : memref<1x2x64xf32, #tpu.memory_space<vmem>>, vector<1x2x64xf32>
    %96 = vector.shape_cast %95 : vector<1x2x64xf32> to vector<2x64xf32>
    %97 = vector.shape_cast %94 : vector<2x64xf32> to vector<1x2x64xf32>
    tpu.vector_store %arg15[%c0_59, %c0_60, %c0_61], %97 {strides = array<i32>} : memref<1x2x64xf32, #tpu.memory_space<vmem>>, vector<1x2x64xf32>,
    return
  }
  func.func @transform_0(%arg0: i32) -> (i32, i32, i32) {
    %c0_i32 = arith.constant 0 : i32
    %c0_i32_0 = arith.constant 0 : i32
    %c0_i32_1 = arith.constant 0 : i32
    return %arg0, %c0_i32, %c0_i32_0 : i32, i32, i32
  }
  func.func @transform_1(%arg0: i32) -> (i32, i32, i32) {
    %c0_i32 = arith.constant 0 : i32
    %c0_i32_0 = arith.constant 0 : i32
    %c0_i32_1 = arith.constant 0 : i32
    return %arg0, %c0_i32, %c0_i32_0 : i32, i32, i32
  }
  func.func @transform_2(%arg0: i32) -> (i32, i32, i32) {
    %c0_i32 = arith.constant 0 : i32
    %c0_i32_0 = arith.constant 0 : i32
    %c0_i32_1 = arith.constant 0 : i32
    return %arg0, %c0_i32, %c0_i32_0 : i32, i32, i32
  }
  func.func @transform_3(%arg0: i32) -> (i32, i32, i32) {
    %c0_i32 = arith.constant 0 : i32
    %c0_i32_0 = arith.constant 0 : i32
    %c0_i32_1 = arith.constant 0 : i32
    return %arg0, %c0_i32, %c0_i32_0 : i32, i32, i32
  }
  func.func @transform_4(%arg0: i32) -> (i32, i32, i32) {
    %c0_i32 = arith.constant 0 : i32
    %c0_i32_0 = arith.constant 0 : i32
    %c0_i32_1 = arith.constant 0 : i32
    return %arg0, %c0_i32, %c0_i32_0 : i32, i32, i32
  }
  func.func @transform_5(%arg0: i32) -> (i32, i32, i32) {
    %c0_i32 = arith.constant 0 : i32
    %c0_i32_0 = arith.constant 0 : i32
    %c0_i32_1 = arith.constant 0 : i32
    return %arg0, %c0_i32, %c0_i32_0 : i32, i32, i32
  }
  func.func @transform_6(%arg0: i32) -> (i32, i32, i32) {
    %c0_i32 = arith.constant 0 : i32
    %c0_i32_0 = arith.constant 0 : i32
    %c0_i32_1 = arith.constant 0 : i32
    return %arg0, %c0_i32, %c0_i32_0 : i32, i32, i32
  }
  func.func @transform_7(%arg0: i32) -> (i32, i32, i32) {
    %c0_i32 = arith.constant 0 : i32
    %c0_i32_0 = arith.constant 0 : i32
    %c0_i32_1 = arith.constant 0 : i32
    return %arg0, %c0_i32, %c0_i32_0 : i32, i32, i32
  }
  func.func @transform_8(%arg0: i32) -> (i32, i32, i32) {
    %c0_i32 = arith.constant 0 : i32
    %c0_i32_0 = arith.constant 0 : i32
    %c0_i32_1 = arith.constant 0 : i32
    return %arg0, %c0_i32, %c0_i32_0 : i32, i32, i32
  }
  func.func @transform_9(%arg0: i32) -> (i32, i32, i32) {
    %c0_i32 = arith.constant 0 : i32
    %c0_i32_0 = arith.constant 0 : i32
    %c0_i32_1 = arith.constant 0 : i32
    return %arg0, %c0_i32, %c0_i32_0 : i32, i32, i32
  }
  func.func @transform_10(%arg0: i32) -> (i32, i32, i32) {
    %c0_i32 = arith.constant 0 : i32
    %c0_i32_0 = arith.constant 0 : i32
    %c0_i32_1 = arith.constant 0 : i32
    return %arg0, %c0_i32, %c0_i32_0 : i32, i32, i32
  }
  func.func @transform_11(%arg0: i32) -> (i32, i32, i32) {
    %c0_i32 = arith.constant 0 : i32
    %c0_i32_0 = arith.constant 0 : i32
    %c0_i32_1 = arith.constant 0 : i32
    %c0_i32_2 = arith.constant 0 : i32
    return %c0_i32, %c0_i32_0, %c0_i32_1 : i32, i32, i32
  }
  func.func @transform_12(%arg0: i32) -> (i32, i32, i32) {
    %c0_i32 = arith.constant 0 : i32
    %c0_i32_0 = arith.constant 0 : i32
    %c0_i32_1 = arith.constant 0 : i32
    %c0_i32_2 = arith.constant 0 : i32
    return %c0_i32, %c0_i32_0, %c0_i32_1 : i32, i32, i32
  }
  func.func @transform_13(%arg0: i32) -> (i32, i32, i32) {
    %c0_i32 = arith.constant 0 : i32
    %c0_i32_0 = arith.constant 0 : i32
    %c0_i32_1 = arith.constant 0 : i32
    %c0_i32_2 = arith.constant 0 : i32
    return %c0_i32, %c0_i32_0, %c0_i32_1 : i32, i32, i32
  }
  func.func @transform_14(%arg0: i32) -> (i32, i32, i32) {
    %c0_i32 = arith.constant 0 : i32
    %c0_i32_0 = arith.constant 0 : i32
    %c0_i32_1 = arith.constant 0 : i32
    return %arg0, %c0_i32, %c0_i32_0 : i32, i32, i32
  }
}

module attributes {stable_mosaic.version = 11 : i64} {
  func.func @_lstm_lin_kernel(%arg0: memref<2x192xbf16, #tpu.memory_space<vmem>>, %arg1: memref<192x256xbf16, #tpu.memory_space<vmem>>, %arg2: memref<1x256xf32, #tpu.memory_space<vmem>>, %arg3: memref<32x5xbf16, #tpu.memory_space<vmem>>, %arg4: memref<32x5xbf16, #tpu.memory_space<vmem>>, %arg5: memref<1x5xf32, #tpu.memory_space<vmem>>, %arg6: memref<2x5xf32, #tpu.memory_space<vmem>>) attributes {dimension_semantics = [], scalar_prefetch = 0 : i64, scratch_operands = 0 : i64, tpu.core_type = #tpu.core_type<tc>} {
    %c0 = arith.constant 0 : index
    %c0_0 = arith.constant 0 : index
    %0 = vector.load %arg0[%c0, %c0_0] : memref<2x192xbf16, #tpu.memory_space<vmem>>, vector<2x192xbf16>
    %c0_1 = arith.constant 0 : index
    %c0_2 = arith.constant 0 : index
    %1 = vector.load %arg1[%c0_1, %c0_2] : memref<192x256xbf16, #tpu.memory_space<vmem>>, vector<192x256xbf16>
    %cst = arith.constant dense<0.000000e+00> : vector<2x256xf32>
    %2 = tpu.matmul %0, %1, %cst {dimension_numbers = #tpu.dot_dimension_numbers<[1], [0], [0], [1], [0, 0, 1, 1], [], []>} : vector<2x192xbf16>, vector<192x256xbf16>, vector<2x256xf32> -> vector<2x256xf32>
    %c0_3 = arith.constant 0 : index
    %c0_4 = arith.constant 0 : index
    %3 = vector.load %arg2[%c0_3, %c0_4] : memref<1x256xf32, #tpu.memory_space<vmem>>, vector<1x256xf32>
    %4 = vector.broadcast %3 : vector<1x256xf32> to vector<2x256xf32>
    %5 = arith.addf %2, %4 : vector<2x256xf32>
    %6 = vector.extract_strided_slice %5 {offsets = [0, 0], sizes = [2, 32], strides = [1, 1]} : vector<2x256xf32> to vector<2x32xf32>
    %7 = arith.negf %6 : vector<2x32xf32>
    %8 = math.exp %7 : vector<2x32xf32>
    %cst_5 = arith.constant 1.000000e+00 : f32
    %9 = vector.broadcast %cst_5 : f32 to vector<2x32xf32>
    %10 = arith.addf %9, %8 : vector<2x32xf32>
    %11 = arith.divf %9, %10 : vector<2x32xf32>
    %12 = vector.extract_strided_slice %5 {offsets = [0, 64], sizes = [2, 32], strides = [1, 1]} : vector<2x256xf32> to vector<2x32xf32>
    %13 = math.tanh %12 : vector<2x32xf32>
    %14 = vector.extract_strided_slice %5 {offsets = [0, 96], sizes = [2, 32], strides = [1, 1]} : vector<2x256xf32> to vector<2x32xf32>
    %15 = arith.negf %14 : vector<2x32xf32>
    %16 = math.exp %15 : vector<2x32xf32>
    %cst_6 = arith.constant 1.000000e+00 : f32
    %17 = vector.broadcast %cst_6 : f32 to vector<2x32xf32>
    %18 = arith.addf %17, %16 : vector<2x32xf32>
    %19 = arith.divf %17, %18 : vector<2x32xf32>
    %20 = arith.mulf %11, %13 : vector<2x32xf32>
    %21 = math.tanh %20 : vector<2x32xf32>
    %22 = arith.mulf %19, %21 : vector<2x32xf32>
    %23 = arith.truncf %22 : vector<2x32xf32> to vector<2x32xbf16>
    %c0_7 = arith.constant 0 : index
    %c0_8 = arith.constant 0 : index
    %24 = vector.load %arg3[%c0_7, %c0_8] : memref<32x5xbf16, #tpu.memory_space<vmem>>, vector<32x5xbf16>
    %cst_9 = arith.constant dense<0.000000e+00> : vector<2x5xf32>
    %25 = tpu.matmul %23, %24, %cst_9 {dimension_numbers = #tpu.dot_dimension_numbers<[1], [0], [0], [1], [0, 0, 1, 1], [], []>} : vector<2x32xbf16>, vector<32x5xbf16>, vector<2x5xf32> -> vector<2x5xf32>
    %26 = vector.extract_strided_slice %5 {offsets = [0, 128], sizes = [2, 32], strides = [1, 1]} : vector<2x256xf32> to vector<2x32xf32>
    %27 = arith.negf %26 : vector<2x32xf32>
    %28 = math.exp %27 : vector<2x32xf32>
    %cst_10 = arith.constant 1.000000e+00 : f32
    %29 = vector.broadcast %cst_10 : f32 to vector<2x32xf32>
    %30 = arith.addf %29, %28 : vector<2x32xf32>
    %31 = arith.divf %29, %30 : vector<2x32xf32>
    %32 = vector.extract_strided_slice %5 {offsets = [0, 192], sizes = [2, 32], strides = [1, 1]} : vector<2x256xf32> to vector<2x32xf32>
    %33 = math.tanh %32 : vector<2x32xf32>
    %34 = vector.extract_strided_slice %5 {offsets = [0, 224], sizes = [2, 32], strides = [1, 1]} : vector<2x256xf32> to vector<2x32xf32>
    %35 = arith.negf %34 : vector<2x32xf32>
    %36 = math.exp %35 : vector<2x32xf32>
    %cst_11 = arith.constant 1.000000e+00 : f32
    %37 = vector.broadcast %cst_11 : f32 to vector<2x32xf32>
    %38 = arith.addf %37, %36 : vector<2x32xf32>
    %39 = arith.divf %37, %38 : vector<2x32xf32>
    %40 = arith.mulf %31, %33 : vector<2x32xf32>
    %41 = math.tanh %40 : vector<2x32xf32>
    %42 = arith.mulf %39, %41 : vector<2x32xf32>
    %43 = arith.truncf %42 : vector<2x32xf32> to vector<2x32xbf16>
    %c0_12 = arith.constant 0 : index
    %c0_13 = arith.constant 0 : index
    %44 = vector.load %arg4[%c0_12, %c0_13] : memref<32x5xbf16, #tpu.memory_space<vmem>>, vector<32x5xbf16>
    %cst_14 = arith.constant dense<0.000000e+00> : vector<2x5xf32>
    %45 = tpu.matmul %43, %44, %cst_14 {dimension_numbers = #tpu.dot_dimension_numbers<[1], [0], [0], [1], [0, 0, 1, 1], [], []>} : vector<2x32xbf16>, vector<32x5xbf16>, vector<2x5xf32> -> vector<2x5xf32>
    %46 = arith.addf %25, %45 : vector<2x5xf32>
    %c0_15 = arith.constant 0 : index
    %c0_16 = arith.constant 0 : index
    %47 = vector.load %arg5[%c0_15, %c0_16] : memref<1x5xf32, #tpu.memory_space<vmem>>, vector<1x5xf32>
    %48 = vector.broadcast %47 : vector<1x5xf32> to vector<2x5xf32>
    %49 = arith.addf %46, %48 : vector<2x5xf32>
    %c0_17 = arith.constant 0 : index
    %c0_18 = arith.constant 0 : index
    %50 = vector.load %arg6[%c0_17, %c0_18] : memref<2x5xf32, #tpu.memory_space<vmem>>, vector<2x5xf32>
    tpu.vector_store %arg6[%c0_17, %c0_18], %49 {strides = array<i32>} : memref<2x5xf32, #tpu.memory_space<vmem>>, vector<2x5xf32>,
    return
  }
}

</mosaic_0001>

<llo_original>
// kernel: gatmodel_forward.3
$region0: #{gatmodel_forward.3}
  #allocation0 [shape = 'u32[]', space=smem, size = 0x4, offset = 0x4, fixed_abs, tag = 'smem constant byte address 0x4 - core index']
  #allocation1 [shape = 'u32[144,128]{1,0:T(1,128)}', space=vmem, size = 0x12000, scoped, tag = 'internal scratch']
  %s0 = inlined_call_operand.vmem [shape: bf16[2,192], index: 0, kind: input, shape index: {}]
  %s1 = inlined_call_operand.vmem [shape: bf16[192,256], index: 1, kind: input, shape index: {}]
  %s2 = inlined_call_operand.vmem [shape: f32[1,256], index: 2, kind: input, shape index: {}]
  %s3 = inlined_call_operand.vmem [shape: bf16[32,5], index: 3, kind: input, shape index: {}]
  %s4 = inlined_call_operand.vmem [shape: bf16[32,5], index: 4, kind: input, shape index: {}]
  %s5 = inlined_call_operand.vmem [shape: f32[1,5], index: 5, kind: input, shape index: {}]
  %s6 = inlined_call_operand.hbm [shape: f32[2,5], index: 6, kind: output, shape index: {}]
  %s7 = sld [smem:[#allocation0]]
  $region34: #{gatmodel_forward.3} parent=0
    _
  %s9 = ssub.s32 1, %s7
  %s10 = scalar_select 0, %s9, %s7
  $region1: #{gatmodel_forward.3} parent=0
    #allocation2 [shape = 'u8[1024]{0}', space=vmem, size = 0x400, scoped, tag = 'output window, operand 0, single buffered']
    #allocation3 [shape = 's32[1]{0}', space=sflag, size = 0x4, scoped, tag = 'scoped memory for gatmodel_forward.3']
    %11 = vsyncpa [#allocation3], 0
    // Predicated region
    $region2: #{gatmodel_forward.3} parent=1 // pred_check
      _
    $region3: #{gatmodel_forward.3} parent=1 // pred_check_branch
      %13 = sbr.rel (0) target = $region5
    $region4: #{gatmodel_forward.3} parent=1 // pred_region
      _
    $region5: #{gatmodel_forward.3} parent=1 // pred_fallthru
      _
    // Predicated region
    $region6: #{gatmodel_forward.3} parent=1 // pred_check
      _
    $region7: #{gatmodel_forward.3} parent=1 // pred_check_branch
      %15 = sbr.rel (0) target = $region9
    $region8: #{gatmodel_forward.3} parent=1 // pred_region
      _
    $region9: #{gatmodel_forward.3} parent=1 // pred_fallthru
      _
    // Predicated region
    $region10: #{gatmodel_forward.3} parent=1 // pred_check
      _
    $region11: #{gatmodel_forward.3} parent=1 // pred_check_branch
      %17 = sbr.rel (0) target = $region13
    $region12: #{gatmodel_forward.3} parent=1 // pred_region
      _
    $region13: #{gatmodel_forward.3} parent=1 // pred_fallthru
      _
    // Predicated region
    $region14: #{gatmodel_forward.3} parent=1 // pred_check
      _
    $region15: #{gatmodel_forward.3} parent=1 // pred_check_branch
      %19 = sbr.rel (0) target = $region17
    $region16: #{gatmodel_forward.3} parent=1 // pred_region
      _
    $region17: #{gatmodel_forward.3} parent=1 // pred_fallthru
      _
    // Predicated region
    $region18: #{gatmodel_forward.3} parent=1 // pred_check
      _
    $region19: #{gatmodel_forward.3} parent=1 // pred_check_branch
      %21 = sbr.rel (0) target = $region21
    $region20: #{gatmodel_forward.3} parent=1 // pred_region
      _
    $region21: #{gatmodel_forward.3} parent=1 // pred_fallthru
      _
    // Predicated region
    $region22: #{gatmodel_forward.3} parent=1 // pred_check
      _
    $region23: #{gatmodel_forward.3} parent=1 // pred_check_branch
      %23 = sbr.rel (0) target = $region25
    $region24: #{gatmodel_forward.3} parent=1 // pred_region
      _
    $region25: #{gatmodel_forward.3} parent=1 // pred_fallthru
      _
    %v25 = vld [vmem:[%s0] sm:$0x3]
    %v26 = vld [vmem:[%s1] sm:$0xff]
    %v27 = vld [vmem:[%s1 + $0x8] sm:$0xff]
    %v28 = vld [vmem:[%s1 + $0x10] sm:$0xff]
    %v29 = vld [vmem:[%s1 + $0x18] sm:$0xff]
    %v30 = vld [vmem:[%s1 + $0x20] sm:$0xff]
    %v31 = vld [vmem:[%s1 + $0x28] sm:$0xff]
    %v32 = vld [vmem:[%s1 + $0x30] sm:$0xff]
    %v33 = vld [vmem:[%s1 + $0x38] sm:$0xff]
    %v34 = vld [vmem:[%s1 + $0x40] sm:$0xff]
    %v35 = vld [vmem:[%s1 + $0x48] sm:$0xff]
    %v36 = vld [vmem:[%s1 + $0x50] sm:$0xff]
    %v37 = vld [vmem:[%s1 + $0x58] sm:$0xff]
    %v38 = vld [vmem:[%s1 + $0x60] sm:$0xff]
    %v39 = vld [vmem:[%s1 + $0x68] sm:$0xff]
    %v40 = vld [vmem:[%s1 + $0x70] sm:$0xff]
    %v41 = vld [vmem:[%s1 + $0x78] sm:$0xff]
    %v42 = vld [vmem:[%s1 + $0x80] sm:$0xff]
    %v43 = vld [vmem:[%s1 + $0x88] sm:$0xff]
    %v44 = vld [vmem:[%s1 + $0x90] sm:$0xff]
    %v45 = vld [vmem:[%s1 + $0x98] sm:$0xff]
    %v46 = vld [vmem:[%s1 + $0xa0] sm:$0xff]
    %v47 = vld [vmem:[%s1 + $0xa8] sm:$0xff]
    %v48 = vld [vmem:[%s1 + $0xb0] sm:$0xff]
    %v49 = vld [vmem:[%s1 + $0xb8] sm:$0xff]
    %v50 = vld [vmem:[%s2] sm:$0x3]
    %v52 = vlaneseq
    %v53 = vshrl.u32 %v52, 7
    %v54 = vsub.s32 0, %v53
    %v55 = vrot.slane %v50, %v54
    %v56 = vlaneseq
    %v57 = vshrl.u32 %v56, 7
    %v58 = vsub.s32 1, %v57
    %v59 = vrot.slane %v50, %v58
    %v64 = vunpack.c.l.s4 1966171168
    %v65 = vunpack.c.0.s8 %v64
    %v66 = vlaneseq
    %v67 = vshrl.u32 %v66, 7
    %v68 = vsub.s32 %v65, %v67
    %v69 = vrot.slane %v25, %v68
    %v70 = vcombine.high %v69, %v69
    %v72 = vunpack.c.l.s4 1966171168
    %v73 = vunpack.c.0.s8 %v72
    %v74 = vlaneseq
    %v75 = vshrl.u32 %v74, 7
    %v76 = vsub.s32 %v73, %v75
    %v77 = vrot.slane %v69, %v76
    %v79 = vunpack.c.l.s4 1966171168
    %v80 = vunpack.c.0.s8 %v79
    %v81 = vlaneseq
    %v82 = vshrl.u32 %v81, 7
    %v83 = vsub.s32 %v80, %v82
    %v84 = vrot.slane %v70, %v83
    %v110 = vunpack.c.l.b16 %v26
    %v111 = vunpack.c.h.b16 %v26
    %v112 = vunpack.c.l.b16 %v27
    %v113 = vunpack.c.h.b16 %v27
    %v114 = vunpack.c.l.b16 %v28
    %v115 = vunpack.c.h.b16 %v28
    %v116 = vunpack.c.l.b16 %v29
    %v117 = vunpack.c.h.b16 %v29
    %v118 = vunpack.c.l.b16 %v30
    %v119 = vunpack.c.h.b16 %v30
    %v120 = vunpack.c.l.b16 %v31
    %v121 = vunpack.c.h.b16 %v31
    %v122 = vunpack.c.l.b16 %v32
    %v123 = vunpack.c.h.b16 %v32
    %v124 = vunpack.c.l.b16 %v33
    %v125 = vunpack.c.h.b16 %v33
    %v126 = vunpack.c.l.b16 %v34
    %v127 = vunpack.c.h.b16 %v34
    %v128 = vunpack.c.l.b16 %v35
    %v129 = vunpack.c.h.b16 %v35
    %v130 = vunpack.c.l.b16 %v36
    %v131 = vunpack.c.h.b16 %v36
    %v132 = vunpack.c.l.b16 %v37
    %v133 = vunpack.c.h.b16 %v37
    %v134 = vunpack.c.l.b16 %v38
    %v135 = vunpack.c.h.b16 %v38
    %v136 = vunpack.c.l.b16 %v39
    %v137 = vunpack.c.h.b16 %v39
    %v138 = vunpack.c.l.b16 %v40
    %v139 = vunpack.c.h.b16 %v40
    %v140 = vunpack.c.l.b16 %v41
    %v141 = vunpack.c.h.b16 %v41
    %v142 = vunpack.c.l.b16 %v42
    %v143 = vunpack.c.h.b16 %v42
    %v144 = vunpack.c.l.b16 %v43
    %v145 = vunpack.c.h.b16 %v43
    %v146 = vunpack.c.l.b16 %v44
    %v147 = vunpack.c.h.b16 %v44
    %v148 = vunpack.c.l.b16 %v45
    %v149 = vunpack.c.h.b16 %v45
    %v150 = vunpack.c.l.b16 %v46
    %v151 = vunpack.c.h.b16 %v46
    %v152 = vunpack.c.l.b16 %v47
    %v153 = vunpack.c.h.b16 %v47
    %v154 = vunpack.c.l.b16 %v48
    %v155 = vunpack.c.h.b16 %v48
    %v156 = vunpack.c.l.b16 %v49
    %v157 = vunpack.c.h.b16 %v49
    %v158 = vpack.c.b16 %v112, %v110
    %v159 = vpack.c.b16 %v113, %v111
    %v160 = vpack.c.b16 %v116, %v114
    %v161 = vpack.c.b16 %v117, %v115
    %v162 = vpack.c.b16 %v120, %v118
    %v163 = vpack.c.b16 %v121, %v119
    %v164 = vpack.c.b16 %v124, %v122
    %v165 = vpack.c.b16 %v125, %v123
    %v166 = vpack.c.b16 %v128, %v126
    %v167 = vpack.c.b16 %v129, %v127
    %v168 = vpack.c.b16 %v132, %v130
    %v169 = vpack.c.b16 %v133, %v131
    %v170 = vpack.c.b16 %v136, %v134
    %v171 = vpack.c.b16 %v137, %v135
    %v172 = vpack.c.b16 %v140, %v138
    %v173 = vpack.c.b16 %v141, %v139
    %v174 = vpack.c.b16 %v144, %v142
    %v175 = vpack.c.b16 %v145, %v143
    %v176 = vpack.c.b16 %v148, %v146
    %v177 = vpack.c.b16 %v149, %v147
    %v178 = vpack.c.b16 %v152, %v150
    %v179 = vpack.c.b16 %v153, %v151
    %v180 = vpack.c.b16 %v156, %v154
    %v181 = vpack.c.b16 %v157, %v155
    %vm206 = vcmask 523264
    %v208 = vsel %vm206, %v84, 0
    %210 = vmatprep.subr.bf16.mxu0 %v159
    %211 = vmatpush1.bf16.msra.mxu0 %v158
    %212 = vmatprep.subr.bf16.mxu0 %v161
    %213 = vmatpush1.bf16.msra.mxu0 %v160
    %214 = vmatprep.subr.bf16.mxu0 %v163
    %215 = vmatpush1.bf16.msra.mxu0 %v162
    %216 = vmatprep.subr.bf16.mxu0 %v165
    %217 = vmatpush1.bf16.msra.mxu0 %v164
    %218 = vmatprep.subr.bf16.mxu0 %v167
    %219 = vmatpush1.bf16.msra.mxu0 %v166
    %220 = vmatprep.subr.bf16.mxu0 %v169
    %221 = vmatpush1.bf16.msra.mxu0 %v168
    %222 = vmatprep.subr.bf16.mxu0 %v171
    %223 = vmatpush1.bf16.msra.mxu0 %v170
    %224 = vmatprep.subr.bf16.mxu0 %v173
    %225 = vmatpush1.bf16.msra.mxu0 %v172
    %226 = vmatprep.subr.bf16.mxu0 %v175
    %227 = vmatpush1.bf16.msra.mxu0 %v174
    %228 = vmatprep.subr.bf16.mxu0 %v177
    %229 = vmatpush1.bf16.msra.mxu0 %v176
    %230 = vmatprep.subr.bf16.mxu0 %v179
    %231 = vmatpush1.bf16.msra.mxu0 %v178
    %232 = vmatprep.subr.bf16.mxu0 %v181
    %233 = vmatpush1.bf16.msra.mxu0 %v180
    %234 = vmatprep.subr.bf16.mxu0 0
    %235 = vmatpush1.bf16.msra.mxu0 0
    %236 = vmatprep.subr.bf16.mxu0 0
    %237 = vmatpush1.bf16.msra.mxu0 0
    %238 = vmatprep.subr.bf16.mxu0 0
    %239 = vmatpush1.bf16.msra.mxu0 0
    %240 = vmatprep.subr.bf16.mxu0 0
    %241 = vmatpush1.bf16.msra.mxu0 0
    %242 = vmatprep.mubr.bf16.mxu0 %v208
    %243 = vmatmul.mubr.bf16.gmra.mrb[0].mxu0 %v77
    %v244 = vpop.f32.mrb[0].mxu0
    %v245 = vadd.f32 %v55, %v244
    %v246 = vpop.f32.mrb[0].mxu0
    %v247 = vadd.f32 %v59, %v246
    %v248 = vpop.f32.mrb[0].mxu0
    %v249 = vpop.f32.mrb[0].mxu0
    %250 = vdwg.mxu0
    %v251 = vxor.u32 %v245, 2147483648
    %v252 = vmul.f32 %v251, 1.442695
    %v253 = vpow.pop %v252
    %v254 = vadd.f32 %v253, 1.0
    %v255 = vrcp.pop %v254
    %v256 = vmul.f32 1.0, %v255
    %v257 = vtanh.pop %v245
    %259 = vrot.lane.b32.xlu0 %v257, 64
    %v260 = vpop.permute.xlu0 %259
    %v262 = vmul.f32 %v256, %v260
    %v263 = vtanh.pop %v262
    %265 = vrot.lane.b32.xlu0 %v263, 96
    %v266 = vpop.permute.xlu0 %265
    %v268 = vmul.f32 %v256, %v266
    %v269 = vpack.c.bf16 %v268, %v268
    %v270 = vld [vmem:[%s3] sm:$0xf]
    %v271 = vld [vmem:[%s3 + $0x4] sm:$0xf]
    %v272 = vld [vmem:[%s3 + $0x8] sm:$0xf]
    %v273 = vld [vmem:[%s3 + $0xc] sm:$0xf]
    %v274 = vxor.u32 %v247, 2147483648
    %v275 = vmul.f32 %v274, 1.442695
    %v276 = vpow.pop %v275
    %v277 = vadd.f32 %v276, 1.0
    %v278 = vrcp.pop %v277
    %v279 = vmul.f32 1.0, %v278
    %v280 = vtanh.pop %v247
    %282 = vrot.lane.b32.xlu0 %v280, 64
    %v283 = vpop.permute.xlu0 %282
    %v285 = vmul.f32 %v279, %v283
    %v286 = vtanh.pop %v285
    %288 = vrot.lane.b32.xlu0 %v286, 96
    %v289 = vpop.permute.xlu0 %288
    %v291 = vmul.f32 %v279, %v289
    %v292 = vpack.c.bf16 %v291, %v291
    %v293 = vld [vmem:[%s4] sm:$0xf]
    %v294 = vld [vmem:[%s4 + $0x4] sm:$0xf]
    %v295 = vld [vmem:[%s4 + $0x8] sm:$0xf]
    %v296 = vld [vmem:[%s4 + $0xc] sm:$0xf]
    %298 = vrot.lane.b32.xlu0 %v292, 32
    %v299 = vpop.permute.xlu0 %298
    %v304 = vunpack.c.l.b16 %v293
    %v305 = vunpack.c.l.b16 %v294
    %v306 = vunpack.c.l.b16 %v295
    %v307 = vunpack.c.l.b16 %v296
    %v308 = vpack.c.b16 %v305, %v304
    %v309 = vpack.c.b16 %v307, %v306
    %vm312 = vcmask 261120
    %v314 = vsel %vm312, %v299, 0
    %316 = vmatprep.subr.bf16.mxu0 0
    %317 = vmatpush1.bf16.msra.mxu0 %v308
    %318 = vmatprep.subr.bf16.mxu0 0
    %319 = vmatpush1.bf16.msra.mxu0 %v309
    %320 = vmatprep.subr.bf16.mxu0 0
    %321 = vmatpush1.bf16.msra.mxu0 0
    %322 = vmatprep.subr.bf16.mxu0 0
    %323 = vmatpush1.bf16.msra.mxu0 0
    %324 = vmatprep.subr.bf16.mxu0 0
    %325 = vmatpush1.bf16.msra.mxu0 0
    %326 = vmatprep.subr.bf16.mxu0 0
    %327 = vmatpush1.bf16.msra.mxu0 0
    %328 = vmatprep.subr.bf16.mxu0 0
    %329 = vmatpush1.bf16.msra.mxu0 0
    %330 = vmatprep.subr.bf16.mxu0 0
    %331 = vmatpush1.bf16.msra.mxu0 0
    %332 = vmatprep.subr.bf16.mxu0 0
    %333 = vmatpush1.bf16.msra.mxu0 0
    %334 = vmatprep.subr.bf16.mxu0 0
    %335 = vmatpush1.bf16.msra.mxu0 0
    %336 = vmatprep.subr.bf16.mxu0 0
    %337 = vmatpush1.bf16.msra.mxu0 0
    %338 = vmatprep.subr.bf16.mxu0 0
    %339 = vmatpush1.bf16.msra.mxu0 0
    %340 = vmatprep.subr.bf16.mxu0 0
    %341 = vmatpush1.bf16.msra.mxu0 0
    %342 = vmatprep.subr.bf16.mxu0 0
    %343 = vmatpush1.bf16.msra.mxu0 0
    %344 = vmatprep.subr.bf16.mxu0 0
    %345 = vmatpush1.bf16.msra.mxu0 0
    %346 = vmatprep.subr.bf16.mxu0 0
    %347 = vmatpush1.bf16.msra.mxu0 0
    %348 = vmatprep.mubr.bf16.mxu0 0
    %349 = vmatmul.mubr.bf16.gmra.mrb[0].mxu0 %v314
    %v350 = vpop.f32.mrb[0].mxu0
    %v351 = vadd.f32 0.0, %v350
    %v352 = vpop.f32.mrb[0].mxu0
    %v353 = vpop.f32.mrb[0].mxu0
    %v354 = vpop.f32.mrb[0].mxu0
    %355 = vdwg.mxu0
    %357 = vrot.lane.b32.xlu0 %v269, 32
    %v358 = vpop.permute.xlu0 %357
    %v363 = vunpack.c.l.b16 %v270
    %v364 = vunpack.c.l.b16 %v271
    %v365 = vunpack.c.l.b16 %v272
    %v366 = vunpack.c.l.b16 %v273
    %v367 = vpack.c.b16 %v364, %v363
    %v368 = vpack.c.b16 %v366, %v365
    %v372 = vsel %vm312, %v358, 0
    %374 = vmatprep.subr.bf16.mxu0 0
    %375 = vmatpush1.bf16.msra.mxu0 %v367
    %376 = vmatprep.subr.bf16.mxu0 0
    %377 = vmatpush1.bf16.msra.mxu0 %v368
    %378 = vmatprep.subr.bf16.mxu0 0
    %379 = vmatpush1.bf16.msra.mxu0 0
    %380 = vmatprep.subr.bf16.mxu0 0
    %381 = vmatpush1.bf16.msra.mxu0 0
    %382 = vmatprep.subr.bf16.mxu0 0
    %383 = vmatpush1.bf16.msra.mxu0 0
    %384 = vmatprep.subr.bf16.mxu0 0
    %385 = vmatpush1.bf16.msra.mxu0 0
    %386 = vmatprep.subr.bf16.mxu0 0
    %387 = vmatpush1.bf16.msra.mxu0 0
    %388 = vmatprep.subr.bf16.mxu0 0
    %389 = vmatpush1.bf16.msra.mxu0 0
    %390 = vmatprep.subr.bf16.mxu0 0
    %391 = vmatpush1.bf16.msra.mxu0 0
    %392 = vmatprep.subr.bf16.mxu0 0
    %393 = vmatpush1.bf16.msra.mxu0 0
    %394 = vmatprep.subr.bf16.mxu0 0
    %395 = vmatpush1.bf16.msra.mxu0 0
    %396 = vmatprep.subr.bf16.mxu0 0
    %397 = vmatpush1.bf16.msra.mxu0 0
    %398 = vmatprep.subr.bf16.mxu0 0
    %399 = vmatpush1.bf16.msra.mxu0 0
    %400 = vmatprep.subr.bf16.mxu0 0
    %401 = vmatpush1.bf16.msra.mxu0 0
    %402 = vmatprep.subr.bf16.mxu0 0
    %403 = vmatpush1.bf16.msra.mxu0 0
    %404 = vmatprep.subr.bf16.mxu0 0
    %405 = vmatpush1.bf16.msra.mxu0 0
    %406 = vmatprep.mubr.bf16.mxu0 0
    %407 = vmatmul.mubr.bf16.gmra.mrb[0].mxu0 %v372
    %v408 = vpop.f32.mrb[0].mxu0
    %v409 = vadd.f32 %v351, %v408
    %v410 = vpop.f32.mrb[0].mxu0
    %v411 = vpop.f32.mrb[0].mxu0
    %v412 = vpop.f32.mrb[0].mxu0
    %413 = vdwg.mxu0
    %v414 = vld [vmem:[%s5] sm:$0x1]
    %v416 = vlaneseq
    %v417 = vshrl.u32 %v416, 7
    %v418 = vsub.s32 0, %v417
    %v419 = vrot.slane %v414, %v418
    %v421 = vadd.f32 %v409, %v419
    %vm422 = vcmask 33792
    %423 = vst.msk [vmem:[#allocation2] sm:$0x3] %vm422, %v421
    // Predicated region
    $region26: #{gatmodel_forward.3} parent=1 // pred_check
      _
    $region27: #{gatmodel_forward.3} parent=1 // pred_check_branch
      %425 = sbr.rel (0) target = $region29
    $region28: #{gatmodel_forward.3} parent=1 // pred_region
      %s427 = ssub.s32 32, 32
      %428 = vsyncadd [#allocation3], %s427
      %s430 = sshll.u32 [#allocation2], 4
      %s431 = int_to_ptr.vmem [resolvable:$true] %s430
      %433 = dma.vmem_to_hbm [thread:$0]  %s431, 32, %s6, [#allocation3]
    $region29: #{gatmodel_forward.3} parent=1 // pred_fallthru
      _
    // Predicated region
    $region30: #{gatmodel_forward.3} parent=1 // pred_check
      _
    $region31: #{gatmodel_forward.3} parent=1 // pred_check_branch
      %435 = sbr.rel (0) target = $region33
    $region32: #{gatmodel_forward.3} parent=1 // pred_region
      %436 = dma.done [#allocation3], 32
    $region33: #{gatmodel_forward.3} parent=1 // pred_fallthru
      _
    %437 = vsyncpa [#allocation3], 1

// kernel: gatmodel_forward.2
$region0: #{gatmodel_forward.2}
  #allocation0 [shape = 'u32[]', space=smem, size = 0x4, offset = 0x4, fixed_abs, tag = 'smem constant byte address 0x4 - core index']
  #allocation1 [shape = 'u32[144,128]{1,0:T(1,128)}', space=vmem, size = 0x12000, scoped, tag = 'internal scratch']
  %s0 = inlined_call_operand.vmem [shape: bf16[3,16,128], index: 0, kind: input, shape index: {}]
  %s1 = inlined_call_operand.vmem [shape: bf16[3,16,192], index: 1, kind: input, shape index: {}]
  %s2 = inlined_call_operand.vmem [shape: bf16[3,16,16], index: 2, kind: input, shape index: {}]
  %s3 = inlined_call_operand.vmem [shape: bf16[3,2,16], index: 3, kind: input, shape index: {}]
  %s4 = inlined_call_operand.vmem [shape: f32[3,1,192], index: 4, kind: input, shape index: {}]
  %s5 = inlined_call_operand.vmem [shape: bf16[3,128,384], index: 5, kind: input, shape index: {}]
  %s6 = inlined_call_operand.vmem [shape: bf16[3,384,192], index: 6, kind: input, shape index: {}]
  %s7 = inlined_call_operand.vmem [shape: f32[3,1,384], index: 7, kind: input, shape index: {}]
  %s8 = inlined_call_operand.vmem [shape: bf16[3,384,64], index: 8, kind: input, shape index: {}]
  %s9 = inlined_call_operand.vmem [shape: bf16[3,64,2], index: 9, kind: input, shape index: {}]
  %s10 = inlined_call_operand.vmem [shape: f32[3,1,64], index: 10, kind: input, shape index: {}]
  %s11 = inlined_call_operand.vmem [shape: bf16[1,192,12], index: 11, kind: input, shape index: {}]
  %s12 = inlined_call_operand.vmem [shape: bf16[1,12,384], index: 12, kind: input, shape index: {}]
  %s13 = inlined_call_operand.vmem [shape: bf16[1,192,384], index: 13, kind: input, shape index: {}]
  %s14 = inlined_call_operand.vmem [shape: f32[3,2,64], index: 14, kind: output, shape index: {}]
  %s15 = sld [smem:[#allocation0]]
  $region89: #{gatmodel_forward.2} parent=0
    _
  %s17 = ssub.s32 1, %s15
  %s18 = scalar_select 0, %s17, %s15
  loop: start=0, step=1, limit=5
  $region2: #{gatmodel_forward.2} parent=0 // loop_pre_header
    _
  $region3: #{gatmodel_forward.2} parent=0 // loop_header
    %s20 = sphi 0, %s24
    %p21 = scmp.ge.s32.totalorder %s20, 5
    %s30 = sphi 0, %s32
    %s33 = sphi 0, %s30
    %s34 = sphi 0, %s33
    %s50 = sphi 0, %s34
    %s56 = sphi 0, %s58
    %s59 = sphi 0, %s56
    %s60 = sphi 0, %s59
    %s76 = sphi 0, %s60
    %s82 = sphi 0, %s84
    %s85 = sphi 0, %s82
    %s86 = sphi 0, %s85
    %s102 = sphi 0, %s86
    %s108 = sphi 0, %s110
    %s111 = sphi 0, %s108
    %s112 = sphi 0, %s111
    %s128 = sphi 0, %s112
    %s134 = sphi 0, %s136
    %s137 = sphi 0, %s134
    %s138 = sphi 0, %s137
    %s154 = sphi 0, %s138
    %s160 = sphi 0, %s162
    %s163 = sphi 0, %s160
    %s164 = sphi 0, %s163
    %s180 = sphi 0, %s164
    %s186 = sphi 0, %s188
    %s189 = sphi 0, %s186
    %s190 = sphi 0, %s189
    %s206 = sphi 0, %s190
    %s212 = sphi 0, %s214
    %s215 = sphi 0, %s212
    %s216 = sphi 0, %s215
    %s232 = sphi 0, %s216
    %s238 = sphi 0, %s240
    %s241 = sphi 0, %s238
    %s242 = sphi 0, %s241
    %s258 = sphi 0, %s242
    %s264 = sphi 0, %s266
    %s267 = sphi 0, %s264
    %s268 = sphi 0, %s267
    %s284 = sphi 0, %s268
    %s290 = sphi 0, %s292
    %s293 = sphi 0, %s290
    %s294 = sphi 0, %s293
    %s310 = sphi 0, %s294
    %s314 = sphi 0, %s314
    %s316 = sphi 0, %s314
    %s317 = sphi 0, %s316
    %s331 = sphi 0, %s317
    %s335 = sphi 0, %s335
    %s337 = sphi 0, %s335
    %s338 = sphi 0, %s337
    %s352 = sphi 0, %s338
    %s356 = sphi 0, %s356
    %s358 = sphi 0, %s356
    %s359 = sphi 0, %s358
    %s373 = sphi 0, %s359
    %s379 = sphi 0, %s381
    %s382 = sphi 0, %s379
    %s383 = sphi 0, %s382
    %s399 = sphi 0, %s383
  $region4: #{gatmodel_forward.2} parent=0 // loop_header_branch
    %23 = sbr.rel (%p21) target = $region8
  $region5: #{gatmodel_forward.2} parent=0 // loop_body
    %s25 = ssub.s32 %s20, 1
    %s26 = ssub.s32 %s20, 2
    %s27 = sadd.s32 %s20, 1
    %s28 = ssub.s32 %s20, %s27
    %p29 = scmp.eq.s32.totalorder %s28, 0
    %s31 = sadd.s32 %s30, 1
    %s32 = scalar_select %p29, %s30, %s31
    %p35 = pneg %p29
    %p36 = scmp.eq.s32.totalorder %s20, 2
    %p37 = por %p35, %p36
    %p38 = scmp.ne.s32.totalorder %s30, %s33
    %p39 = scmp.eq.s32.totalorder %s20, 0
    %p40 = por %p38, %p39
    %p41 = scmp.ne.s32.totalorder %s30, %s33
    %p42 = scmp.eq.s32.totalorder %s25, 2
    %p43 = por %p41, %p42
    %p44 = scmp.ne.s32.totalorder %s33, %s34
    %p45 = scmp.eq.s32.totalorder %s25, 0
    %p46 = por %p44, %p45
    %p47 = scmp.ne.s32.totalorder %s33, %s34
    %p48 = scmp.eq.s32.totalorder %s26, 2
    %p49 = por %p47, %p48
    %p51 = scmp.ne.s32.totalorder %s34, %s50
    %p52 = scmp.eq.s32.totalorder %s26, 0
    %p53 = por %p51, %p52
    %s54 = ssub.s32 %s20, %s27
    %p55 = scmp.eq.s32.totalorder %s54, 0
    %s57 = sadd.s32 %s56, 1
    %s58 = scalar_select %p55, %s56, %s57
    %p61 = pneg %p55
    %p62 = scmp.eq.s32.totalorder %s20, 2
    %p63 = por %p61, %p62
    %p64 = scmp.ne.s32.totalorder %s56, %s59
    %p65 = scmp.eq.s32.totalorder %s20, 0
    %p66 = por %p64, %p65
    %p67 = scmp.ne.s32.totalorder %s56, %s59
    %p68 = scmp.eq.s32.totalorder %s25, 2
    %p69 = por %p67, %p68
    %p70 = scmp.ne.s32.totalorder %s59, %s60
    %p71 = scmp.eq.s32.totalorder %s25, 0
    %p72 = por %p70, %p71
    %p73 = scmp.ne.s32.totalorder %s59, %s60
    %p74 = scmp.eq.s32.totalorder %s26, 2
    %p75 = por %p73, %p74
    %p77 = scmp.ne.s32.totalorder %s60, %s76
    %p78 = scmp.eq.s32.totalorder %s26, 0
    %p79 = por %p77, %p78
    %s80 = ssub.s32 %s20, %s27
    %p81 = scmp.eq.s32.totalorder %s80, 0
    %s83 = sadd.s32 %s82, 1
    %s84 = scalar_select %p81, %s82, %s83
    %p87 = pneg %p81
    %p88 = scmp.eq.s32.totalorder %s20, 2
    %p89 = por %p87, %p88
    %p90 = scmp.ne.s32.totalorder %s82, %s85
    %p91 = scmp.eq.s32.totalorder %s20, 0
    %p92 = por %p90, %p91
    %p93 = scmp.ne.s32.totalorder %s82, %s85
    %p94 = scmp.eq.s32.totalorder %s25, 2
    %p95 = por %p93, %p94
    %p96 = scmp.ne.s32.totalorder %s85, %s86
    %p97 = scmp.eq.s32.totalorder %s25, 0
    %p98 = por %p96, %p97
    %p99 = scmp.ne.s32.totalorder %s85, %s86
    %p100 = scmp.eq.s32.totalorder %s26, 2
    %p101 = por %p99, %p100
    %p103 = scmp.ne.s32.totalorder %s86, %s102
    %p104 = scmp.eq.s32.totalorder %s26, 0
    %p105 = por %p103, %p104
    %s106 = ssub.s32 %s20, %s27
    %p107 = scmp.eq.s32.totalorder %s106, 0
    %s109 = sadd.s32 %s108, 1
    %s110 = scalar_select %p107, %s108, %s109
    %p113 = pneg %p107
    %p114 = scmp.eq.s32.totalorder %s20, 2
    %p115 = por %p113, %p114
    %p116 = scmp.ne.s32.totalorder %s108, %s111
    %p117 = scmp.eq.s32.totalorder %s20, 0
    %p118 = por %p116, %p117
    %p119 = scmp.ne.s32.totalorder %s108, %s111
    %p120 = scmp.eq.s32.totalorder %s25, 2
    %p121 = por %p119, %p120
    %p122 = scmp.ne.s32.totalorder %s111, %s112
    %p123 = scmp.eq.s32.totalorder %s25, 0
    %p124 = por %p122, %p123
    %p125 = scmp.ne.s32.totalorder %s111, %s112
    %p126 = scmp.eq.s32.totalorder %s26, 2
    %p127 = por %p125, %p126
    %p129 = scmp.ne.s32.totalorder %s112, %s128
    %p130 = scmp.eq.s32.totalorder %s26, 0
    %p131 = por %p129, %p130
    %s132 = ssub.s32 %s20, %s27
    %p133 = scmp.eq.s32.totalorder %s132, 0
    %s135 = sadd.s32 %s134, 1
    %s136 = scalar_select %p133, %s134, %s135
    %p139 = pneg %p133
    %p140 = scmp.eq.s32.totalorder %s20, 2
    %p141 = por %p139, %p140
    %p142 = scmp.ne.s32.totalorder %s134, %s137
    %p143 = scmp.eq.s32.totalorder %s20, 0
    %p144 = por %p142, %p143
    %p145 = scmp.ne.s32.totalorder %s134, %s137
    %p146 = scmp.eq.s32.totalorder %s25, 2
    %p147 = por %p145, %p146
    %p148 = scmp.ne.s32.totalorder %s137, %s138
    %p149 = scmp.eq.s32.totalorder %s25, 0
    %p150 = por %p148, %p149
    %p151 = scmp.ne.s32.totalorder %s137, %s138
    %p152 = scmp.eq.s32.totalorder %s26, 2
    %p153 = por %p151, %p152
    %p155 = scmp.ne.s32.totalorder %s138, %s154
    %p156 = scmp.eq.s32.totalorder %s26, 0
    %p157 = por %p155, %p156
    %s158 = ssub.s32 %s20, %s27
    %p159 = scmp.eq.s32.totalorder %s158, 0
    %s161 = sadd.s32 %s160, 1
    %s162 = scalar_select %p159, %s160, %s161
    %p165 = pneg %p159
    %p166 = scmp.eq.s32.totalorder %s20, 2
    %p167 = por %p165, %p166
    %p168 = scmp.ne.s32.totalorder %s160, %s163
    %p169 = scmp.eq.s32.totalorder %s20, 0
    %p170 = por %p168, %p169
    %p171 = scmp.ne.s32.totalorder %s160, %s163
    %p172 = scmp.eq.s32.totalorder %s25, 2
    %p173 = por %p171, %p172
    %p174 = scmp.ne.s32.totalorder %s163, %s164
    %p175 = scmp.eq.s32.totalorder %s25, 0
    %p176 = por %p174, %p175
    %p177 = scmp.ne.s32.totalorder %s163, %s164
    %p178 = scmp.eq.s32.totalorder %s26, 2
    %p179 = por %p177, %p178
    %p181 = scmp.ne.s32.totalorder %s164, %s180
    %p182 = scmp.eq.s32.totalorder %s26, 0
    %p183 = por %p181, %p182
    %s184 = ssub.s32 %s20, %s27
    %p185 = scmp.eq.s32.totalorder %s184, 0
    %s187 = sadd.s32 %s186, 1
    %s188 = scalar_select %p185, %s186, %s187
    %p191 = pneg %p185
    %p192 = scmp.eq.s32.totalorder %s20, 2
    %p193 = por %p191, %p192
    %p194 = scmp.ne.s32.totalorder %s186, %s189
    %p195 = scmp.eq.s32.totalorder %s20, 0
    %p196 = por %p194, %p195
    %p197 = scmp.ne.s32.totalorder %s186, %s189
    %p198 = scmp.eq.s32.totalorder %s25, 2
    %p199 = por %p197, %p198
    %p200 = scmp.ne.s32.totalorder %s189, %s190
    %p201 = scmp.eq.s32.totalorder %s25, 0
    %p202 = por %p200, %p201
    %p203 = scmp.ne.s32.totalorder %s189, %s190
    %p204 = scmp.eq.s32.totalorder %s26, 2
    %p205 = por %p203, %p204
    %p207 = scmp.ne.s32.totalorder %s190, %s206
    %p208 = scmp.eq.s32.totalorder %s26, 0
    %p209 = por %p207, %p208
    %s210 = ssub.s32 %s20, %s27
    %p211 = scmp.eq.s32.totalorder %s210, 0
    %s213 = sadd.s32 %s212, 1
    %s214 = scalar_select %p211, %s212, %s213
    %p217 = pneg %p211
    %p218 = scmp.eq.s32.totalorder %s20, 2
    %p219 = por %p217, %p218
    %p220 = scmp.ne.s32.totalorder %s212, %s215
    %p221 = scmp.eq.s32.totalorder %s20, 0
    %p222 = por %p220, %p221
    %p223 = scmp.ne.s32.totalorder %s212, %s215
    %p224 = scmp.eq.s32.totalorder %s25, 2
    %p225 = por %p223, %p224
    %p226 = scmp.ne.s32.totalorder %s215, %s216
    %p227 = scmp.eq.s32.totalorder %s25, 0
    %p228 = por %p226, %p227
    %p229 = scmp.ne.s32.totalorder %s215, %s216
    %p230 = scmp.eq.s32.totalorder %s26, 2
    %p231 = por %p229, %p230
    %p233 = scmp.ne.s32.totalorder %s216, %s232
    %p234 = scmp.eq.s32.totalorder %s26, 0
    %p235 = por %p233, %p234
    %s236 = ssub.s32 %s20, %s27
    %p237 = scmp.eq.s32.totalorder %s236, 0
    %s239 = sadd.s32 %s238, 1
    %s240 = scalar_select %p237, %s238, %s239
    %p243 = pneg %p237
    %p244 = scmp.eq.s32.totalorder %s20, 2
    %p245 = por %p243, %p244
    %p246 = scmp.ne.s32.totalorder %s238, %s241
    %p247 = scmp.eq.s32.totalorder %s20, 0
    %p248 = por %p246, %p247
    %p249 = scmp.ne.s32.totalorder %s238, %s241
    %p250 = scmp.eq.s32.totalorder %s25, 2
    %p251 = por %p249, %p250
    %p252 = scmp.ne.s32.totalorder %s241, %s242
    %p253 = scmp.eq.s32.totalorder %s25, 0
    %p254 = por %p252, %p253
    %p255 = scmp.ne.s32.totalorder %s241, %s242
    %p256 = scmp.eq.s32.totalorder %s26, 2
    %p257 = por %p255, %p256
    %p259 = scmp.ne.s32.totalorder %s242, %s258
    %p260 = scmp.eq.s32.totalorder %s26, 0
    %p261 = por %p259, %p260
    %s262 = ssub.s32 %s20, %s27
    %p263 = scmp.eq.s32.totalorder %s262, 0
    %s265 = sadd.s32 %s264, 1
    %s266 = scalar_select %p263, %s264, %s265
    %p269 = pneg %p263
    %p270 = scmp.eq.s32.totalorder %s20, 2
    %p271 = por %p269, %p270
    %p272 = scmp.ne.s32.totalorder %s264, %s267
    %p273 = scmp.eq.s32.totalorder %s20, 0
    %p274 = por %p272, %p273
    %p275 = scmp.ne.s32.totalorder %s264, %s267
    %p276 = scmp.eq.s32.totalorder %s25, 2
    %p277 = por %p275, %p276
    %p278 = scmp.ne.s32.totalorder %s267, %s268
    %p279 = scmp.eq.s32.totalorder %s25, 0
    %p280 = por %p278, %p279
    %p281 = scmp.ne.s32.totalorder %s267, %s268
    %p282 = scmp.eq.s32.totalorder %s26, 2
    %p283 = por %p281, %p282
    %p285 = scmp.ne.s32.totalorder %s268, %s284
    %p286 = scmp.eq.s32.totalorder %s26, 0
    %p287 = por %p285, %p286
    %s288 = ssub.s32 %s20, %s27
    %p289 = scmp.eq.s32.totalorder %s288, 0
    %s291 = sadd.s32 %s290, 1
    %s292 = scalar_select %p289, %s290, %s291
    %p295 = pneg %p289
    %p296 = scmp.eq.s32.totalorder %s20, 2
    %p297 = por %p295, %p296
    %p298 = scmp.ne.s32.totalorder %s290, %s293
    %p299 = scmp.eq.s32.totalorder %s20, 0
    %p300 = por %p298, %p299
    %p301 = scmp.ne.s32.totalorder %s290, %s293
    %p302 = scmp.eq.s32.totalorder %s25, 2
    %p303 = por %p301, %p302
    %p304 = scmp.ne.s32.totalorder %s293, %s294
    %p305 = scmp.eq.s32.totalorder %s25, 0
    %p306 = por %p304, %p305
    %p307 = scmp.ne.s32.totalorder %s293, %s294
    %p308 = scmp.eq.s32.totalorder %s26, 2
    %p309 = por %p307, %p308
    %p311 = scmp.ne.s32.totalorder %s294, %s310
    %p312 = scmp.eq.s32.totalorder %s26, 0
    %p313 = por %p311, %p312
    %s315 = sadd.s32 %s314, 1
    %p318 = scmp.eq.s32.totalorder %s20, 2
    %p319 = scmp.ne.s32.totalorder %s314, %s316
    %p320 = scmp.eq.s32.totalorder %s20, 0
    %p321 = por %p319, %p320
    %p322 = scmp.ne.s32.totalorder %s314, %s316
    %p323 = scmp.eq.s32.totalorder %s25, 2
    %p324 = por %p322, %p323
    %p325 = scmp.ne.s32.totalorder %s316, %s317
    %p326 = scmp.eq.s32.totalorder %s25, 0
    %p327 = por %p325, %p326
    %p328 = scmp.ne.s32.totalorder %s316, %s317
    %p329 = scmp.eq.s32.totalorder %s26, 2
    %p330 = por %p328, %p329
    %p332 = scmp.ne.s32.totalorder %s317, %s331
    %p333 = scmp.eq.s32.totalorder %s26, 0
    %p334 = por %p332, %p333
    %s336 = sadd.s32 %s335, 1
    %p339 = scmp.eq.s32.totalorder %s20, 2
    %p340 = scmp.ne.s32.totalorder %s335, %s337
    %p341 = scmp.eq.s32.totalorder %s20, 0
    %p342 = por %p340, %p341
    %p343 = scmp.ne.s32.totalorder %s335, %s337
    %p344 = scmp.eq.s32.totalorder %s25, 2
    %p345 = por %p343, %p344
    %p346 = scmp.ne.s32.totalorder %s337, %s338
    %p347 = scmp.eq.s32.totalorder %s25, 0
    %p348 = por %p346, %p347
    %p349 = scmp.ne.s32.totalorder %s337, %s338
    %p350 = scmp.eq.s32.totalorder %s26, 2
    %p351 = por %p349, %p350
    %p353 = scmp.ne.s32.totalorder %s338, %s352
    %p354 = scmp.eq.s32.totalorder %s26, 0
    %p355 = por %p353, %p354
    %s357 = sadd.s32 %s356, 1
    %p360 = scmp.eq.s32.totalorder %s20, 2
    %p361 = scmp.ne.s32.totalorder %s356, %s358
    %p362 = scmp.eq.s32.totalorder %s20, 0
    %p363 = por %p361, %p362
    %p364 = scmp.ne.s32.totalorder %s356, %s358
    %p365 = scmp.eq.s32.totalorder %s25, 2
    %p366 = por %p364, %p365
    %p367 = scmp.ne.s32.totalorder %s358, %s359
    %p368 = scmp.eq.s32.totalorder %s25, 0
    %p369 = por %p367, %p368
    %p370 = scmp.ne.s32.totalorder %s358, %s359
    %p371 = scmp.eq.s32.totalorder %s26, 2
    %p372 = por %p370, %p371
    %p374 = scmp.ne.s32.totalorder %s359, %s373
    %p375 = scmp.eq.s32.totalorder %s26, 0
    %p376 = por %p374, %p375
    %s377 = ssub.s32 %s20, %s27
    %p378 = scmp.eq.s32.totalorder %s377, 0
    %s380 = sadd.s32 %s379, 1
    %s381 = scalar_select %p378, %s379, %s380
    %p384 = pneg %p378
    %p385 = scmp.eq.s32.totalorder %s20, 2
    %p386 = por %p384, %p385
    %p387 = scmp.ne.s32.totalorder %s379, %s382
    %p388 = scmp.eq.s32.totalorder %s20, 0
    %p389 = por %p387, %p388
    %p390 = scmp.ne.s32.totalorder %s379, %s382
    %p391 = scmp.eq.s32.totalorder %s25, 2
    %p392 = por %p390, %p391
    %p393 = scmp.ne.s32.totalorder %s382, %s383
    %p394 = scmp.eq.s32.totalorder %s25, 0
    %p395 = por %p393, %p394
    %p396 = scmp.ne.s32.totalorder %s382, %s383
    %p397 = scmp.eq.s32.totalorder %s26, 2
    %p398 = por %p396, %p397
    %p400 = scmp.ne.s32.totalorder %s383, %s399
    %p401 = scmp.eq.s32.totalorder %s26, 0
    %p402 = por %p400, %p401
    %p403 = scmp.le.s32.totalorder 1, %s20
    %p404 = scmp.lt.s32.totalorder %s20, 4
    %p405 = pnand %p403, %p404
    %p406 = pneg %p405
    // Predicated region
    $region9: #{gatmodel_forward.2} parent=5 // pred_check
      _
    $region10: #{gatmodel_forward.2} parent=5 // pred_check_branch
      %408 = sbr.rel (%p405) target = $region12
    $region11: #{gatmodel_forward.2} parent=5 // pred_region
      %s409 = ssub.s32 %s20, 1
      // Predicated region
      $region13: #{gatmodel_forward.2} parent=11 // pred_check
        %p410 = pneg %p327
      $region14: #{gatmodel_forward.2} parent=11 // pred_check_branch
        %412 = sbr.rel (%p410) target = $region16
      $region15: #{gatmodel_forward.2} parent=11 // pred_region
        _
      $region16: #{gatmodel_forward.2} parent=11 // pred_fallthru
        _
      // Predicated region
      $region17: #{gatmodel_forward.2} parent=11 // pred_check
        %p413 = pneg %p348
      $region18: #{gatmodel_forward.2} parent=11 // pred_check_branch
        %415 = sbr.rel (%p413) target = $region20
      $region19: #{gatmodel_forward.2} parent=11 // pred_region
        _
      $region20: #{gatmodel_forward.2} parent=11 // pred_fallthru
        _
      // Predicated region
      $region21: #{gatmodel_forward.2} parent=11 // pred_check
        %p416 = pneg %p369
      $region22: #{gatmodel_forward.2} parent=11 // pred_check_branch
        %418 = sbr.rel (%p416) target = $region24
      $region23: #{gatmodel_forward.2} parent=11 // pred_region
        _
      $region24: #{gatmodel_forward.2} parent=11 // pred_fallthru
        _
    $region12: #{gatmodel_forward.2} parent=5 // pred_fallthru
      _
    %p419 = scmp.lt.s32.totalorder %s20, 3
    // Predicated region
    $region25: #{gatmodel_forward.2} parent=5 // pred_check
      %p420 = pneg %p419
    $region26: #{gatmodel_forward.2} parent=5 // pred_check_branch
      %422 = sbr.rel (%p420) target = $region28
    $region27: #{gatmodel_forward.2} parent=5 // pred_region
      // Predicated region
      $region29: #{gatmodel_forward.2} parent=27 // pred_check
        %p423 = pneg %p40
      $region30: #{gatmodel_forward.2} parent=27 // pred_check_branch
        %425 = sbr.rel (%p423) target = $region32
      $region31: #{gatmodel_forward.2} parent=27 // pred_region
        %p426 = scmp.lt.s32.totalorder %s20, 2
        %s427 = scalar_select %p426, %s20, 2
        %s428 = smul.addr %s427, 2
        %s429 = smul.addr %s428, 4
        %s430 = scalar_lea.vmem %s0, %s429
      $region32: #{gatmodel_forward.2} parent=27 // pred_fallthru
        _
      // Predicated region
      $region33: #{gatmodel_forward.2} parent=27 // pred_check
        %p431 = pneg %p66
      $region34: #{gatmodel_forward.2} parent=27 // pred_check_branch
        %433 = sbr.rel (%p431) target = $region36
      $region35: #{gatmodel_forward.2} parent=27 // pred_region
        %p434 = scmp.lt.s32.totalorder %s20, 2
        %s435 = scalar_select %p434, %s20, 2
        %s436 = smul.addr %s435, 4
        %s437 = smul.addr %s436, 4
        %s438 = scalar_lea.vmem %s1, %s437
      $region36: #{gatmodel_forward.2} parent=27 // pred_fallthru
        _
      // Predicated region
      $region37: #{gatmodel_forward.2} parent=27 // pred_check
        %p439 = pneg %p92
      $region38: #{gatmodel_forward.2} parent=27 // pred_check_branch
        %441 = sbr.rel (%p439) target = $region40
      $region39: #{gatmodel_forward.2} parent=27 // pred_region
        %p442 = scmp.lt.s32.totalorder %s20, 2
        %s443 = scalar_select %p442, %s20, 2
        %s444 = smul.addr %s443, 2
        %s445 = smul.addr %s444, 4
        %s446 = scalar_lea.vmem %s2, %s445
      $region40: #{gatmodel_forward.2} parent=27 // pred_fallthru
        _
      // Predicated region
      $region41: #{gatmodel_forward.2} parent=27 // pred_check
        %p447 = pneg %p118
      $region42: #{gatmodel_forward.2} parent=27 // pred_check_branch
        %449 = sbr.rel (%p447) target = $region44
      $region43: #{gatmodel_forward.2} parent=27 // pred_region
        %p450 = scmp.lt.s32.totalorder %s20, 2
        %s451 = scalar_select %p450, %s20, 2
        %s452 = scalar_lea.vmem %s3, %s451
      $region44: #{gatmodel_forward.2} parent=27 // pred_fallthru
        _
      // Predicated region
      $region45: #{gatmodel_forward.2} parent=27 // pred_check
        %p453 = pneg %p144
      $region46: #{gatmodel_forward.2} parent=27 // pred_check_branch
        %455 = sbr.rel (%p453) target = $region48
      $region47: #{gatmodel_forward.2} parent=27 // pred_region
        %p456 = scmp.lt.s32.totalorder %s20, 2
        %s457 = scalar_select %p456, %s20, 2
        %s458 = smul.addr %s457, 2
        %s459 = scalar_lea.vmem %s4, %s458
      $region48: #{gatmodel_forward.2} parent=27 // pred_fallthru
        _
      // Predicated region
      $region49: #{gatmodel_forward.2} parent=27 // pred_check
        %p460 = pneg %p170
      $region50: #{gatmodel_forward.2} parent=27 // pred_check_branch
        %462 = sbr.rel (%p460) target = $region52
      $region51: #{gatmodel_forward.2} parent=27 // pred_region
        %p463 = scmp.lt.s32.totalorder %s20, 2
        %s464 = scalar_select %p463, %s20, 2
        %s465 = smul.addr %s464, 48
        %s466 = smul.addr %s465, 4
        %s467 = scalar_lea.vmem %s5, %s466
      $region52: #{gatmodel_forward.2} parent=27 // pred_fallthru
        _
      // Predicated region
      $region53: #{gatmodel_forward.2} parent=27 // pred_check
        %p468 = pneg %p196
      $region54: #{gatmodel_forward.2} parent=27 // pred_check_branch
        %470 = sbr.rel (%p468) target = $region56
      $region55: #{gatmodel_forward.2} parent=27 // pred_region
        %p471 = scmp.lt.s32.totalorder %s20, 2
        %s472 = scalar_select %p471, %s20, 2
        %s473 = smul.addr %s472, 96
        %s474 = smul.addr %s473, 4
        %s475 = scalar_lea.vmem %s6, %s474
      $region56: #{gatmodel_forward.2} parent=27 // pred_fallthru
        _
      // Predicated region
      $region57: #{gatmodel_forward.2} parent=27 // pred_check
        %p476 = pneg %p222
      $region58: #{gatmodel_forward.2} parent=27 // pred_check_branch
        %478 = sbr.rel (%p476) target = $region60
      $region59: #{gatmodel_forward.2} parent=27 // pred_region
        %p479 = scmp.lt.s32.totalorder %s20, 2
        %s480 = scalar_select %p479, %s20, 2
        %s481 = smul.addr %s480, 3
        %s482 = scalar_lea.vmem %s7, %s481
      $region60: #{gatmodel_forward.2} parent=27 // pred_fallthru
        _
      // Predicated region
      $region61: #{gatmodel_forward.2} parent=27 // pred_check
        %p483 = pneg %p248
      $region62: #{gatmodel_forward.2} parent=27 // pred_check_branch
        %485 = sbr.rel (%p483) target = $region64
      $region63: #{gatmodel_forward.2} parent=27 // pred_region
        %p486 = scmp.lt.s32.totalorder %s20, 2
        %s487 = scalar_select %p486, %s20, 2
        %s488 = smul.addr %s487, 48
        %s489 = smul.addr %s488, 4
        %s490 = scalar_lea.vmem %s8, %s489
      $region64: #{gatmodel_forward.2} parent=27 // pred_fallthru
        _
      // Predicated region
      $region65: #{gatmodel_forward.2} parent=27 // pred_check
        %p491 = pneg %p274
      $region66: #{gatmodel_forward.2} parent=27 // pred_check_branch
        %493 = sbr.rel (%p491) target = $region68
      $region67: #{gatmodel_forward.2} parent=27 // pred_region
        %p494 = scmp.lt.s32.totalorder %s20, 2
        %s495 = scalar_select %p494, %s20, 2
        %s496 = smul.addr %s495, 8
        %s497 = smul.addr %s496, 4
        %s498 = scalar_lea.vmem %s9, %s497
      $region68: #{gatmodel_forward.2} parent=27 // pred_fallthru
        _
      // Predicated region
      $region69: #{gatmodel_forward.2} parent=27 // pred_check
        %p499 = pneg %p300
      $region70: #{gatmodel_forward.2} parent=27 // pred_check_branch
        %501 = sbr.rel (%p499) target = $region72
      $region71: #{gatmodel_forward.2} parent=27 // pred_region
        %p502 = scmp.lt.s32.totalorder %s20, 2
        %s503 = scalar_select %p502, %s20, 2
        %s504 = scalar_lea.vmem %s10, %s503
      $region72: #{gatmodel_forward.2} parent=27 // pred_fallthru
        _
    $region28: #{gatmodel_forward.2} parent=5 // pred_fallthru
      _
    %p505 = scmp.le.s32.totalorder 1, %s20
    %p506 = scmp.lt.s32.totalorder %s20, 4
    %p507 = pnand %p505, %p506
    %p508 = pneg %p507
    // Predicated region
    $region73: #{gatmodel_forward.2} parent=5 // pred_check
      _
    $region74: #{gatmodel_forward.2} parent=5 // pred_check_branch
      %510 = sbr.rel (%p507) target = $region76
    $region75: #{gatmodel_forward.2} parent=5 // pred_region
      %s511 = ssub.s32 %s20, 1
      %p512 = scmp.lt.s32.totalorder %s25, 2
      %s513 = scalar_select %p512, %s25, 2
      %s514 = smul.addr %s513, 2
      %s515 = smul.addr %s514, 4
      %s516 = scalar_lea.vmem %s0, %s515
      %p517 = pneg %p46
      %p518 = pneg %p43
      %p519 = scmp.lt.s32.totalorder %s25, 2
      %s520 = scalar_select %p519, %s25, 2
      %s521 = smul.addr %s520, 4
      %s522 = smul.addr %s521, 4
      %s523 = scalar_lea.vmem %s1, %s522
      %p524 = pneg %p72
      %p525 = pneg %p69
      %p526 = scmp.lt.s32.totalorder %s25, 2
      %s527 = scalar_select %p526, %s25, 2
      %s528 = smul.addr %s527, 2
      %s529 = smul.addr %s528, 4
      %s530 = scalar_lea.vmem %s2, %s529
      %p531 = pneg %p98
      %p532 = pneg %p95
      %p533 = scmp.lt.s32.totalorder %s25, 2
      %s534 = scalar_select %p533, %s25, 2
      %s535 = scalar_lea.vmem %s3, %s534
      %p536 = pneg %p124
      %p537 = pneg %p121
      %p538 = scmp.lt.s32.totalorder %s25, 2
      %s539 = scalar_select %p538, %s25, 2
      %s540 = smul.addr %s539, 2
      %s541 = scalar_lea.vmem %s4, %s540
      %p542 = pneg %p150
      %p543 = pneg %p147
      %p544 = scmp.lt.s32.totalorder %s25, 2
      %s545 = scalar_select %p544, %s25, 2
      %s546 = smul.addr %s545, 48
      %s547 = smul.addr %s546, 4
      %s548 = scalar_lea.vmem %s5, %s547
      %p549 = pneg %p176
      %p550 = pneg %p173
      %p551 = scmp.lt.s32.totalorder %s25, 2
      %s552 = scalar_select %p551, %s25, 2
      %s553 = smul.addr %s552, 96
      %s554 = smul.addr %s553, 4
      %s555 = scalar_lea.vmem %s6, %s554
      %p556 = pneg %p202
      %p557 = pneg %p199
      %p558 = scmp.lt.s32.totalorder %s25, 2
      %s559 = scalar_select %p558, %s25, 2
      %s560 = smul.addr %s559, 3
      %s561 = scalar_lea.vmem %s7, %s560
      %p562 = pneg %p228
      %p563 = pneg %p225
      %p564 = scmp.lt.s32.totalorder %s25, 2
      %s565 = scalar_select %p564, %s25, 2
      %s566 = smul.addr %s565, 48
      %s567 = smul.addr %s566, 4
      %s568 = scalar_lea.vmem %s8, %s567
      %p569 = pneg %p254
      %p570 = pneg %p251
      %p571 = scmp.lt.s32.totalorder %s25, 2
      %s572 = scalar_select %p571, %s25, 2
      %s573 = smul.addr %s572, 8
      %s574 = smul.addr %s573, 4
      %s575 = scalar_lea.vmem %s9, %s574
      %p576 = pneg %p280
      %p577 = pneg %p277
      %p578 = scmp.lt.s32.totalorder %s25, 2
      %s579 = scalar_select %p578, %s25, 2
      %s580 = scalar_lea.vmem %s10, %s579
      %p581 = pneg %p306
      %p582 = pneg %p303
      %p583 = pneg %p327
      %p584 = pneg %p324
      %p585 = pneg %p348
      %p586 = pneg %p345
      %p587 = pneg %p369
      %p588 = pneg %p366
      %p589 = pneg %p395
      %p590 = pneg %p392
      %p591 = scmp.lt.s32.totalorder %s25, 2
      %s592 = scalar_select %p591, %s25, 2
      %s593 = smul.addr %s592, 2
      %s594 = scalar_lea.vmem %s14, %s593
      %p595 = scmp.lt.s32.totalorder %s25, 2
      %s596 = scalar_select %p595, %s25, 2
      %s597 = smul.addr %s596, 2
      %s598 = smul.addr %s597, 4
      %s599 = scalar_lea.vmem %s0, %s598
      %p600 = scmp.lt.s32.totalorder %s25, 2
      %s601 = scalar_select %p600, %s25, 2
      %s602 = smul.addr %s601, 4
      %s603 = smul.addr %s602, 4
      %s604 = scalar_lea.vmem %s1, %s603
      %p605 = scmp.lt.s32.totalorder %s25, 2
      %s606 = scalar_select %p605, %s25, 2
      %s607 = smul.addr %s606, 2
      %s608 = smul.addr %s607, 4
      %s609 = scalar_lea.vmem %s2, %s608
      %p610 = scmp.lt.s32.totalorder %s25, 2
      %s611 = scalar_select %p610, %s25, 2
      %s612 = scalar_lea.vmem %s3, %s611
      %p613 = scmp.lt.s32.totalorder %s25, 2
      %s614 = scalar_select %p613, %s25, 2
      %s615 = smul.addr %s614, 2
      %s616 = scalar_lea.vmem %s4, %s615
      %p617 = scmp.lt.s32.totalorder %s25, 2
      %s618 = scalar_select %p617, %s25, 2
      %s619 = smul.addr %s618, 48
      %s620 = smul.addr %s619, 4
      %s621 = scalar_lea.vmem %s5, %s620
      %p622 = scmp.lt.s32.totalorder %s25, 2
      %s623 = scalar_select %p622, %s25, 2
      %s624 = smul.addr %s623, 96
      %s625 = smul.addr %s624, 4
      %s626 = scalar_lea.vmem %s6, %s625
      %p627 = scmp.lt.s32.totalorder %s25, 2
      %s628 = scalar_select %p627, %s25, 2
      %s629 = smul.addr %s628, 3
      %s630 = scalar_lea.vmem %s7, %s629
      %p631 = scmp.lt.s32.totalorder %s25, 2
      %s632 = scalar_select %p631, %s25, 2
      %s633 = smul.addr %s632, 48
      %s634 = smul.addr %s633, 4
      %s635 = scalar_lea.vmem %s8, %s634
      %p636 = scmp.lt.s32.totalorder %s25, 2
      %s637 = scalar_select %p636, %s25, 2
      %s638 = smul.addr %s637, 8
      %s639 = smul.addr %s638, 4
      %s640 = scalar_lea.vmem %s9, %s639
      %p641 = scmp.lt.s32.totalorder %s25, 2
      %s642 = scalar_select %p641, %s25, 2
      %s643 = scalar_lea.vmem %s10, %s642
      %p644 = scmp.lt.s32.totalorder %s25, 2
      %s645 = scalar_select %p644, %s25, 2
      %s646 = smul.addr %s645, 2
      %s647 = scalar_lea.vmem %s14, %s646
      %v649 = vld [vmem:[%s599] sm:$0xf]
      %v650 = vld [vmem:[%s599 + $0x4] sm:$0xf]
      %v651 = vld [vmem:[%s621] sm:$0xff]
      %v652 = vld [vmem:[%s621 + $0x8] sm:$0xf]
      %v653 = vld [vmem:[%s621 + $0xc] sm:$0xff]
      %v654 = vld [vmem:[%s621 + $0x14] sm:$0xf]
      %v655 = vld [vmem:[%s621 + $0x18] sm:$0xff]
      %v656 = vld [vmem:[%s621 + $0x20] sm:$0xf]
      %v657 = vld [vmem:[%s621 + $0x24] sm:$0xff]
      %v658 = vld [vmem:[%s621 + $0x2c] sm:$0xf]
      %v659 = vld [vmem:[%s621 + $0x30] sm:$0xff]
      %v660 = vld [vmem:[%s621 + $0x38] sm:$0xf]
      %v661 = vld [vmem:[%s621 + $0x3c] sm:$0xff]
      %v662 = vld [vmem:[%s621 + $0x44] sm:$0xf]
      %v663 = vld [vmem:[%s621 + $0x48] sm:$0xff]
      %v664 = vld [vmem:[%s621 + $0x50] sm:$0xf]
      %v665 = vld [vmem:[%s621 + $0x54] sm:$0xff]
      %v666 = vld [vmem:[%s621 + $0x5c] sm:$0xf]
      %v667 = vld [vmem:[%s621 + $0x60] sm:$0xff]
      %v668 = vld [vmem:[%s621 + $0x68] sm:$0xf]
      %v669 = vld [vmem:[%s621 + $0x6c] sm:$0xff]
      %v670 = vld [vmem:[%s621 + $0x74] sm:$0xf]
      %v671 = vld [vmem:[%s621 + $0x78] sm:$0xff]
      %v672 = vld [vmem:[%s621 + $0x80] sm:$0xf]
      %v673 = vld [vmem:[%s621 + $0x84] sm:$0xff]
      %v674 = vld [vmem:[%s621 + $0x8c] sm:$0xf]
      %v675 = vld [vmem:[%s621 + $0x90] sm:$0xff]
      %v676 = vld [vmem:[%s621 + $0x98] sm:$0xf]
      %v677 = vld [vmem:[%s621 + $0x9c] sm:$0xff]
      %v678 = vld [vmem:[%s621 + $0xa4] sm:$0xf]
      %v679 = vld [vmem:[%s621 + $0xa8] sm:$0xff]
      %v680 = vld [vmem:[%s621 + $0xb0] sm:$0xf]
      %v681 = vld [vmem:[%s621 + $0xb4] sm:$0xff]
      %v682 = vld [vmem:[%s621 + $0xbc] sm:$0xf]
      %v685 = vunpack.c.l.b16 %v649
      %v686 = vunpack.c.l.b16 %v650
      %v687 = vpack.c.b16 %v686, %v685
      %v721 = vunpack.c.l.b16 %v651
      %v722 = vunpack.c.h.b16 %v651
      %v723 = vunpack.c.l.b16 %v652
      %v724 = vunpack.c.l.b16 %v653
      %v725 = vunpack.c.h.b16 %v653
      %v726 = vunpack.c.l.b16 %v654
      %v727 = vunpack.c.l.b16 %v655
      %v728 = vunpack.c.h.b16 %v655
      %v729 = vunpack.c.l.b16 %v656
      %v730 = vunpack.c.l.b16 %v657
      %v731 = vunpack.c.h.b16 %v657
      %v732 = vunpack.c.l.b16 %v658
      %v733 = vunpack.c.l.b16 %v659
      %v734 = vunpack.c.h.b16 %v659
      %v735 = vunpack.c.l.b16 %v660
      %v736 = vunpack.c.l.b16 %v661
      %v737 = vunpack.c.h.b16 %v661
      %v738 = vunpack.c.l.b16 %v662
      %v739 = vunpack.c.l.b16 %v663
      %v740 = vunpack.c.h.b16 %v663
      %v741 = vunpack.c.l.b16 %v664
      %v742 = vunpack.c.l.b16 %v665
      %v743 = vunpack.c.h.b16 %v665
      %v744 = vunpack.c.l.b16 %v666
      %v745 = vunpack.c.l.b16 %v667
      %v746 = vunpack.c.h.b16 %v667
      %v747 = vunpack.c.l.b16 %v668
      %v748 = vunpack.c.l.b16 %v669
      %v749 = vunpack.c.h.b16 %v669
      %v750 = vunpack.c.l.b16 %v670
      %v751 = vunpack.c.l.b16 %v671
      %v752 = vunpack.c.h.b16 %v671
      %v753 = vunpack.c.l.b16 %v672
      %v754 = vunpack.c.l.b16 %v673
      %v755 = vunpack.c.h.b16 %v673
      %v756 = vunpack.c.l.b16 %v674
      %v757 = vunpack.c.l.b16 %v675
      %v758 = vunpack.c.h.b16 %v675
      %v759 = vunpack.c.l.b16 %v676
      %v760 = vunpack.c.l.b16 %v677
      %v761 = vunpack.c.h.b16 %v677
      %v762 = vunpack.c.l.b16 %v678
      %v763 = vunpack.c.l.b16 %v679
      %v764 = vunpack.c.h.b16 %v679
      %v765 = vunpack.c.l.b16 %v680
      %v766 = vunpack.c.l.b16 %v681
      %v767 = vunpack.c.h.b16 %v681
      %v768 = vunpack.c.l.b16 %v682
      %v769 = vpack.c.b16 %v724, %v721
      %v770 = vpack.c.b16 %v725, %v722
      %v771 = vpack.c.b16 %v726, %v723
      %v772 = vpack.c.b16 %v730, %v727
      %v773 = vpack.c.b16 %v731, %v728
      %v774 = vpack.c.b16 %v732, %v729
      %v775 = vpack.c.b16 %v736, %v733
      %v776 = vpack.c.b16 %v737, %v734
      %v777 = vpack.c.b16 %v738, %v735
      %v778 = vpack.c.b16 %v742, %v739
      %v779 = vpack.c.b16 %v743, %v740
      %v780 = vpack.c.b16 %v744, %v741
      %v781 = vpack.c.b16 %v748, %v745
      %v782 = vpack.c.b16 %v749, %v746
      %v783 = vpack.c.b16 %v750, %v747
      %v784 = vpack.c.b16 %v754, %v751
      %v785 = vpack.c.b16 %v755, %v752
      %v786 = vpack.c.b16 %v756, %v753
      %v787 = vpack.c.b16 %v760, %v757
      %v788 = vpack.c.b16 %v761, %v758
      %v789 = vpack.c.b16 %v762, %v759
      %v790 = vpack.c.b16 %v766, %v763
      %v791 = vpack.c.b16 %v767, %v764
      %v792 = vpack.c.b16 %v768, %v765
      %817 = vmatprep.subr.bf16.mxu0 %v770
      %818 = vmatpush1.bf16.msra.mxu0 %v769
      %819 = vmatprep.subr.bf16.mxu0 %v773
      %820 = vmatpush1.bf16.msra.mxu0 %v772
      %821 = vmatprep.subr.bf16.mxu0 %v776
      %822 = vmatpush1.bf16.msra.mxu0 %v775
      %823 = vmatprep.subr.bf16.mxu0 %v779
      %824 = vmatpush1.bf16.msra.mxu0 %v778
      %825 = vmatprep.subr.bf16.mxu0 %v782
      %826 = vmatpush1.bf16.msra.mxu0 %v781
      %827 = vmatprep.subr.bf16.mxu0 %v785
      %828 = vmatpush1.bf16.msra.mxu0 %v784
      %829 = vmatprep.subr.bf16.mxu0 %v788
      %830 = vmatpush1.bf16.msra.mxu0 %v787
      %831 = vmatprep.subr.bf16.mxu0 %v791
      %832 = vmatpush1.bf16.msra.mxu0 %v790
      %833 = vmatprep.subr.bf16.mxu0 0
      %834 = vmatpush1.bf16.msra.mxu0 0
      %835 = vmatprep.subr.bf16.mxu0 0
      %836 = vmatpush1.bf16.msra.mxu0 0
      %837 = vmatprep.subr.bf16.mxu0 0
      %838 = vmatpush1.bf16.msra.mxu0 0
      %839 = vmatprep.subr.bf16.mxu0 0
      %840 = vmatpush1.bf16.msra.mxu0 0
      %841 = vmatprep.subr.bf16.mxu0 0
      %842 = vmatpush1.bf16.msra.mxu0 0
      %843 = vmatprep.subr.bf16.mxu0 0
      %844 = vmatpush1.bf16.msra.mxu0 0
      %845 = vmatprep.subr.bf16.mxu0 0
      %846 = vmatpush1.bf16.msra.mxu0 0
      %847 = vmatprep.subr.bf16.mxu0 0
      %848 = vmatpush1.bf16.msra.mxu0 0
      %849 = vmatprep.mubr.bf16.mxu0 0
      %850 = vmatmul.mubr.bf16.gmra.mrb[0].mxu0 %v687
      %v851 = vpop.f32.mrb[0].mxu0
      %v852 = vadd.f32 0.0, %v851
      %v853 = vpop.f32.mrb[0].mxu0
      %v854 = vadd.f32 0.0, %v853
      %v855 = vpop.f32.mrb[0].mxu0
      %v856 = vadd.f32 0.0, %v855
      %v857 = vpop.f32.mrb[0].mxu0
      %v858 = vadd.f32 0.0, %v857
      %859 = vdwg.mxu0
      %860 = vmatprep.subr.bf16.mxu0 0
      %861 = vmatpush1.bf16.msra.mxu0 %v771
      %862 = vmatprep.subr.bf16.mxu0 0
      %863 = vmatpush1.bf16.msra.mxu0 %v774
      %864 = vmatprep.subr.bf16.mxu0 0
      %865 = vmatpush1.bf16.msra.mxu0 %v777
      %866 = vmatprep.subr.bf16.mxu0 0
      %867 = vmatpush1.bf16.msra.mxu0 %v780
      %868 = vmatprep.subr.bf16.mxu0 0
      %869 = vmatpush1.bf16.msra.mxu0 %v783
      %870 = vmatprep.subr.bf16.mxu0 0
      %871 = vmatpush1.bf16.msra.mxu0 %v786
      %872 = vmatprep.subr.bf16.mxu0 0
      %873 = vmatpush1.bf16.msra.mxu0 %v789
      %874 = vmatprep.subr.bf16.mxu0 0
      %875 = vmatpush1.bf16.msra.mxu0 %v792
      %876 = vmatprep.subr.bf16.mxu0 0
      %877 = vmatpush1.bf16.msra.mxu0 0
      %878 = vmatprep.subr.bf16.mxu0 0
      %879 = vmatpush1.bf16.msra.mxu0 0
      %880 = vmatprep.subr.bf16.mxu0 0
      %881 = vmatpush1.bf16.msra.mxu0 0
      %882 = vmatprep.subr.bf16.mxu0 0
      %883 = vmatpush1.bf16.msra.mxu0 0
      %884 = vmatprep.subr.bf16.mxu0 0
      %885 = vmatpush1.bf16.msra.mxu0 0
      %886 = vmatprep.subr.bf16.mxu0 0
      %887 = vmatpush1.bf16.msra.mxu0 0
      %888 = vmatprep.subr.bf16.mxu0 0
      %889 = vmatpush1.bf16.msra.mxu0 0
      %890 = vmatprep.subr.bf16.mxu0 0
      %891 = vmatpush1.bf16.msra.mxu0 0
      %892 = vmatprep.mubr.bf16.mxu0 0
      %893 = vmatmul.mubr.bf16.gmra.mrb[0].mxu0 %v687
      %v894 = vpop.f32.mrb[0].mxu0
      %v895 = vadd.f32 0.0, %v894
      %v896 = vpop.f32.mrb[0].mxu0
      %v897 = vpop.f32.mrb[0].mxu0
      %v898 = vadd.f32 0.0, %v897
      %v899 = vpop.f32.mrb[0].mxu0
      %900 = vdwg.mxu0
      %v901 = vpack.c.bf16 %v856, %v852
      %v902 = vpack.c.bf16 %v858, %v854
      %v903 = vpack.c.bf16 %v898, %v895
      %v904 = vld [vmem:[%s626] sm:$0xff]
      %v905 = vld [vmem:[%s626 + $0x8] sm:$0xff]
      %v906 = vld [vmem:[%s626 + $0x10] sm:$0xff]
      %v907 = vld [vmem:[%s626 + $0x18] sm:$0xff]
      %v908 = vld [vmem:[%s626 + $0x20] sm:$0xff]
      %v909 = vld [vmem:[%s626 + $0x28] sm:$0xff]
      %v910 = vld [vmem:[%s626 + $0x30] sm:$0xff]
      %v911 = vld [vmem:[%s626 + $0x38] sm:$0xff]
      %v912 = vld [vmem:[%s626 + $0x40] sm:$0xff]
      %v913 = vld [vmem:[%s626 + $0x48] sm:$0xff]
      %v914 = vld [vmem:[%s626 + $0x50] sm:$0xff]
      %v915 = vld [vmem:[%s626 + $0x58] sm:$0xff]
      %v916 = vld [vmem:[%s626 + $0x60] sm:$0xff]
      %v917 = vld [vmem:[%s626 + $0x68] sm:$0xff]
      %v918 = vld [vmem:[%s626 + $0x70] sm:$0xff]
      %v919 = vld [vmem:[%s626 + $0x78] sm:$0xff]
      %v920 = vld [vmem:[%s626 + $0x80] sm:$0xff]
      %v921 = vld [vmem:[%s626 + $0x88] sm:$0xff]
      %v922 = vld [vmem:[%s626 + $0x90] sm:$0xff]
      %v923 = vld [vmem:[%s626 + $0x98] sm:$0xff]
      %v924 = vld [vmem:[%s626 + $0xa0] sm:$0xff]
      %v925 = vld [vmem:[%s626 + $0xa8] sm:$0xff]
      %v926 = vld [vmem:[%s626 + $0xb0] sm:$0xff]
      %v927 = vld [vmem:[%s626 + $0xb8] sm:$0xff]
      %v928 = vld [vmem:[%s626 + $0xc0] sm:$0xff]
      %v929 = vld [vmem:[%s626 + $0xc8] sm:$0xff]
      %v930 = vld [vmem:[%s626 + $0xd0] sm:$0xff]
      %v931 = vld [vmem:[%s626 + $0xd8] sm:$0xff]
      %v932 = vld [vmem:[%s626 + $0xe0] sm:$0xff]
      %v933 = vld [vmem:[%s626 + $0xe8] sm:$0xff]
      %v934 = vld [vmem:[%s626 + $0xf0] sm:$0xff]
      %v935 = vld [vmem:[%s626 + $0xf8] sm:$0xff]
      %v936 = vld [vmem:[%s626 + $0x100] sm:$0xff]
      %v937 = vld [vmem:[%s626 + $0x108] sm:$0xff]
      %v938 = vld [vmem:[%s626 + $0x110] sm:$0xff]
      %v939 = vld [vmem:[%s626 + $0x118] sm:$0xff]
      %v940 = vld [vmem:[%s626 + $0x120] sm:$0xff]
      %v941 = vld [vmem:[%s626 + $0x128] sm:$0xff]
      %v942 = vld [vmem:[%s626 + $0x130] sm:$0xff]
      %v943 = vld [vmem:[%s626 + $0x138] sm:$0xff]
      %v944 = vld [vmem:[%s626 + $0x140] sm:$0xff]
      %v945 = vld [vmem:[%s626 + $0x148] sm:$0xff]
      %v946 = vld [vmem:[%s626 + $0x150] sm:$0xff]
      %v947 = vld [vmem:[%s626 + $0x158] sm:$0xff]
      %v948 = vld [vmem:[%s626 + $0x160] sm:$0xff]
      %v949 = vld [vmem:[%s626 + $0x168] sm:$0xff]
      %v950 = vld [vmem:[%s626 + $0x170] sm:$0xff]
      %v951 = vld [vmem:[%s626 + $0x178] sm:$0xff]
      %v952 = vld [vmem:[%s616] sm:$0x3]
      %v954 = vlaneseq
      %v955 = vshrl.u32 %v954, 7
      %v956 = vsub.s32 0, %v955
      %v957 = vrot.slane %v952, %v956
      %v958 = vlaneseq
      %v959 = vshrl.u32 %v958, 7
      %v960 = vsub.s32 1, %v959
      %v961 = vrot.slane %v952, %v960
      %v1012 = vunpack.c.l.b16 %v904
      %v1013 = vunpack.c.h.b16 %v904
      %v1014 = vunpack.c.l.b16 %v905
      %v1015 = vunpack.c.h.b16 %v905
      %v1016 = vunpack.c.l.b16 %v906
      %v1017 = vunpack.c.h.b16 %v906
      %v1018 = vunpack.c.l.b16 %v907
      %v1019 = vunpack.c.h.b16 %v907
      %v1020 = vunpack.c.l.b16 %v908
      %v1021 = vunpack.c.h.b16 %v908
      %v1022 = vunpack.c.l.b16 %v909
      %v1023 = vunpack.c.h.b16 %v909
      %v1024 = vunpack.c.l.b16 %v910
      %v1025 = vunpack.c.h.b16 %v910
      %v1026 = vunpack.c.l.b16 %v911
      %v1027 = vunpack.c.h.b16 %v911
      %v1028 = vunpack.c.l.b16 %v912
      %v1029 = vunpack.c.h.b16 %v912
      %v1030 = vunpack.c.l.b16 %v913
      %v1031 = vunpack.c.h.b16 %v913
      %v1032 = vunpack.c.l.b16 %v914
      %v1033 = vunpack.c.h.b16 %v914
      %v1034 = vunpack.c.l.b16 %v915
      %v1035 = vunpack.c.h.b16 %v915
      %v1036 = vunpack.c.l.b16 %v916
      %v1037 = vunpack.c.h.b16 %v916
      %v1038 = vunpack.c.l.b16 %v917
      %v1039 = vunpack.c.h.b16 %v917
      %v1040 = vunpack.c.l.b16 %v918
      %v1041 = vunpack.c.h.b16 %v918
      %v1042 = vunpack.c.l.b16 %v919
      %v1043 = vunpack.c.h.b16 %v919
      %v1044 = vunpack.c.l.b16 %v920
      %v1045 = vunpack.c.h.b16 %v920
      %v1046 = vunpack.c.l.b16 %v921
      %v1047 = vunpack.c.h.b16 %v921
      %v1048 = vunpack.c.l.b16 %v922
      %v1049 = vunpack.c.h.b16 %v922
      %v1050 = vunpack.c.l.b16 %v923
      %v1051 = vunpack.c.h.b16 %v923
      %v1052 = vunpack.c.l.b16 %v924
      %v1053 = vunpack.c.h.b16 %v924
      %v1054 = vunpack.c.l.b16 %v925
      %v1055 = vunpack.c.h.b16 %v925
      %v1056 = vunpack.c.l.b16 %v926
      %v1057 = vunpack.c.h.b16 %v926
      %v1058 = vunpack.c.l.b16 %v927
      %v1059 = vunpack.c.h.b16 %v927
      %v1060 = vunpack.c.l.b16 %v928
      %v1061 = vunpack.c.h.b16 %v928
      %v1062 = vunpack.c.l.b16 %v929
      %v1063 = vunpack.c.h.b16 %v929
      %v1064 = vunpack.c.l.b16 %v930
      %v1065 = vunpack.c.h.b16 %v930
      %v1066 = vunpack.c.l.b16 %v931
      %v1067 = vunpack.c.h.b16 %v931
      %v1068 = vunpack.c.l.b16 %v932
      %v1069 = vunpack.c.h.b16 %v932
      %v1070 = vunpack.c.l.b16 %v933
      %v1071 = vunpack.c.h.b16 %v933
      %v1072 = vunpack.c.l.b16 %v934
      %v1073 = vunpack.c.h.b16 %v934
      %v1074 = vunpack.c.l.b16 %v935
      %v1075 = vunpack.c.h.b16 %v935
      %v1076 = vunpack.c.l.b16 %v936
      %v1077 = vunpack.c.h.b16 %v936
      %v1078 = vunpack.c.l.b16 %v937
      %v1079 = vunpack.c.h.b16 %v937
      %v1080 = vunpack.c.l.b16 %v938
      %v1081 = vunpack.c.h.b16 %v938
      %v1082 = vunpack.c.l.b16 %v939
      %v1083 = vunpack.c.h.b16 %v939
      %v1084 = vunpack.c.l.b16 %v940
      %v1085 = vunpack.c.h.b16 %v940
      %v1086 = vunpack.c.l.b16 %v941
      %v1087 = vunpack.c.h.b16 %v941
      %v1088 = vunpack.c.l.b16 %v942
      %v1089 = vunpack.c.h.b16 %v942
      %v1090 = vunpack.c.l.b16 %v943
      %v1091 = vunpack.c.h.b16 %v943
      %v1092 = vunpack.c.l.b16 %v944
      %v1093 = vunpack.c.h.b16 %v944
      %v1094 = vunpack.c.l.b16 %v945
      %v1095 = vunpack.c.h.b16 %v945
      %v1096 = vunpack.c.l.b16 %v946
      %v1097 = vunpack.c.h.b16 %v946
      %v1098 = vunpack.c.l.b16 %v947
      %v1099 = vunpack.c.h.b16 %v947
      %v1100 = vunpack.c.l.b16 %v948
      %v1101 = vunpack.c.h.b16 %v948
      %v1102 = vunpack.c.l.b16 %v949
      %v1103 = vunpack.c.h.b16 %v949
      %v1104 = vunpack.c.l.b16 %v950
      %v1105 = vunpack.c.h.b16 %v950
      %v1106 = vunpack.c.l.b16 %v951
      %v1107 = vunpack.c.h.b16 %v951
      %v1108 = vpack.c.b16 %v1014, %v1012
      %v1109 = vpack.c.b16 %v1015, %v1013
      %v1110 = vpack.c.b16 %v1018, %v1016
      %v1111 = vpack.c.b16 %v1019, %v1017
      %v1112 = vpack.c.b16 %v1022, %v1020
      %v1113 = vpack.c.b16 %v1023, %v1021
      %v1114 = vpack.c.b16 %v1026, %v1024
      %v1115 = vpack.c.b16 %v1027, %v1025
      %v1116 = vpack.c.b16 %v1030, %v1028
      %v1117 = vpack.c.b16 %v1031, %v1029
      %v1118 = vpack.c.b16 %v1034, %v1032
      %v1119 = vpack.c.b16 %v1035, %v1033
      %v1120 = vpack.c.b16 %v1038, %v1036
      %v1121 = vpack.c.b16 %v1039, %v1037
      %v1122 = vpack.c.b16 %v1042, %v1040
      %v1123 = vpack.c.b16 %v1043, %v1041
      %v1124 = vpack.c.b16 %v1046, %v1044
      %v1125 = vpack.c.b16 %v1047, %v1045
      %v1126 = vpack.c.b16 %v1050, %v1048
      %v1127 = vpack.c.b16 %v1051, %v1049
      %v1128 = vpack.c.b16 %v1054, %v1052
      %v1129 = vpack.c.b16 %v1055, %v1053
      %v1130 = vpack.c.b16 %v1058, %v1056
      %v1131 = vpack.c.b16 %v1059, %v1057
      %v1132 = vpack.c.b16 %v1062, %v1060
      %v1133 = vpack.c.b16 %v1063, %v1061
      %v1134 = vpack.c.b16 %v1066, %v1064
      %v1135 = vpack.c.b16 %v1067, %v1065
      %v1136 = vpack.c.b16 %v1070, %v1068
      %v1137 = vpack.c.b16 %v1071, %v1069
      %v1138 = vpack.c.b16 %v1074, %v1072
      %v1139 = vpack.c.b16 %v1075, %v1073
      %v1140 = vpack.c.b16 %v1078, %v1076
      %v1141 = vpack.c.b16 %v1079, %v1077
      %v1142 = vpack.c.b16 %v1082, %v1080
      %v1143 = vpack.c.b16 %v1083, %v1081
      %v1144 = vpack.c.b16 %v1086, %v1084
      %v1145 = vpack.c.b16 %v1087, %v1085
      %v1146 = vpack.c.b16 %v1090, %v1088
      %v1147 = vpack.c.b16 %v1091, %v1089
      %v1148 = vpack.c.b16 %v1094, %v1092
      %v1149 = vpack.c.b16 %v1095, %v1093
      %v1150 = vpack.c.b16 %v1098, %v1096
      %v1151 = vpack.c.b16 %v1099, %v1097
      %v1152 = vpack.c.b16 %v1102, %v1100
      %v1153 = vpack.c.b16 %v1103, %v1101
      %v1154 = vpack.c.b16 %v1106, %v1104
      %v1155 = vpack.c.b16 %v1107, %v1105
      %1204 = vmatprep.subr.bf16.mxu0 %v1109
      %1205 = vmatpush1.bf16.msra.mxu0 %v1108
      %1206 = vmatprep.subr.bf16.mxu0 %v1111
      %1207 = vmatpush1.bf16.msra.mxu0 %v1110
      %1208 = vmatprep.subr.bf16.mxu0 %v1113
      %1209 = vmatpush1.bf16.msra.mxu0 %v1112
      %1210 = vmatprep.subr.bf16.mxu0 %v1115
      %1211 = vmatpush1.bf16.msra.mxu0 %v1114
      %1212 = vmatprep.subr.bf16.mxu0 %v1117
      %1213 = vmatpush1.bf16.msra.mxu0 %v1116
      %1214 = vmatprep.subr.bf16.mxu0 %v1119
      %1215 = vmatpush1.bf16.msra.mxu0 %v1118
      %1216 = vmatprep.subr.bf16.mxu0 %v1121
      %1217 = vmatpush1.bf16.msra.mxu0 %v1120
      %1218 = vmatprep.subr.bf16.mxu0 %v1123
      %1219 = vmatpush1.bf16.msra.mxu0 %v1122
      %1220 = vmatprep.subr.bf16.mxu0 %v1125
      %1221 = vmatpush1.bf16.msra.mxu0 %v1124
      %1222 = vmatprep.subr.bf16.mxu0 %v1127
      %1223 = vmatpush1.bf16.msra.mxu0 %v1126
      %1224 = vmatprep.subr.bf16.mxu0 %v1129
      %1225 = vmatpush1.bf16.msra.mxu0 %v1128
      %1226 = vmatprep.subr.bf16.mxu0 %v1131
      %1227 = vmatpush1.bf16.msra.mxu0 %v1130
      %1228 = vmatprep.subr.bf16.mxu0 %v1133
      %1229 = vmatpush1.bf16.msra.mxu0 %v1132
      %1230 = vmatprep.subr.bf16.mxu0 %v1135
      %1231 = vmatpush1.bf16.msra.mxu0 %v1134
      %1232 = vmatprep.subr.bf16.mxu0 %v1137
      %1233 = vmatpush1.bf16.msra.mxu0 %v1136
      %1234 = vmatprep.subr.bf16.mxu0 %v1139
      %1235 = vmatpush1.bf16.msra.mxu0 %v1138
      %1236 = vmatprep.mubr.bf16.mxu0 %v902
      %1237 = vmatmul.mubr.bf16.gmra.mrb[0].mxu0 %v901
      %v1238 = vpop.f32.mrb[0].mxu0
      %v1239 = vadd.f32 %v957, %v1238
      %v1240 = vpop.f32.mrb[0].mxu0
      %v1241 = vadd.f32 %v961, %v1240
      %v1242 = vpop.f32.mrb[0].mxu0
      %v1243 = vadd.f32 %v957, %v1242
      %v1244 = vpop.f32.mrb[0].mxu0
      %v1245 = vadd.f32 %v961, %v1244
      %1246 = vdwg.mxu0
      %1247 = vmatprep.subr.bf16.mxu0 %v1141
      %1248 = vmatpush1.bf16.msra.mxu0 %v1140
      %1249 = vmatprep.subr.bf16.mxu0 %v1143
      %1250 = vmatpush1.bf16.msra.mxu0 %v1142
      %1251 = vmatprep.subr.bf16.mxu0 %v1145
      %1252 = vmatpush1.bf16.msra.mxu0 %v1144
      %1253 = vmatprep.subr.bf16.mxu0 %v1147
      %1254 = vmatpush1.bf16.msra.mxu0 %v1146
      %1255 = vmatprep.subr.bf16.mxu0 %v1149
      %1256 = vmatpush1.bf16.msra.mxu0 %v1148
      %1257 = vmatprep.subr.bf16.mxu0 %v1151
      %1258 = vmatpush1.bf16.msra.mxu0 %v1150
      %1259 = vmatprep.subr.bf16.mxu0 %v1153
      %1260 = vmatpush1.bf16.msra.mxu0 %v1152
      %1261 = vmatprep.subr.bf16.mxu0 %v1155
      %1262 = vmatpush1.bf16.msra.mxu0 %v1154
      %1263 = vmatprep.subr.bf16.mxu0 0
      %1264 = vmatpush1.bf16.msra.mxu0 0
      %1265 = vmatprep.subr.bf16.mxu0 0
      %1266 = vmatpush1.bf16.msra.mxu0 0
      %1267 = vmatprep.subr.bf16.mxu0 0
      %1268 = vmatpush1.bf16.msra.mxu0 0
      %1269 = vmatprep.subr.bf16.mxu0 0
      %1270 = vmatpush1.bf16.msra.mxu0 0
      %1271 = vmatprep.subr.bf16.mxu0 0
      %1272 = vmatpush1.bf16.msra.mxu0 0
      %1273 = vmatprep.subr.bf16.mxu0 0
      %1274 = vmatpush1.bf16.msra.mxu0 0
      %1275 = vmatprep.subr.bf16.mxu0 0
      %1276 = vmatpush1.bf16.msra.mxu0 0
      %1277 = vmatprep.subr.bf16.mxu0 0
      %1278 = vmatpush1.bf16.msra.mxu0 0
      %1279 = vmatprep.mubr.bf16.mxu0 0
      %1280 = vmatmul.mubr.bf16.gmra.mrb[0].mxu0 %v903
      %v1281 = vpop.f32.mrb[0].mxu0
      %v1282 = vadd.f32 %v1239, %v1281
      %v1283 = vpop.f32.mrb[0].mxu0
      %v1284 = vadd.f32 %v1241, %v1283
      %v1285 = vpop.f32.mrb[0].mxu0
      %v1286 = vadd.f32 %v1243, %v1285
      %v1287 = vpop.f32.mrb[0].mxu0
      %v1288 = vadd.f32 %v1245, %v1287
      %1289 = vdwg.mxu0
      %vm1290 = vcmp.gt.f32.partialorder %v1282, 0.0
      %vm1291 = vcmp.gt.f32.partialorder %v1284, 0.0
      %vm1292 = vcmp.gt.f32.partialorder %v1286, 0.0
      %vm1293 = vcmp.gt.f32.partialorder %v1288, 0.0
      %v1294 = vmul.f32 %v1282, 0.2
      %v1295 = vmul.f32 %v1284, 0.2
      %v1296 = vmul.f32 %v1286, 0.2
      %v1297 = vmul.f32 %v1288, 0.2
      %v1298 = vsel %vm1290, %v1282, %v1294
      %v1299 = vsel %vm1291, %v1284, %v1295
      %v1300 = vsel %vm1292, %v1286, %v1296
      %v1301 = vsel %vm1293, %v1288, %v1297
      %v1302 = vld [vmem:[%s604] sm:$0xff]
      %v1303 = vld [vmem:[%s604 + $0x8] sm:$0xff]
      %v1304 = vunpack.c.l.bf16 %v1302
      %v1305 = vunpack.c.h.bf16 %v1302
      %v1306 = vunpack.c.l.bf16 %v1303
      %v1307 = vunpack.c.h.bf16 %v1303
      %v1308 = vadd.f32 %v1298, %v1304
      %v1309 = vadd.f32 %v1299, %v1305
      %v1310 = vadd.f32 %v1300, %v1306
      %v1311 = vadd.f32 %v1301, %v1307
      %vm1312 = vcmask 523264
      %v1313 = vsel %vm1312, %v1309, -inf
      %v1314 = vmax.f32 %v1308, %v1313
      %1315 = vmax.xlane.f32.xlu0 %v1314
      %v1316 = vpop.xlane.xlu0 %1315
      %v1317 = vsel %vm1312, %v1311, -inf
      %v1318 = vmax.f32 %v1310, %v1317
      %1319 = vmax.xlane.f32.xlu0 %v1318
      %v1320 = vpop.xlane.xlu0 %1319
      %v1321 = vsub.f32 %v1308, %v1316
      %v1322 = vsub.f32 %v1309, %v1316
      %v1323 = vsub.f32 %v1310, %v1320
      %v1324 = vsub.f32 %v1311, %v1320
      %v1325 = vmul.f32 %v1321, 1.442695
      %v1326 = vpow.pop %v1325
      %v1327 = vmul.f32 %v1322, 1.442695
      %v1328 = vpow.pop %v1327
      %v1329 = vmul.f32 %v1323, 1.442695
      %v1330 = vpow.pop %v1329
      %v1331 = vmul.f32 %v1324, 1.442695
      %v1332 = vpow.pop %v1331
      %v1333 = vpack.c.bf16 %v1330, %v1326
      %v1334 = vpack.c.bf16 %v1332, %v1328
      %v1335 = vld [vmem:[%s11] sm:$0xf]
      %v1336 = vld [vmem:[%s11 + $0x4] sm:$0xf]
      %v1337 = vld [vmem:[%s11 + $0x8] sm:$0xf]
      %v1338 = vld [vmem:[%s11 + $0xc] sm:$0xf]
      %v1339 = vld [vmem:[%s11 + $0x10] sm:$0xf]
      %v1340 = vld [vmem:[%s11 + $0x14] sm:$0xf]
      %v1341 = vld [vmem:[%s11 + $0x18] sm:$0xf]
      %v1342 = vld [vmem:[%s11 + $0x1c] sm:$0xf]
      %v1343 = vld [vmem:[%s11 + $0x20] sm:$0xf]
      %v1344 = vld [vmem:[%s11 + $0x24] sm:$0xf]
      %v1345 = vld [vmem:[%s11 + $0x28] sm:$0xf]
      %v1346 = vld [vmem:[%s11 + $0x2c] sm:$0xf]
      %v1347 = vld [vmem:[%s11 + $0x30] sm:$0xf]
      %v1348 = vld [vmem:[%s11 + $0x34] sm:$0xf]
      %v1349 = vld [vmem:[%s11 + $0x38] sm:$0xf]
      %v1350 = vld [vmem:[%s11 + $0x3c] sm:$0xf]
      %v1351 = vld [vmem:[%s11 + $0x40] sm:$0xf]
      %v1352 = vld [vmem:[%s11 + $0x44] sm:$0xf]
      %v1353 = vld [vmem:[%s11 + $0x48] sm:$0xf]
      %v1354 = vld [vmem:[%s11 + $0x4c] sm:$0xf]
      %v1355 = vld [vmem:[%s11 + $0x50] sm:$0xf]
      %v1356 = vld [vmem:[%s11 + $0x54] sm:$0xf]
      %v1357 = vld [vmem:[%s11 + $0x58] sm:$0xf]
      %v1358 = vld [vmem:[%s11 + $0x5c] sm:$0xf]
      %v1383 = vunpack.c.l.b16 %v1335
      %v1384 = vunpack.c.l.b16 %v1336
      %v1385 = vunpack.c.l.b16 %v1337
      %v1386 = vunpack.c.l.b16 %v1338
      %v1387 = vunpack.c.l.b16 %v1339
      %v1388 = vunpack.c.l.b16 %v1340
      %v1389 = vunpack.c.l.b16 %v1341
      %v1390 = vunpack.c.l.b16 %v1342
      %v1391 = vunpack.c.l.b16 %v1343
      %v1392 = vunpack.c.l.b16 %v1344
      %v1393 = vunpack.c.l.b16 %v1345
      %v1394 = vunpack.c.l.b16 %v1346
      %v1395 = vunpack.c.l.b16 %v1347
      %v1396 = vunpack.c.l.b16 %v1348
      %v1397 = vunpack.c.l.b16 %v1349
      %v1398 = vunpack.c.l.b16 %v1350
      %v1399 = vunpack.c.l.b16 %v1351
      %v1400 = vunpack.c.l.b16 %v1352
      %v1401 = vunpack.c.l.b16 %v1353
      %v1402 = vunpack.c.l.b16 %v1354
      %v1403 = vunpack.c.l.b16 %v1355
      %v1404 = vunpack.c.l.b16 %v1356
      %v1405 = vunpack.c.l.b16 %v1357
      %v1406 = vunpack.c.l.b16 %v1358
      %v1407 = vpack.c.b16 %v1384, %v1383
      %v1408 = vpack.c.b16 %v1386, %v1385
      %v1409 = vpack.c.b16 %v1388, %v1387
      %v1410 = vpack.c.b16 %v1390, %v1389
      %v1411 = vpack.c.b16 %v1392, %v1391
      %v1412 = vpack.c.b16 %v1394, %v1393
      %v1413 = vpack.c.b16 %v1396, %v1395
      %v1414 = vpack.c.b16 %v1398, %v1397
      %v1415 = vpack.c.b16 %v1400, %v1399
      %v1416 = vpack.c.b16 %v1402, %v1401
      %v1417 = vpack.c.b16 %v1404, %v1403
      %v1418 = vpack.c.b16 %v1406, %v1405
      %v1432 = vsel %vm1312, %v1334, 0
      %1434 = vmatprep.subr.bf16.mxu0 0
      %1435 = vmatpush1.bf16.msra.mxu0 %v1407
      %1436 = vmatprep.subr.bf16.mxu0 0
      %1437 = vmatpush1.bf16.msra.mxu0 %v1408
      %1438 = vmatprep.subr.bf16.mxu0 0
      %1439 = vmatpush1.bf16.msra.mxu0 %v1409
      %1440 = vmatprep.subr.bf16.mxu0 0
      %1441 = vmatpush1.bf16.msra.mxu0 %v1410
      %1442 = vmatprep.subr.bf16.mxu0 0
      %1443 = vmatpush1.bf16.msra.mxu0 %v1411
      %1444 = vmatprep.subr.bf16.mxu0 0
      %1445 = vmatpush1.bf16.msra.mxu0 %v1412
      %1446 = vmatprep.subr.bf16.mxu0 0
      %1447 = vmatpush1.bf16.msra.mxu0 %v1413
      %1448 = vmatprep.subr.bf16.mxu0 0
      %1449 = vmatpush1.bf16.msra.mxu0 %v1414
      %1450 = vmatprep.subr.bf16.mxu0 0
      %1451 = vmatpush1.bf16.msra.mxu0 %v1415
      %1452 = vmatprep.subr.bf16.mxu0 0
      %1453 = vmatpush1.bf16.msra.mxu0 %v1416
      %1454 = vmatprep.subr.bf16.mxu0 0
      %1455 = vmatpush1.bf16.msra.mxu0 %v1417
      %1456 = vmatprep.subr.bf16.mxu0 0
      %1457 = vmatpush1.bf16.msra.mxu0 %v1418
      %1458 = vmatprep.subr.bf16.mxu0 0
      %1459 = vmatpush1.bf16.msra.mxu0 0
      %1460 = vmatprep.subr.bf16.mxu0 0
      %1461 = vmatpush1.bf16.msra.mxu0 0
      %1462 = vmatprep.subr.bf16.mxu0 0
      %1463 = vmatpush1.bf16.msra.mxu0 0
      %1464 = vmatprep.subr.bf16.mxu0 0
      %1465 = vmatpush1.bf16.msra.mxu0 0
      %1466 = vmatprep.mubr.bf16.mxu0 %v1432
      %1467 = vmatmul.mubr.bf16.gmra.mrb[0].mxu0 %v1333
      %v1468 = vpop.f32.mrb[0].mxu0
      %v1469 = vadd.f32 0.0, %v1468
      %v1470 = vpop.f32.mrb[0].mxu0
      %v1471 = vpop.f32.mrb[0].mxu0
      %v1472 = vadd.f32 0.0, %v1471
      %v1473 = vpop.f32.mrb[0].mxu0
      %1474 = vdwg.mxu0
      %v1475 = vmax.f32 %v1469, 1e-30
      %v1476 = vmax.f32 %v1472, 1e-30
      %v1477 = vrcp.pop %v1475
      %v1478 = vrcp.pop %v1476
      %v1479 = vpack.c.bf16 %v1478, %v1477
      %v1480 = vld [vmem:[%s12] sm:$0xff]
      %v1481 = vld [vmem:[%s12 + $0x8] sm:$0xf]
      %v1482 = vld [vmem:[%s12 + $0xc] sm:$0x33]
      %v1483 = vld [vmem:[%s12 + $0x14] sm:$0x3]
      %v1488 = vunpack.c.l.b16 %v1480
      %v1489 = vunpack.c.h.b16 %v1480
      %v1490 = vunpack.c.l.b16 %v1481
      %v1491 = vunpack.c.l.b16 %v1482
      %v1492 = vunpack.c.h.b16 %v1482
      %v1493 = vunpack.c.l.b16 %v1483
      %v1494 = vpack.c.b16 %v1491, %v1488
      %v1495 = vpack.c.b16 %v1492, %v1489
      %v1496 = vpack.c.b16 %v1493, %v1490
      %vm1497 = vcmask 97280
      %v1499 = vsel %vm1497, %v1479, 0
      %vm1501 = vcmask 1045504
      %v1503 = vsel %vm1501, %v1494, 0
      %v1506 = vsel %vm1501, %v1495, 0
      %v1509 = vsel %vm1501, %v1496, 0
      %1511 = vmatprep.subr.bf16.mxu0 %v1506
      %1512 = vmatpush1.bf16.msra.mxu0 %v1503
      %1513 = vmatprep.subr.bf16.mxu0 0
      %1514 = vmatpush1.bf16.msra.mxu0 0
      %1515 = vmatprep.subr.bf16.mxu0 0
      %1516 = vmatpush1.bf16.msra.mxu0 0
      %1517 = vmatprep.subr.bf16.mxu0 0
      %1518 = vmatpush1.bf16.msra.mxu0 0
      %1519 = vmatprep.subr.bf16.mxu0 0
      %1520 = vmatpush1.bf16.msra.mxu0 0
      %1521 = vmatprep.subr.bf16.mxu0 0
      %1522 = vmatpush1.bf16.msra.mxu0 0
      %1523 = vmatprep.subr.bf16.mxu0 0
      %1524 = vmatpush1.bf16.msra.mxu0 0
      %1525 = vmatprep.subr.bf16.mxu0 0
      %1526 = vmatpush1.bf16.msra.mxu0 0
      %1527 = vmatprep.subr.bf16.mxu0 0
      %1528 = vmatpush1.bf16.msra.mxu0 0
      %1529 = vmatprep.subr.bf16.mxu0 0
      %1530 = vmatpush1.bf16.msra.mxu0 0
      %1531 = vmatprep.subr.bf16.mxu0 0
      %1532 = vmatpush1.bf16.msra.mxu0 0
      %1533 = vmatprep.subr.bf16.mxu0 0
      %1534 = vmatpush1.bf16.msra.mxu0 0
      %1535 = vmatprep.subr.bf16.mxu0 0
      %1536 = vmatpush1.bf16.msra.mxu0 0
      %1537 = vmatprep.subr.bf16.mxu0 0
      %1538 = vmatpush1.bf16.msra.mxu0 0
      %1539 = vmatprep.subr.bf16.mxu0 0
      %1540 = vmatpush1.bf16.msra.mxu0 0
      %1541 = vmatprep.subr.bf16.mxu0 0
      %1542 = vmatpush1.bf16.msra.mxu0 0
      %1543 = vmatprep.mubr.bf16.mxu0 0
      %1544 = vmatmul.mubr.bf16.gmra.mrb[0].mxu0 %v1499
      %v1545 = vpop.f32.mrb[0].mxu0
      %v1546 = vadd.f32 0.0, %v1545
      %v1547 = vpop.f32.mrb[0].mxu0
      %v1548 = vadd.f32 0.0, %v1547
      %v1549 = vpop.f32.mrb[0].mxu0
      %v1550 = vadd.f32 0.0, %v1549
      %v1551 = vpop.f32.mrb[0].mxu0
      %v1552 = vadd.f32 0.0, %v1551
      %1553 = vdwg.mxu0
      %1554 = vmatprep.subr.bf16.mxu0 0
      %1555 = vmatpush1.bf16.msra.mxu0 %v1509
      %1556 = vmatprep.subr.bf16.mxu0 0
      %1557 = vmatpush1.bf16.msra.mxu0 0
      %1558 = vmatprep.subr.bf16.mxu0 0
      %1559 = vmatpush1.bf16.msra.mxu0 0
      %1560 = vmatprep.subr.bf16.mxu0 0
      %1561 = vmatpush1.bf16.msra.mxu0 0
      %1562 = vmatprep.subr.bf16.mxu0 0
      %1563 = vmatpush1.bf16.msra.mxu0 0
      %1564 = vmatprep.subr.bf16.mxu0 0
      %1565 = vmatpush1.bf16.msra.mxu0 0
      %1566 = vmatprep.subr.bf16.mxu0 0
      %1567 = vmatpush1.bf16.msra.mxu0 0
      %1568 = vmatprep.subr.bf16.mxu0 0
      %1569 = vmatpush1.bf16.msra.mxu0 0
      %1570 = vmatprep.subr.bf16.mxu0 0
      %1571 = vmatpush1.bf16.msra.mxu0 0
      %1572 = vmatprep.subr.bf16.mxu0 0
      %1573 = vmatpush1.bf16.msra.mxu0 0
      %1574 = vmatprep.subr.bf16.mxu0 0
      %1575 = vmatpush1.bf16.msra.mxu0 0
      %1576 = vmatprep.subr.bf16.mxu0 0
      %1577 = vmatpush1.bf16.msra.mxu0 0
      %1578 = vmatprep.subr.bf16.mxu0 0
      %1579 = vmatpush1.bf16.msra.mxu0 0
      %1580 = vmatprep.subr.bf16.mxu0 0
      %1581 = vmatpush1.bf16.msra.mxu0 0
      %1582 = vmatprep.subr.bf16.mxu0 0
      %1583 = vmatpush1.bf16.msra.mxu0 0
      %1584 = vmatprep.subr.bf16.mxu0 0
      %1585 = vmatpush1.bf16.msra.mxu0 0
      %1586 = vmatprep.mubr.bf16.mxu0 0
      %1587 = vmatmul.mubr.bf16.gmra.mrb[0].mxu0 %v1499
      %v1588 = vpop.f32.mrb[0].mxu0
      %v1589 = vadd.f32 0.0, %v1588
      %v1590 = vpop.f32.mrb[0].mxu0
      %v1591 = vpop.f32.mrb[0].mxu0
      %v1592 = vadd.f32 0.0, %v1591
      %v1593 = vpop.f32.mrb[0].mxu0
      %1594 = vdwg.mxu0
      %v1595 = vld [vmem:[%s13] sm:$0xff]
      %v1596 = vld [vmem:[%s13 + $0x8] sm:$0xf]
      %v1597 = vld [vmem:[%s13 + $0xc] sm:$0xff]
      %v1598 = vld [vmem:[%s13 + $0x14] sm:$0xf]
      %v1599 = vld [vmem:[%s13 + $0x18] sm:$0xff]
      %v1600 = vld [vmem:[%s13 + $0x20] sm:$0xf]
      %v1601 = vld [vmem:[%s13 + $0x24] sm:$0xff]
      %v1602 = vld [vmem:[%s13 + $0x2c] sm:$0xf]
      %v1603 = vld [vmem:[%s13 + $0x30] sm:$0xff]
      %v1604 = vld [vmem:[%s13 + $0x38] sm:$0xf]
      %v1605 = vld [vmem:[%s13 + $0x3c] sm:$0xff]
      %v1606 = vld [vmem:[%s13 + $0x44] sm:$0xf]
      %v1607 = vld [vmem:[%s13 + $0x48] sm:$0xff]
      %v1608 = vld [vmem:[%s13 + $0x50] sm:$0xf]
      %v1609 = vld [vmem:[%s13 + $0x54] sm:$0xff]
      %v1610 = vld [vmem:[%s13 + $0x5c] sm:$0xf]
      %v1611 = vld [vmem:[%s13 + $0x60] sm:$0xff]
      %v1612 = vld [vmem:[%s13 + $0x68] sm:$0xf]
      %v1613 = vld [vmem:[%s13 + $0x6c] sm:$0xff]
      %v1614 = vld [vmem:[%s13 + $0x74] sm:$0xf]
      %v1615 = vld [vmem:[%s13 + $0x78] sm:$0xff]
      %v1616 = vld [vmem:[%s13 + $0x80] sm:$0xf]
      %v1617 = vld [vmem:[%s13 + $0x84] sm:$0xff]
      %v1618 = vld [vmem:[%s13 + $0x8c] sm:$0xf]
      %v1619 = vld [vmem:[%s13 + $0x90] sm:$0xff]
      %v1620 = vld [vmem:[%s13 + $0x98] sm:$0xf]
      %v1621 = vld [vmem:[%s13 + $0x9c] sm:$0xff]
      %v1622 = vld [vmem:[%s13 + $0xa4] sm:$0xf]
      %v1623 = vld [vmem:[%s13 + $0xa8] sm:$0xff]
      %v1624 = vld [vmem:[%s13 + $0xb0] sm:$0xf]
      %v1625 = vld [vmem:[%s13 + $0xb4] sm:$0xff]
      %v1626 = vld [vmem:[%s13 + $0xbc] sm:$0xf]
      %v1627 = vld [vmem:[%s13 + $0xc0] sm:$0xff]
      %v1628 = vld [vmem:[%s13 + $0xc8] sm:$0xf]
      %v1629 = vld [vmem:[%s13 + $0xcc] sm:$0xff]
      %v1630 = vld [vmem:[%s13 + $0xd4] sm:$0xf]
      %v1631 = vld [vmem:[%s13 + $0xd8] sm:$0xff]
      %v1632 = vld [vmem:[%s13 + $0xe0] sm:$0xf]
      %v1633 = vld [vmem:[%s13 + $0xe4] sm:$0xff]
      %v1634 = vld [vmem:[%s13 + $0xec] sm:$0xf]
      %v1635 = vld [vmem:[%s13 + $0xf0] sm:$0xff]
      %v1636 = vld [vmem:[%s13 + $0xf8] sm:$0xf]
      %v1637 = vld [vmem:[%s13 + $0xfc] sm:$0xff]
      %v1638 = vld [vmem:[%s13 + $0x104] sm:$0xf]
      %v1639 = vld [vmem:[%s13 + $0x108] sm:$0xff]
      %v1640 = vld [vmem:[%s13 + $0x110] sm:$0xf]
      %v1641 = vld [vmem:[%s13 + $0x114] sm:$0xff]
      %v1642 = vld [vmem:[%s13 + $0x11c] sm:$0xf]
      %v1691 = vunpack.c.l.b16 %v1595
      %v1692 = vunpack.c.h.b16 %v1595
      %v1693 = vunpack.c.l.b16 %v1596
      %v1694 = vunpack.c.l.b16 %v1597
      %v1695 = vunpack.c.h.b16 %v1597
      %v1696 = vunpack.c.l.b16 %v1598
      %v1697 = vunpack.c.l.b16 %v1599
      %v1698 = vunpack.c.h.b16 %v1599
      %v1699 = vunpack.c.l.b16 %v1600
      %v1700 = vunpack.c.l.b16 %v1601
      %v1701 = vunpack.c.h.b16 %v1601
      %v1702 = vunpack.c.l.b16 %v1602
      %v1703 = vunpack.c.l.b16 %v1603
      %v1704 = vunpack.c.h.b16 %v1603
      %v1705 = vunpack.c.l.b16 %v1604
      %v1706 = vunpack.c.l.b16 %v1605
      %v1707 = vunpack.c.h.b16 %v1605
      %v1708 = vunpack.c.l.b16 %v1606
      %v1709 = vunpack.c.l.b16 %v1607
      %v1710 = vunpack.c.h.b16 %v1607
      %v1711 = vunpack.c.l.b16 %v1608
      %v1712 = vunpack.c.l.b16 %v1609
      %v1713 = vunpack.c.h.b16 %v1609
      %v1714 = vunpack.c.l.b16 %v1610
      %v1715 = vunpack.c.l.b16 %v1611
      %v1716 = vunpack.c.h.b16 %v1611
      %v1717 = vunpack.c.l.b16 %v1612
      %v1718 = vunpack.c.l.b16 %v1613
      %v1719 = vunpack.c.h.b16 %v1613
      %v1720 = vunpack.c.l.b16 %v1614
      %v1721 = vunpack.c.l.b16 %v1615
      %v1722 = vunpack.c.h.b16 %v1615
      %v1723 = vunpack.c.l.b16 %v1616
      %v1724 = vunpack.c.l.b16 %v1617
      %v1725 = vunpack.c.h.b16 %v1617
      %v1726 = vunpack.c.l.b16 %v1618
      %v1727 = vunpack.c.l.b16 %v1619
      %v1728 = vunpack.c.h.b16 %v1619
      %v1729 = vunpack.c.l.b16 %v1620
      %v1730 = vunpack.c.l.b16 %v1621
      %v1731 = vunpack.c.h.b16 %v1621
      %v1732 = vunpack.c.l.b16 %v1622
      %v1733 = vunpack.c.l.b16 %v1623
      %v1734 = vunpack.c.h.b16 %v1623
      %v1735 = vunpack.c.l.b16 %v1624
      %v1736 = vunpack.c.l.b16 %v1625
      %v1737 = vunpack.c.h.b16 %v1625
      %v1738 = vunpack.c.l.b16 %v1626
      %v1739 = vunpack.c.l.b16 %v1627
      %v1740 = vunpack.c.h.b16 %v1627
      %v1741 = vunpack.c.l.b16 %v1628
      %v1742 = vunpack.c.l.b16 %v1629
      %v1743 = vunpack.c.h.b16 %v1629
      %v1744 = vunpack.c.l.b16 %v1630
      %v1745 = vunpack.c.l.b16 %v1631
      %v1746 = vunpack.c.h.b16 %v1631
      %v1747 = vunpack.c.l.b16 %v1632
      %v1748 = vunpack.c.l.b16 %v1633
      %v1749 = vunpack.c.h.b16 %v1633
      %v1750 = vunpack.c.l.b16 %v1634
      %v1751 = vunpack.c.l.b16 %v1635
      %v1752 = vunpack.c.h.b16 %v1635
      %v1753 = vunpack.c.l.b16 %v1636
      %v1754 = vunpack.c.l.b16 %v1637
      %v1755 = vunpack.c.h.b16 %v1637
      %v1756 = vunpack.c.l.b16 %v1638
      %v1757 = vunpack.c.l.b16 %v1639
      %v1758 = vunpack.c.h.b16 %v1639
      %v1759 = vunpack.c.l.b16 %v1640
      %v1760 = vunpack.c.l.b16 %v1641
      %v1761 = vunpack.c.h.b16 %v1641
      %v1762 = vunpack.c.l.b16 %v1642
      %v1763 = vpack.c.b16 %v1694, %v1691
      %v1764 = vpack.c.b16 %v1695, %v1692
      %v1765 = vpack.c.b16 %v1696, %v1693
      %v1766 = vpack.c.b16 %v1700, %v1697
      %v1767 = vpack.c.b16 %v1701, %v1698
      %v1768 = vpack.c.b16 %v1702, %v1699
      %v1769 = vpack.c.b16 %v1706, %v1703
      %v1770 = vpack.c.b16 %v1707, %v1704
      %v1771 = vpack.c.b16 %v1708, %v1705
      %v1772 = vpack.c.b16 %v1712, %v1709
      %v1773 = vpack.c.b16 %v1713, %v1710
      %v1774 = vpack.c.b16 %v1714, %v1711
      %v1775 = vpack.c.b16 %v1718, %v1715
      %v1776 = vpack.c.b16 %v1719, %v1716
      %v1777 = vpack.c.b16 %v1720, %v1717
      %v1778 = vpack.c.b16 %v1724, %v1721
      %v1779 = vpack.c.b16 %v1725, %v1722
      %v1780 = vpack.c.b16 %v1726, %v1723
      %v1781 = vpack.c.b16 %v1730, %v1727
      %v1782 = vpack.c.b16 %v1731, %v1728
      %v1783 = vpack.c.b16 %v1732, %v1729
      %v1784 = vpack.c.b16 %v1736, %v1733
      %v1785 = vpack.c.b16 %v1737, %v1734
      %v1786 = vpack.c.b16 %v1738, %v1735
      %v1787 = vpack.c.b16 %v1742, %v1739
      %v1788 = vpack.c.b16 %v1743, %v1740
      %v1789 = vpack.c.b16 %v1744, %v1741
      %v1790 = vpack.c.b16 %v1748, %v1745
      %v1791 = vpack.c.b16 %v1749, %v1746
      %v1792 = vpack.c.b16 %v1750, %v1747
      %v1793 = vpack.c.b16 %v1754, %v1751
      %v1794 = vpack.c.b16 %v1755, %v1752
      %v1795 = vpack.c.b16 %v1756, %v1753
      %v1796 = vpack.c.b16 %v1760, %v1757
      %v1797 = vpack.c.b16 %v1761, %v1758
      %v1798 = vpack.c.b16 %v1762, %v1759
      %v1835 = vmul.bf16 %v901, %v1763
      %v1836 = vmul.bf16 %v902, %v1764
      %v1837 = vmul.bf16 %v903, %v1765
      %v1838 = vmul.bf16 %v901, %v1766
      %v1839 = vmul.bf16 %v902, %v1767
      %v1840 = vmul.bf16 %v903, %v1768
      %v1841 = vmul.bf16 %v901, %v1769
      %v1842 = vmul.bf16 %v902, %v1770
      %v1843 = vmul.bf16 %v903, %v1771
      %v1844 = vmul.bf16 %v901, %v1772
      %v1845 = vmul.bf16 %v902, %v1773
      %v1846 = vmul.bf16 %v903, %v1774
      %v1847 = vmul.bf16 %v901, %v1775
      %v1848 = vmul.bf16 %v902, %v1776
      %v1849 = vmul.bf16 %v903, %v1777
      %v1850 = vmul.bf16 %v901, %v1778
      %v1851 = vmul.bf16 %v902, %v1779
      %v1852 = vmul.bf16 %v903, %v1780
      %v1853 = vmul.bf16 %v901, %v1781
      %v1854 = vmul.bf16 %v902, %v1782
      %v1855 = vmul.bf16 %v903, %v1783
      %v1856 = vmul.bf16 %v901, %v1784
      %v1857 = vmul.bf16 %v902, %v1785
      %v1858 = vmul.bf16 %v903, %v1786
      %v1859 = vmul.bf16 %v901, %v1787
      %v1860 = vmul.bf16 %v902, %v1788
      %v1861 = vmul.bf16 %v903, %v1789
      %v1862 = vmul.bf16 %v901, %v1790
      %v1863 = vmul.bf16 %v902, %v1791
      %v1864 = vmul.bf16 %v903, %v1792
      %v1865 = vmul.bf16 %v901, %v1793
      %v1866 = vmul.bf16 %v902, %v1794
      %v1867 = vmul.bf16 %v903, %v1795
      %v1868 = vmul.bf16 %v901, %v1796
      %v1869 = vmul.bf16 %v902, %v1797
      %v1870 = vmul.bf16 %v903, %v1798
      %1871 = vmatprep.subr.bf16.mxu0 %v1836
      %1872 = vmatpush1.bf16.msra.mxu0 %v1835
      %1873 = vmatprep.subr.bf16.mxu0 %v1839
      %1874 = vmatpush1.bf16.msra.mxu0 %v1838
      %1875 = vmatprep.subr.bf16.mxu0 %v1842
      %1876 = vmatpush1.bf16.msra.mxu0 %v1841
      %1877 = vmatprep.subr.bf16.mxu0 %v1845
      %1878 = vmatpush1.bf16.msra.mxu0 %v1844
      %1879 = vmatprep.subr.bf16.mxu0 %v1848
      %1880 = vmatpush1.bf16.msra.mxu0 %v1847
      %1881 = vmatprep.subr.bf16.mxu0 %v1851
      %1882 = vmatpush1.bf16.msra.mxu0 %v1850
      %1883 = vmatprep.subr.bf16.mxu0 %v1854
      %1884 = vmatpush1.bf16.msra.mxu0 %v1853
      %1885 = vmatprep.subr.bf16.mxu0 %v1857
      %1886 = vmatpush1.bf16.msra.mxu0 %v1856
      %1887 = vmatprep.subr.bf16.mxu0 %v1860
      %1888 = vmatpush1.bf16.msra.mxu0 %v1859
      %1889 = vmatprep.subr.bf16.mxu0 %v1863
      %1890 = vmatpush1.bf16.msra.mxu0 %v1862
      %1891 = vmatprep.subr.bf16.mxu0 %v1866
      %1892 = vmatpush1.bf16.msra.mxu0 %v1865
      %1893 = vmatprep.subr.bf16.mxu0 %v1869
      %1894 = vmatpush1.bf16.msra.mxu0 %v1868
      %1895 = vmatprep.subr.bf16.mxu0 0
      %1896 = vmatpush1.bf16.msra.mxu0 0
      %1897 = vmatprep.subr.bf16.mxu0 0
      %1898 = vmatpush1.bf16.msra.mxu0 0
      %1899 = vmatprep.subr.bf16.mxu0 0
      %1900 = vmatpush1.bf16.msra.mxu0 0
      %1901 = vmatprep.subr.bf16.mxu0 0
      %1902 = vmatpush1.bf16.msra.mxu0 0
      %1903 = vmatprep.mubr.bf16.mxu0 %v1432
      %1904 = vmatmul.mubr.bf16.gmra.mrb[0].mxu0 %v1333
      %v1905 = vpop.f32.mrb[0].mxu0
      %v1906 = vadd.f32 0.0, %v1905
      %v1907 = vpop.f32.mrb[0].mxu0
      %v1908 = vadd.f32 0.0, %v1907
      %v1909 = vpop.f32.mrb[0].mxu0
      %v1910 = vadd.f32 0.0, %v1909
      %v1911 = vpop.f32.mrb[0].mxu0
      %v1912 = vadd.f32 0.0, %v1911
      %1913 = vdwg.mxu0
      %1914 = vmatprep.subr.bf16.mxu0 0
      %1915 = vmatpush1.bf16.msra.mxu0 %v1837
      %1916 = vmatprep.subr.bf16.mxu0 0
      %1917 = vmatpush1.bf16.msra.mxu0 %v1840
      %1918 = vmatprep.subr.bf16.mxu0 0
      %1919 = vmatpush1.bf16.msra.mxu0 %v1843
      %1920 = vmatprep.subr.bf16.mxu0 0
      %1921 = vmatpush1.bf16.msra.mxu0 %v1846
      %1922 = vmatprep.subr.bf16.mxu0 0
      %1923 = vmatpush1.bf16.msra.mxu0 %v1849
      %1924 = vmatprep.subr.bf16.mxu0 0
      %1925 = vmatpush1.bf16.msra.mxu0 %v1852
      %1926 = vmatprep.subr.bf16.mxu0 0
      %1927 = vmatpush1.bf16.msra.mxu0 %v1855
      %1928 = vmatprep.subr.bf16.mxu0 0
      %1929 = vmatpush1.bf16.msra.mxu0 %v1858
      %1930 = vmatprep.subr.bf16.mxu0 0
      %1931 = vmatpush1.bf16.msra.mxu0 %v1861
      %1932 = vmatprep.subr.bf16.mxu0 0
      %1933 = vmatpush1.bf16.msra.mxu0 %v1864
      %1934 = vmatprep.subr.bf16.mxu0 0
      %1935 = vmatpush1.bf16.msra.mxu0 %v1867
      %1936 = vmatprep.subr.bf16.mxu0 0
      %1937 = vmatpush1.bf16.msra.mxu0 %v1870
      %1938 = vmatprep.subr.bf16.mxu0 0
      %1939 = vmatpush1.bf16.msra.mxu0 0
      %1940 = vmatprep.subr.bf16.mxu0 0
      %1941 = vmatpush1.bf16.msra.mxu0 0
      %1942 = vmatprep.subr.bf16.mxu0 0
      %1943 = vmatpush1.bf16.msra.mxu0 0
      %1944 = vmatprep.subr.bf16.mxu0 0
      %1945 = vmatpush1.bf16.msra.mxu0 0
      %1946 = vmatprep.mubr.bf16.mxu0 %v1432
      %1947 = vmatmul.mubr.bf16.gmra.mrb[0].mxu0 %v1333
      %v1948 = vpop.f32.mrb[0].mxu0
      %v1949 = vadd.f32 0.0, %v1948
      %v1950 = vpop.f32.mrb[0].mxu0
      %v1951 = vpop.f32.mrb[0].mxu0
      %v1952 = vadd.f32 0.0, %v1951
      %v1953 = vpop.f32.mrb[0].mxu0
      %1954 = vdwg.mxu0
      %v1955 = vmul.f32 %v1906, %v1546
      %v1956 = vmul.f32 %v1908, %v1548
      %v1957 = vmul.f32 %v1949, %v1589
      %v1958 = vmul.f32 %v1910, %v1550
      %v1959 = vmul.f32 %v1912, %v1552
      %v1960 = vmul.f32 %v1952, %v1592
      %v1961 = vld [vmem:[%s630] sm:$0x7]
      %v1963 = vlaneseq
      %v1964 = vshrl.u32 %v1963, 7
      %v1965 = vsub.s32 0, %v1964
      %v1966 = vrot.slane %v1961, %v1965
      %v1967 = vlaneseq
      %v1968 = vshrl.u32 %v1967, 7
      %v1969 = vsub.s32 1, %v1968
      %v1970 = vrot.slane %v1961, %v1969
      %v1971 = vlaneseq
      %v1972 = vshrl.u32 %v1971, 7
      %v1973 = vsub.s32 2, %v1972
      %v1974 = vrot.slane %v1961, %v1973
      %v1978 = vadd.f32 %v1955, %v1966
      %v1979 = vadd.f32 %v1956, %v1970
      %v1980 = vadd.f32 %v1957, %v1974
      %v1981 = vadd.f32 %v1958, %v1966
      %v1982 = vadd.f32 %v1959, %v1970
      %v1983 = vadd.f32 %v1960, %v1974
      %v1984 = vmax.f32 %v1978, 0.0
      %v1985 = vmax.f32 %v1979, 0.0
      %v1986 = vmax.f32 %v1980, 0.0
      %v1987 = vmax.f32 %v1981, 0.0
      %v1988 = vmax.f32 %v1982, 0.0
      %v1989 = vmax.f32 %v1983, 0.0
      %v1990 = vpack.c.bf16 %v1987, %v1984
      %v1991 = vpack.c.bf16 %v1988, %v1985
      %v1992 = vpack.c.bf16 %v1989, %v1986
      %v1993 = vld [vmem:[%s635] sm:$0xf]
      %v1994 = vld [vmem:[%s635 + $0x4] sm:$0xf]
      %v1995 = vld [vmem:[%s635 + $0x8] sm:$0xf]
      %v1996 = vld [vmem:[%s635 + $0xc] sm:$0xf]
      %v1997 = vld [vmem:[%s635 + $0x10] sm:$0xf]
      %v1998 = vld [vmem:[%s635 + $0x14] sm:$0xf]
      %v1999 = vld [vmem:[%s635 + $0x18] sm:$0xf]
      %v2000 = vld [vmem:[%s635 + $0x1c] sm:$0xf]
      %v2001 = vld [vmem:[%s635 + $0x20] sm:$0xf]
      %v2002 = vld [vmem:[%s635 + $0x24] sm:$0xf]
      %v2003 = vld [vmem:[%s635 + $0x28] sm:$0xf]
      %v2004 = vld [vmem:[%s635 + $0x2c] sm:$0xf]
      %v2005 = vld [vmem:[%s635 + $0x30] sm:$0xf]
      %v2006 = vld [vmem:[%s635 + $0x34] sm:$0xf]
      %v2007 = vld [vmem:[%s635 + $0x38] sm:$0xf]
      %v2008 = vld [vmem:[%s635 + $0x3c] sm:$0xf]
      %v2009 = vld [vmem:[%s635 + $0x40] sm:$0xf]
      %v2010 = vld [vmem:[%s635 + $0x44] sm:$0xf]
      %v2011 = vld [vmem:[%s635 + $0x48] sm:$0xf]
      %v2012 = vld [vmem:[%s635 + $0x4c] sm:$0xf]
      %v2013 = vld [vmem:[%s635 + $0x50] sm:$0xf]
      %v2014 = vld [vmem:[%s635 + $0x54] sm:$0xf]
      %v2015 = vld [vmem:[%s635 + $0x58] sm:$0xf]
      %v2016 = vld [vmem:[%s635 + $0x5c] sm:$0xf]
      %v2017 = vld [vmem:[%s635 + $0x60] sm:$0xf]
      %v2018 = vld [vmem:[%s635 + $0x64] sm:$0xf]
      %v2019 = vld [vmem:[%s635 + $0x68] sm:$0xf]
      %v2020 = vld [vmem:[%s635 + $0x6c] sm:$0xf]
      %v2021 = vld [vmem:[%s635 + $0x70] sm:$0xf]
      %v2022 = vld [vmem:[%s635 + $0x74] sm:$0xf]
      %v2023 = vld [vmem:[%s635 + $0x78] sm:$0xf]
      %v2024 = vld [vmem:[%s635 + $0x7c] sm:$0xf]
      %v2025 = vld [vmem:[%s635 + $0x80] sm:$0xf]
      %v2026 = vld [vmem:[%s635 + $0x84] sm:$0xf]
      %v2027 = vld [vmem:[%s635 + $0x88] sm:$0xf]
      %v2028 = vld [vmem:[%s635 + $0x8c] sm:$0xf]
      %v2029 = vld [vmem:[%s635 + $0x90] sm:$0xf]
      %v2030 = vld [vmem:[%s635 + $0x94] sm:$0xf]
      %v2031 = vld [vmem:[%s635 + $0x98] sm:$0xf]
      %v2032 = vld [vmem:[%s635 + $0x9c] sm:$0xf]
      %v2033 = vld [vmem:[%s635 + $0xa0] sm:$0xf]
      %v2034 = vld [vmem:[%s635 + $0xa4] sm:$0xf]
      %v2035 = vld [vmem:[%s635 + $0xa8] sm:$0xf]
      %v2036 = vld [vmem:[%s635 + $0xac] sm:$0xf]
      %v2037 = vld [vmem:[%s635 + $0xb0] sm:$0xf]
      %v2038 = vld [vmem:[%s635 + $0xb4] sm:$0xf]
      %v2039 = vld [vmem:[%s635 + $0xb8] sm:$0xf]
      %v2040 = vld [vmem:[%s635 + $0xbc] sm:$0xf]
      %v2089 = vunpack.c.l.b16 %v1993
      %v2090 = vunpack.c.l.b16 %v1994
      %v2091 = vunpack.c.l.b16 %v1995
      %v2092 = vunpack.c.l.b16 %v1996
      %v2093 = vunpack.c.l.b16 %v1997
      %v2094 = vunpack.c.l.b16 %v1998
      %v2095 = vunpack.c.l.b16 %v1999
      %v2096 = vunpack.c.l.b16 %v2000
      %v2097 = vunpack.c.l.b16 %v2001
      %v2098 = vunpack.c.l.b16 %v2002
      %v2099 = vunpack.c.l.b16 %v2003
      %v2100 = vunpack.c.l.b16 %v2004
      %v2101 = vunpack.c.l.b16 %v2005
      %v2102 = vunpack.c.l.b16 %v2006
      %v2103 = vunpack.c.l.b16 %v2007
      %v2104 = vunpack.c.l.b16 %v2008
      %v2105 = vunpack.c.l.b16 %v2009
      %v2106 = vunpack.c.l.b16 %v2010
      %v2107 = vunpack.c.l.b16 %v2011
      %v2108 = vunpack.c.l.b16 %v2012
      %v2109 = vunpack.c.l.b16 %v2013
      %v2110 = vunpack.c.l.b16 %v2014
      %v2111 = vunpack.c.l.b16 %v2015
      %v2112 = vunpack.c.l.b16 %v2016
      %v2113 = vunpack.c.l.b16 %v2017
      %v2114 = vunpack.c.l.b16 %v2018
      %v2115 = vunpack.c.l.b16 %v2019
      %v2116 = vunpack.c.l.b16 %v2020
      %v2117 = vunpack.c.l.b16 %v2021
      %v2118 = vunpack.c.l.b16 %v2022
      %v2119 = vunpack.c.l.b16 %v2023
      %v2120 = vunpack.c.l.b16 %v2024
      %v2121 = vunpack.c.l.b16 %v2025
      %v2122 = vunpack.c.l.b16 %v2026
      %v2123 = vunpack.c.l.b16 %v2027
      %v2124 = vunpack.c.l.b16 %v2028
      %v2125 = vunpack.c.l.b16 %v2029
      %v2126 = vunpack.c.l.b16 %v2030
      %v2127 = vunpack.c.l.b16 %v2031
      %v2128 = vunpack.c.l.b16 %v2032
      %v2129 = vunpack.c.l.b16 %v2033
      %v2130 = vunpack.c.l.b16 %v2034
      %v2131 = vunpack.c.l.b16 %v2035
      %v2132 = vunpack.c.l.b16 %v2036
      %v2133 = vunpack.c.l.b16 %v2037
      %v2134 = vunpack.c.l.b16 %v2038
      %v2135 = vunpack.c.l.b16 %v2039
      %v2136 = vunpack.c.l.b16 %v2040
      %v2137 = vpack.c.b16 %v2090, %v2089
      %v2138 = vpack.c.b16 %v2092, %v2091
      %v2139 = vpack.c.b16 %v2094, %v2093
      %v2140 = vpack.c.b16 %v2096, %v2095
      %v2141 = vpack.c.b16 %v2098, %v2097
      %v2142 = vpack.c.b16 %v2100, %v2099
      %v2143 = vpack.c.b16 %v2102, %v2101
      %v2144 = vpack.c.b16 %v2104, %v2103
      %v2145 = vpack.c.b16 %v2106, %v2105
      %v2146 = vpack.c.b16 %v2108, %v2107
      %v2147 = vpack.c.b16 %v2110, %v2109
      %v2148 = vpack.c.b16 %v2112, %v2111
      %v2149 = vpack.c.b16 %v2114, %v2113
      %v2150 = vpack.c.b16 %v2116, %v2115
      %v2151 = vpack.c.b16 %v2118, %v2117
      %v2152 = vpack.c.b16 %v2120, %v2119
      %v2153 = vpack.c.b16 %v2122, %v2121
      %v2154 = vpack.c.b16 %v2124, %v2123
      %v2155 = vpack.c.b16 %v2126, %v2125
      %v2156 = vpack.c.b16 %v2128, %v2127
      %v2157 = vpack.c.b16 %v2130, %v2129
      %v2158 = vpack.c.b16 %v2132, %v2131
      %v2159 = vpack.c.b16 %v2134, %v2133
      %v2160 = vpack.c.b16 %v2136, %v2135
      %2185 = vmatprep.subr.bf16.mxu0 0
      %2186 = vmatpush1.bf16.msra.mxu0 %v2137
      %2187 = vmatprep.subr.bf16.mxu0 0
      %2188 = vmatpush1.bf16.msra.mxu0 %v2138
      %2189 = vmatprep.subr.bf16.mxu0 0
      %2190 = vmatpush1.bf16.msra.mxu0 %v2139
      %2191 = vmatprep.subr.bf16.mxu0 0
      %2192 = vmatpush1.bf16.msra.mxu0 %v2140
      %2193 = vmatprep.subr.bf16.mxu0 0
      %2194 = vmatpush1.bf16.msra.mxu0 %v2141
      %2195 = vmatprep.subr.bf16.mxu0 0
      %2196 = vmatpush1.bf16.msra.mxu0 %v2142
      %2197 = vmatprep.subr.bf16.mxu0 0
      %2198 = vmatpush1.bf16.msra.mxu0 %v2143
      %2199 = vmatprep.subr.bf16.mxu0 0
      %2200 = vmatpush1.bf16.msra.mxu0 %v2144
      %2201 = vmatprep.subr.bf16.mxu0 0
      %2202 = vmatpush1.bf16.msra.mxu0 %v2145
      %2203 = vmatprep.subr.bf16.mxu0 0
      %2204 = vmatpush1.bf16.msra.mxu0 %v2146
      %2205 = vmatprep.subr.bf16.mxu0 0
      %2206 = vmatpush1.bf16.msra.mxu0 %v2147
      %2207 = vmatprep.subr.bf16.mxu0 0
      %2208 = vmatpush1.bf16.msra.mxu0 %v2148
      %2209 = vmatprep.subr.bf16.mxu0 0
      %2210 = vmatpush1.bf16.msra.mxu0 %v2149
      %2211 = vmatprep.subr.bf16.mxu0 0
      %2212 = vmatpush1.bf16.msra.mxu0 %v2150
      %2213 = vmatprep.subr.bf16.mxu0 0
      %2214 = vmatpush1.bf16.msra.mxu0 %v2151
      %2215 = vmatprep.subr.bf16.mxu0 0
      %2216 = vmatpush1.bf16.msra.mxu0 %v2152
      %2217 = vmatprep.mubr.bf16.mxu0 %v1991
      %2218 = vmatmul.mubr.bf16.gmra.mrb[0].mxu0 %v1990
      %v2219 = vpop.f32.mrb[0].mxu0
      %v2220 = vadd.f32 0.0, %v2219
      %v2221 = vpop.f32.mrb[0].mxu0
      %v2222 = vpop.f32.mrb[0].mxu0
      %v2223 = vadd.f32 0.0, %v2222
      %v2224 = vpop.f32.mrb[0].mxu0
      %2225 = vdwg.mxu0
      %2226 = vmatprep.subr.bf16.mxu0 0
      %2227 = vmatpush1.bf16.msra.mxu0 %v2153
      %2228 = vmatprep.subr.bf16.mxu0 0
      %2229 = vmatpush1.bf16.msra.mxu0 %v2154
      %2230 = vmatprep.subr.bf16.mxu0 0
      %2231 = vmatpush1.bf16.msra.mxu0 %v2155
      %2232 = vmatprep.subr.bf16.mxu0 0
      %2233 = vmatpush1.bf16.msra.mxu0 %v2156
      %2234 = vmatprep.subr.bf16.mxu0 0
      %2235 = vmatpush1.bf16.msra.mxu0 %v2157
      %2236 = vmatprep.subr.bf16.mxu0 0
      %2237 = vmatpush1.bf16.msra.mxu0 %v2158
      %2238 = vmatprep.subr.bf16.mxu0 0
      %2239 = vmatpush1.bf16.msra.mxu0 %v2159
      %2240 = vmatprep.subr.bf16.mxu0 0
      %2241 = vmatpush1.bf16.msra.mxu0 %v2160
      %2242 = vmatprep.subr.bf16.mxu0 0
      %2243 = vmatpush1.bf16.msra.mxu0 0
      %2244 = vmatprep.subr.bf16.mxu0 0
      %2245 = vmatpush1.bf16.msra.mxu0 0
      %2246 = vmatprep.subr.bf16.mxu0 0
      %2247 = vmatpush1.bf16.msra.mxu0 0
      %2248 = vmatprep.subr.bf16.mxu0 0
      %2249 = vmatpush1.bf16.msra.mxu0 0
      %2250 = vmatprep.subr.bf16.mxu0 0
      %2251 = vmatpush1.bf16.msra.mxu0 0
      %2252 = vmatprep.subr.bf16.mxu0 0
      %2253 = vmatpush1.bf16.msra.mxu0 0
      %2254 = vmatprep.subr.bf16.mxu0 0
      %2255 = vmatpush1.bf16.msra.mxu0 0
      %2256 = vmatprep.subr.bf16.mxu0 0
      %2257 = vmatpush1.bf16.msra.mxu0 0
      %2258 = vmatprep.mubr.bf16.mxu0 0
      %2259 = vmatmul.mubr.bf16.gmra.mrb[0].mxu0 %v1992
      %v2260 = vpop.f32.mrb[0].mxu0
      %v2261 = vadd.f32 %v2220, %v2260
      %v2262 = vpop.f32.mrb[0].mxu0
      %v2263 = vpop.f32.mrb[0].mxu0
      %v2264 = vadd.f32 %v2223, %v2263
      %v2265 = vpop.f32.mrb[0].mxu0
      %2266 = vdwg.mxu0
      %v2267 = vpack.c.bf16 %v2264, %v2261
      %v2268 = vld [vmem:[%s640] sm:$0xf]
      %v2269 = vld [vmem:[%s640 + $0x4] sm:$0xf]
      %v2270 = vld [vmem:[%s640 + $0x8] sm:$0xf]
      %v2271 = vld [vmem:[%s640 + $0xc] sm:$0xf]
      %v2272 = vld [vmem:[%s640 + $0x10] sm:$0xf]
      %v2273 = vld [vmem:[%s640 + $0x14] sm:$0xf]
      %v2274 = vld [vmem:[%s640 + $0x18] sm:$0xf]
      %v2275 = vld [vmem:[%s640 + $0x1c] sm:$0xf]
      %v2284 = vunpack.c.l.b16 %v2268
      %v2285 = vunpack.c.l.b16 %v2269
      %v2286 = vunpack.c.l.b16 %v2270
      %v2287 = vunpack.c.l.b16 %v2271
      %v2288 = vunpack.c.l.b16 %v2272
      %v2289 = vunpack.c.l.b16 %v2273
      %v2290 = vunpack.c.l.b16 %v2274
      %v2291 = vunpack.c.l.b16 %v2275
      %v2292 = vpack.c.b16 %v2285, %v2284
      %v2293 = vpack.c.b16 %v2287, %v2286
      %v2294 = vpack.c.b16 %v2289, %v2288
      %v2295 = vpack.c.b16 %v2291, %v2290
      %v2301 = vsel %vm1312, %v2267, 0
      %2303 = vmatprep.subr.bf16.mxu0 0
      %2304 = vmatpush1.bf16.msra.mxu0 %v2292
      %2305 = vmatprep.subr.bf16.mxu0 0
      %2306 = vmatpush1.bf16.msra.mxu0 %v2293
      %2307 = vmatprep.subr.bf16.mxu0 0
      %2308 = vmatpush1.bf16.msra.mxu0 %v2294
      %2309 = vmatprep.subr.bf16.mxu0 0
      %2310 = vmatpush1.bf16.msra.mxu0 %v2295
      %2311 = vmatprep.subr.bf16.mxu0 0
      %2312 = vmatpush1.bf16.msra.mxu0 0
      %2313 = vmatprep.subr.bf16.mxu0 0
      %2314 = vmatpush1.bf16.msra.mxu0 0
      %2315 = vmatprep.subr.bf16.mxu0 0
      %2316 = vmatpush1.bf16.msra.mxu0 0
      %2317 = vmatprep.subr.bf16.mxu0 0
      %2318 = vmatpush1.bf16.msra.mxu0 0
      %2319 = vmatprep.subr.bf16.mxu0 0
      %2320 = vmatpush1.bf16.msra.mxu0 0
      %2321 = vmatprep.subr.bf16.mxu0 0
      %2322 = vmatpush1.bf16.msra.mxu0 0
      %2323 = vmatprep.subr.bf16.mxu0 0
      %2324 = vmatpush1.bf16.msra.mxu0 0
      %2325 = vmatprep.subr.bf16.mxu0 0
      %2326 = vmatpush1.bf16.msra.mxu0 0
      %2327 = vmatprep.subr.bf16.mxu0 0
      %2328 = vmatpush1.bf16.msra.mxu0 0
      %2329 = vmatprep.subr.bf16.mxu0 0
      %2330 = vmatpush1.bf16.msra.mxu0 0
      %2331 = vmatprep.subr.bf16.mxu0 0
      %2332 = vmatpush1.bf16.msra.mxu0 0
      %2333 = vmatprep.subr.bf16.mxu0 0
      %2334 = vmatpush1.bf16.msra.mxu0 0
      %2335 = vmatprep.mubr.bf16.mxu0 0
      %2336 = vmatmul.mubr.bf16.gmra.mrb[0].mxu0 %v2301
      %v2337 = vpop.f32.mrb[0].mxu0
      %v2338 = vadd.f32 0.0, %v2337
      %v2339 = vpop.f32.mrb[0].mxu0
      %v2340 = vpop.f32.mrb[0].mxu0
      %v2341 = vadd.f32 0.0, %v2340
      %v2342 = vpop.f32.mrb[0].mxu0
      %2343 = vdwg.mxu0
      %2344 = vxpose.xlu0.b32.start [1/16] %v2338, 128
      %2345 = vxpose.xlu0.b32.cont [2/16] %v2341, 128
      %2346 = vxpose.xlu0.b32.cont [3/16] 0.0, 128
      %2347 = vxpose.xlu0.b32.cont [4/16] 0.0, 128
      %2348 = vxpose.xlu0.b32.cont [5/16] 0.0, 128
      %2349 = vxpose.xlu0.b32.cont [6/16] 0.0, 128
      %2350 = vxpose.xlu0.b32.cont [7/16] 0.0, 128
      %2351 = vxpose.xlu0.b32.cont [8/16] 0.0, 128
      %2352 = vxpose.xlu0.b32.cont [9/16] 0.0, 128
      %2353 = vxpose.xlu0.b32.cont [10/16] 0.0, 128
      %2354 = vxpose.xlu0.b32.cont [11/16] 0.0, 128
      %2355 = vxpose.xlu0.b32.cont [12/16] 0.0, 128
      %2356 = vxpose.xlu0.b32.cont [13/16] 0.0, 128
      %2357 = vxpose.xlu0.b32.cont [14/16] 0.0, 128
      %2358 = vxpose.xlu0.b32.cont [15/16] 0.0, 128
      %2359 = vxpose.xlu0.b32.end [16/16] 0.0, 128
      %v2360 = vpop.trf.xlu0
      %v2361 = vpop.trf.xlu0
      %v2362 = vpop.trf.xlu0
      %v2363 = vpop.trf.xlu0
      %v2364 = vpop.trf.xlu0
      %v2365 = vpop.trf.xlu0
      %v2366 = vpop.trf.xlu0
      %v2367 = vpop.trf.xlu0
      %v2368 = vpop.trf.xlu0
      %v2369 = vpop.trf.xlu0
      %v2370 = vpop.trf.xlu0
      %v2371 = vpop.trf.xlu0
      %v2372 = vpop.trf.xlu0
      %v2373 = vpop.trf.xlu0
      %v2374 = vpop.trf.xlu0
      %v2375 = vpop.trf.xlu0
      %2377 = vset.pattern.permute.xlu0 0
      %2378 = vperm.xlu0 %2377, %v2338
      %v2379 = vpop.permute.xlu0 %2378
      %2382 = vset.pattern.permute.xlu0 0
      %2383 = vperm.xlu0 %2382, %v2341
      %v2384 = vpop.permute.xlu0 %2383
      %v2386 = vlaneseq
      %v2387 = vshrl.u32 %v2386, 7
      %v2388 = vsub.s32 1, %v2387
      %v2389 = vrot.slane %v2360, %v2388
      %v2390 = vadd.f32 %v2379, %v2389
      %v2391 = vadd.f32 %v2384, %v2389
      %vm2392 = vcmp.gt.f32.partialorder %v2390, 0.0
      %vm2393 = vcmp.gt.f32.partialorder %v2391, 0.0
      %v2394 = vmul.f32 %v2390, 0.2
      %v2395 = vmul.f32 %v2391, 0.2
      %v2396 = vsel %vm2392, %v2390, %v2394
      %v2397 = vsel %vm2393, %v2391, %v2395
      %v2398 = vld [vmem:[%s609] sm:$0xf]
      %v2399 = vld [vmem:[%s609 + $0x4] sm:$0xf]
      %v2400 = vunpack.c.l.bf16 %v2398
      %v2401 = vunpack.c.l.bf16 %v2399
      %v2402 = vadd.f32 %v2396, %v2400
      %v2403 = vadd.f32 %v2397, %v2401
      %vm2404 = vcmask 130048
      %v2405 = vsel %vm2404, %v2402, -inf
      %2406 = vmax.xlane.f32.xlu0 %v2405
      %v2407 = vpop.xlane.xlu0 %2406
      %v2408 = vsel %vm2404, %v2403, -inf
      %2409 = vmax.xlane.f32.xlu0 %v2408
      %v2410 = vpop.xlane.xlu0 %2409
      %v2411 = vsub.f32 %v2402, %v2407
      %v2412 = vsub.f32 %v2403, %v2410
      %v2413 = vmul.f32 %v2411, 1.442695
      %v2414 = vpow.pop %v2413
      %v2415 = vmul.f32 %v2412, 1.442695
      %v2416 = vpow.pop %v2415
      %v2417 = vsel %vm2404, %v2414, 0.0
      %2418 = vadd.xlane.f32.xlu0 %v2417
      %v2419 = vpop.xlane.xlu0 %2418
      %v2420 = vsel %vm2404, %v2416, 0.0
      %2421 = vadd.xlane.f32.xlu0 %v2420
      %v2422 = vpop.xlane.xlu0 %2421
      %v2423 = vmax.f32 %v2419, 1e-30
      %v2424 = vmax.f32 %v2422, 1e-30
      %v2425 = vrcp.pop %v2423
      %v2426 = vrcp.pop %v2424
      %v2427 = vpack.c.bf16 %v2416, %v2414
      %v2429 = vsel %vm2404, %v2427, 0
      %2431 = vmatprep.subr.bf16.mxu0 0
      %2432 = vmatpush1.bf16.msra.mxu0 %v2267
      %2433 = vmatprep.subr.bf16.mxu0 0
      %2434 = vmatpush1.bf16.msra.mxu0 0
      %2435 = vmatprep.subr.bf16.mxu0 0
      %2436 = vmatpush1.bf16.msra.mxu0 0
      %2437 = vmatprep.subr.bf16.mxu0 0
      %2438 = vmatpush1.bf16.msra.mxu0 0
      %2439 = vmatprep.subr.bf16.mxu0 0
      %2440 = vmatpush1.bf16.msra.mxu0 0
      %2441 = vmatprep.subr.bf16.mxu0 0
      %2442 = vmatpush1.bf16.msra.mxu0 0
      %2443 = vmatprep.subr.bf16.mxu0 0
      %2444 = vmatpush1.bf16.msra.mxu0 0
      %2445 = vmatprep.subr.bf16.mxu0 0
      %2446 = vmatpush1.bf16.msra.mxu0 0
      %2447 = vmatprep.subr.bf16.mxu0 0
      %2448 = vmatpush1.bf16.msra.mxu0 0
      %2449 = vmatprep.subr.bf16.mxu0 0
      %2450 = vmatpush1.bf16.msra.mxu0 0
      %2451 = vmatprep.subr.bf16.mxu0 0
      %2452 = vmatpush1.bf16.msra.mxu0 0
      %2453 = vmatprep.subr.bf16.mxu0 0
      %2454 = vmatpush1.bf16.msra.mxu0 0
      %2455 = vmatprep.subr.bf16.mxu0 0
      %2456 = vmatpush1.bf16.msra.mxu0 0
      %2457 = vmatprep.subr.bf16.mxu0 0
      %2458 = vmatpush1.bf16.msra.mxu0 0
      %2459 = vmatprep.subr.bf16.mxu0 0
      %2460 = vmatpush1.bf16.msra.mxu0 0
      %2461 = vmatprep.subr.bf16.mxu0 0
      %2462 = vmatpush1.bf16.msra.mxu0 0
      %2463 = vmatprep.mubr.bf16.mxu0 0
      %2464 = vmatmul.mubr.bf16.gmra.mrb[0].mxu0 %v2429
      %v2465 = vpop.f32.mrb[0].mxu0
      %v2466 = vadd.f32 0.0, %v2465
      %v2467 = vpop.f32.mrb[0].mxu0
      %v2468 = vpop.f32.mrb[0].mxu0
      %v2469 = vadd.f32 0.0, %v2468
      %v2470 = vpop.f32.mrb[0].mxu0
      %2471 = vdwg.mxu0
      %v2472 = vmul.f32 %v2466, %v2425
      %v2473 = vmul.f32 %v2469, %v2426
      %v2474 = vld [vmem:[%s643] sm:$0x1]
      %v2476 = vlaneseq
      %v2477 = vshrl.u32 %v2476, 7
      %v2478 = vsub.s32 0, %v2477
      %v2479 = vrot.slane %v2474, %v2478
      %v2481 = vadd.f32 %v2472, %v2479
      %v2482 = vadd.f32 %v2473, %v2479
      %v2483 = vld [vmem:[%s612] sm:$0x1]
      %v2484 = vpack.c.bf16 %v2482, %v2481
      %v2486 = vsel %vm2404, %v2483, 0
      %2488 = vmatprep.subr.bf16.mxu0 0
      %2489 = vmatpush1.bf16.msra.mxu0 %v2484
      %2490 = vmatprep.subr.bf16.mxu0 0
      %2491 = vmatpush1.bf16.msra.mxu0 0
      %2492 = vmatprep.subr.bf16.mxu0 0
      %2493 = vmatpush1.bf16.msra.mxu0 0
      %2494 = vmatprep.subr.bf16.mxu0 0
      %2495 = vmatpush1.bf16.msra.mxu0 0
      %2496 = vmatprep.subr.bf16.mxu0 0
      %2497 = vmatpush1.bf16.msra.mxu0 0
      %2498 = vmatprep.subr.bf16.mxu0 0
      %2499 = vmatpush1.bf16.msra.mxu0 0
      %2500 = vmatprep.subr.bf16.mxu0 0
      %2501 = vmatpush1.bf16.msra.mxu0 0
      %2502 = vmatprep.subr.bf16.mxu0 0
      %2503 = vmatpush1.bf16.msra.mxu0 0
      %2504 = vmatprep.subr.bf16.mxu0 0
      %2505 = vmatpush1.bf16.msra.mxu0 0
      %2506 = vmatprep.subr.bf16.mxu0 0
      %2507 = vmatpush1.bf16.msra.mxu0 0
      %2508 = vmatprep.subr.bf16.mxu0 0
      %2509 = vmatpush1.bf16.msra.mxu0 0
      %2510 = vmatprep.subr.bf16.mxu0 0
      %2511 = vmatpush1.bf16.msra.mxu0 0
      %2512 = vmatprep.subr.bf16.mxu0 0
      %2513 = vmatpush1.bf16.msra.mxu0 0
      %2514 = vmatprep.subr.bf16.mxu0 0
      %2515 = vmatpush1.bf16.msra.mxu0 0
      %2516 = vmatprep.subr.bf16.mxu0 0
      %2517 = vmatpush1.bf16.msra.mxu0 0
      %2518 = vmatprep.subr.bf16.mxu0 0
      %2519 = vmatpush1.bf16.msra.mxu0 0
      %2520 = vmatprep.mubr.bf16.mxu0 0
      %2521 = vmatmul.mubr.bf16.gmra.mrb[0].mxu0 %v2486
      %v2522 = vpop.f32.mrb[0].mxu0
      %v2523 = vadd.f32 0.0, %v2522
      %v2524 = vpop.f32.mrb[0].mxu0
      %v2525 = vpop.f32.mrb[0].mxu0
      %v2526 = vpop.f32.mrb[0].mxu0
      %2527 = vdwg.mxu0
      %vm2528 = vcmask 517120
      %2529 = vst.msk [vmem:[%s647] sm:$0x3] %vm2528, %v2523
      %p2530 = scmp.lt.s32.totalorder %s25, 2
      %s2531 = scalar_select %p2530, %s25, 2
      %s2532 = smul.addr %s2531, 2
      %s2533 = scalar_lea.vmem %s14, %s2532
      // Predicated region
      $region77: #{gatmodel_forward.2} parent=75 // pred_check
        %p2534 = pneg %p392
      $region78: #{gatmodel_forward.2} parent=75 // pred_check_branch
        %2536 = sbr.rel (%p2534) target = $region80
      $region79: #{gatmodel_forward.2} parent=75 // pred_region
        _
      $region80: #{gatmodel_forward.2} parent=75 // pred_fallthru
        _
    $region76: #{gatmodel_forward.2} parent=5 // pred_fallthru
      _
    %p2537 = scmp.le.s32.totalorder 2, %s20
    // Predicated region
    $region81: #{gatmodel_forward.2} parent=5 // pred_check
      %p2538 = pneg %p2537
    $region82: #{gatmodel_forward.2} parent=5 // pred_check_branch
      %2540 = sbr.rel (%p2538) target = $region84
    $region83: #{gatmodel_forward.2} parent=5 // pred_region
      %s2541 = ssub.s32 %s20, 2
      // Predicated region
      $region85: #{gatmodel_forward.2} parent=83 // pred_check
        %p2542 = pneg %p398
      $region86: #{gatmodel_forward.2} parent=83 // pred_check_branch
        %2544 = sbr.rel (%p2542) target = $region88
      $region87: #{gatmodel_forward.2} parent=83 // pred_region
        %p2545 = scmp.lt.s32.totalorder %s26, 2
        %s2546 = scalar_select %p2545, %s26, 2
        %s2547 = smul.addr %s2546, 2
        %s2548 = scalar_lea.vmem %s14, %s2547
      $region88: #{gatmodel_forward.2} parent=83 // pred_fallthru
        _
    $region84: #{gatmodel_forward.2} parent=5 // pred_fallthru
      _
  $region6: #{gatmodel_forward.2} parent=0 // loop_footer
    %s24 = sadd.s32 1, %s20
  $region7: #{gatmodel_forward.2} parent=0 // loop_footer_branch
    %19 = sbr.rel target = $region3
  $region8: #{gatmodel_forward.2} parent=0 // loop_exit
    _

</llo_original>
